<compile_context>
chip_gen: v6e
topology: v6e:2x2x1
jax: 0.10.0
libtpu: 0.0.40
codegen_flags: <defaults>
</compile_context>

<pallas_src>
import math
from functools import partial

import numpy as np
import jax
import jax.numpy as jnp
from jax.experimental import pallas as pl
from jax.experimental.pallas import tpu as pltpu

# ----------------------------------------------------------------------------
# Camera constants (identical math to the PyTorch file)
# ----------------------------------------------------------------------------
fov = 45.0
fovy = np.radians(fov)
res = (240, 180)
focal = 0.5 * res[1] / math.tan(fovy / 2.0)

mat_cam_np = np.array(
    [[focal, 0.0, -res[0] / 2.0],
     [0.0, -focal, -res[1] / 2.0],
     [0.0, 0.0, -1.0]], dtype=np.float64)
mat_cam_inv_np = np.linalg.inv(mat_cam_np)

MAT_CAM = jnp.asarray(mat_cam_np, dtype=jnp.float32)
MAT_CAM_INV = jnp.asarray(mat_cam_inv_np, dtype=jnp.float32)
FOCAL = jnp.float32(focal)


def _round_up(x, m):
    return ((x + m - 1) // m) * m


# ----------------------------------------------------------------------------
# Tiled linear kernel:  out = relu?(A @ W + bias)
#   * bf16 MXU inputs, f32 VMEM accumulator, f32 bias/ReLU epilogue
#   * grid (M, N, K) with K innermost ("arbitrary"); init/finalize via pl.when
# ----------------------------------------------------------------------------
def _mm_kernel(a_ref, b_ref, bias_ref, o_ref, acc_ref, *, relu):
    @pl.when(pl.program_id(2) == 0)
    def _init():
        acc_ref[...] = jnp.zeros_like(acc_ref)

    acc_ref[...] += jnp.dot(a_ref[...], b_ref[...],
                            preferred_element_type=jnp.float32)

    @pl.when(pl.program_id(2) == pl.num_programs(2) - 1)
    def _finalize():
        out = acc_ref[...] + bias_ref[...]
        if relu:
            out = jnp.maximum(out, 0.0)
        o_ref[...] = out


def pack_linear(w, bias=None):
    """Pre-pad a (K, N) weight (bf16) and bias (f32) once, in __init__."""
    w = jnp.asarray(w, jnp.float32)
    K, N = w.shape
    Kp, Np = _round_up(K, 128), _round_up(N, 128)
    w_p = jnp.zeros((Kp, Np), jnp.bfloat16).at[:K, :N].set(w.astype(jnp.bfloat16))
    b = jnp.zeros((N,), jnp.float32) if bias is None else jnp.asarray(bias, jnp.float32)
    b_p = jnp.zeros((1, Np), jnp.float32).at[0, :N].set(b)
    return {"w": w_p, "b": b_p, "K": K, "N": N}


def _choose_tiles(M, Kp, Np, vmem_budget=24 << 20):
    """Largest K/N tiles (multiples of 128 dividing Kp/Np) fitting the budget."""
    TM = min(256, _round_up(max(M, 1), 16))      # bf16 sublane packing = 16

    def cands(d, cap):
        return [t for t in range(min(d, cap), 0, -128) if d % t == 0]

    for tk in cands(Kp, 4096):
        for tn in cands(Np, 8192):
            vmem = (2 * TM * tk * 2        # A blocks (double-buffered, bf16)
                    + 2 * tk * tn * 2      # W blocks
                    + 2 * TM * tn * 4      # out blocks
                    + TM * tn * 4          # f32 accumulator
                    + 2 * tn * 4)          # bias
            if vmem <= vmem_budget:
                return TM, tk, tn
    return TM, 128, 128


def pallas_linear(a, packed, *, relu=False):
    """a: (M, K) activation; packed: pre-padded weight/bias from pack_linear."""
    M, K = a.shape
    assert K == packed["K"], (a.shape, packed["K"])
    Kp, Np = packed["w"].shape
    N = packed["N"]
    TM, TK, TN = _choose_tiles(M, Kp, Np)
    Mp = _round_up(M, TM)

    a = a.astype(jnp.bfloat16)
    if (Mp != M) or (Kp != K):
        a = jnp.pad(a, ((0, Mp - M), (0, Kp - K)))

    grid = (Mp // TM, Np // TN, Kp // TK)
    out = pl.pallas_call(
        partial(_mm_kernel, relu=relu),
        out_shape=jax.ShapeDtypeStruct((Mp, Np), jnp.float32),
        grid_spec=pltpu.PrefetchScalarGridSpec(
            num_scalar_prefetch=0,
            grid=grid,
            in_specs=[
                pl.BlockSpec((TM, TK), lambda i, j, k: (i, k)),
                pl.BlockSpec((TK, TN), lambda i, j, k: (k, j)),
                pl.BlockSpec((1, TN), lambda i, j, k: (0, j)),
            ],
            out_specs=pl.BlockSpec((TM, TN), lambda i, j, k: (i, j)),
            scratch_shapes=[pltpu.VMEM((TM, TN), jnp.float32)]),
        compiler_params=pltpu.CompilerParams(
            dimension_semantics=("parallel", "parallel", "arbitrary")),
    )(a, packed["w"], packed["b"])
    return out[:M, :N]


# ----------------------------------------------------------------------------
# Fused 3x3 conv (stride 1, pad 1) kernel, NHWC, optional ReLU and global
# average pool.  The padded image is flattened to (rows, Cp) in the wrapper so
# every tap is a *contiguous* 2-D row slice (offset dh*(W+2)+dw) — no in-kernel
# reshapes, no HBM im2col.
# TODO(synk): for very large H, add a row-tile grid axis; whole-image-per-batch
# blocks are fine for these resolutions.
# ----------------------------------------------------------------------------
def _conv3x3_kernel(x_ref, w_ref, b_ref, o_ref, *, H, W, relu, pool):
    Wp = W + 2
    rows = H * Wp                      # includes 2 garbage columns per row
    cout = w_ref.shape[-1]
    acc = jnp.zeros((rows, cout), jnp.float32)
    for dh in range(3):
        for dw in range(3):
            off = dh * Wp + dw
            tap = dh * 3 + dw
            acc = acc + jnp.dot(x_ref[0, off:off + rows, :], w_ref[tap],
                                preferred_element_type=jnp.float32)
    acc = acc + b_ref[...]
    if relu:
        acc = jnp.maximum(acc, 0.0)
    if pool:
        # mask the 2 garbage columns per row, then global average pool
        col = jax.lax.broadcasted_iota(jnp.int32, (rows, 1), 0) % Wp
        keep = col < W
        o_ref[0, :, :] = jnp.sum(jnp.where(keep, acc, 0.0), axis=0,
                                 keepdims=True) * (1.0 / (H * W))
    else:
        o_ref[0, :, :] = acc


def pack_conv3x3(weight, bias):
    """weight: (Cout, Cin, 3, 3) PyTorch layout -> (9, Cp, Cout) taps, once."""
    weight = jnp.asarray(weight, jnp.float32)
    Cout, Cin = weight.shape[0], weight.shape[1]
    Cp = _round_up(Cin, 8)
    w_taps = jnp.transpose(weight, (2, 3, 1, 0)).reshape(9, Cin, Cout)
    w_taps = jnp.pad(w_taps, ((0, 0), (0, Cp - Cin), (0, 0)))
    b = jnp.asarray(bias, jnp.float32).reshape(1, Cout)
    return {"w": w_taps, "b": b, "Cin": Cin, "Cp": Cp, "Cout": Cout}


def conv3x3_nhwc(x_nhwc, packed, *, relu=False, pool=False):
    """3x3 conv (stride 1, pad 1) on NHWC input.
    pool=False -> (B, H, W, Cout);  pool=True -> (B, Cout) (fused GAP)."""
    B, H, W, C = x_nhwc.shape
    assert C == packed["Cin"]
    Cp, Cout = packed["Cp"], packed["Cout"]
    Wp = W + 2
    # Halo pad (1 top / 2 bottom rows, 1 col each side) + channel pad to Cp,
    # then flatten spatial dims.  The extra bottom row covers the last tap's
    # garbage-column over-read; garbage columns are dropped / masked.
    xp = jnp.pad(x_nhwc.astype(jnp.float32),
                 ((0, 0), (1, 2), (1, 1), (0, Cp - C)))
    x_flat = xp.reshape(B, (H + 3) * Wp, Cp)
    rows = H * Wp

    if pool:
        out_shape = jax.ShapeDtypeStruct((B, 1, Cout), jnp.float32)
        out_spec = pl.BlockSpec((1, 1, Cout), lambda b: (b, 0, 0))
    else:
        out_shape = jax.ShapeDtypeStruct((B, rows, Cout), jnp.float32)
        out_spec = pl.BlockSpec((1, rows, Cout), lambda b: (b, 0, 0))

    out = pl.pallas_call(
        partial(_conv3x3_kernel, H=H, W=W, relu=relu, pool=pool),
        out_shape=out_shape,
        grid_spec=pltpu.PrefetchScalarGridSpec(
            num_scalar_prefetch=0,
            grid=(B,),
            in_specs=[
                pl.BlockSpec((1, (H + 3) * Wp, Cp), lambda b: (b, 0, 0)),
                pl.BlockSpec((9, Cp, Cout), lambda b: (0, 0, 0)),
                pl.BlockSpec((1, Cout), lambda b: (0, 0)),
            ],
            out_specs=out_spec),
        compiler_params=pltpu.CompilerParams(
            dimension_semantics=("parallel",)),
    )(x_flat, packed["w"], packed["b"])

    if pool:
        return out[:, 0, :]                              # (B, Cout)
    return out.reshape(B, H, Wp, Cout)[:, :, :W, :]      # (B, H, W, Cout)


# ----------------------------------------------------------------------------
# Rotation conversions (pytorch3d semantics), plain JAX glue
# ----------------------------------------------------------------------------
def rotation_6d_to_matrix(d6):
    a1, a2 = d6[..., :3], d6[..., 3:]
    b1 = a1 / jnp.clip(jnp.linalg.norm(a1, axis=-1, keepdims=True), 1e-12)
    b2 = a2 - jnp.sum(b1 * a2, axis=-1, keepdims=True) * b1
    b2 = b2 / jnp.clip(jnp.linalg.norm(b2, axis=-1, keepdims=True), 1e-12)
    b3 = jnp.cross(b1, b2)
    return jnp.stack((b1, b2, b3), axis=-2)


def _sqrt_positive_part(x):
    return jnp.sqrt(jnp.maximum(x, 0.0))


def matrix_to_quaternion(matrix):
    batch_dim = matrix.shape[:-2]
    m = matrix.reshape(batch_dim + (9,))
    m00, m01, m02, m10, m11, m12, m20, m21, m22 = [m[..., i] for i in range(9)]
    q_abs = _sqrt_positive_part(jnp.stack([
        1.0 + m00 + m11 + m22,
        1.0 + m00 - m11 - m22,
        1.0 - m00 + m11 - m22,
        1.0 - m00 - m11 + m22], axis=-1))
    quat_by_rijk = jnp.stack([
        jnp.stack([q_abs[..., 0] ** 2, m21 - m12, m02 - m20, m10 - m01], axis=-1),
        jnp.stack([m21 - m12, q_abs[..., 1] ** 2, m10 + m01, m02 + m20], axis=-1),
        jnp.stack([m02 - m20, m10 + m01, q_abs[..., 2] ** 2, m12 + m21], axis=-1),
        jnp.stack([m10 - m01, m20 + m02, m21 + m12, q_abs[..., 3] ** 2], axis=-1),
    ], axis=-2)
    flr = 0.1
    quat_candidates = quat_by_rijk / (2.0 * jnp.maximum(q_abs[..., None], flr))
    best = jnp.argmax(q_abs, axis=-1)
    quat = jnp.take_along_axis(quat_candidates, best[..., None, None], axis=-2)
    return quat[..., 0, :]


def quaternion_to_axis_angle(quaternions):
    norms = jnp.linalg.norm(quaternions[..., 1:], axis=-1, keepdims=True)
    half_angles = jnp.arctan2(norms, quaternions[..., :1])
    angles = 2.0 * half_angles
    eps = 1e-6
    small = jnp.abs(angles) < eps
    safe_angles = jnp.where(small, jnp.ones_like(angles), angles)
    sin_half_over_angles = jnp.where(
        small, 0.5 - (angles * angles) / 48.0, jnp.sin(half_angles) / safe_angles)
    return quaternions[..., 1:] / sin_half_over_angles


# ----------------------------------------------------------------------------
# Fused right+left MANO stand-in (block-diagonal Pallas matmuls)
# TODO(synk): full MANO LBS (rodrigues + posedirs + skinning from the .pkl
# model files) is unavailable; deterministic linear stand-in with the same
# interface and shapes (778 verts, 21 joints per hand).
# ----------------------------------------------------------------------------
class DualManoLayer:
    N_V = 778
    N_J = 21

    def __init__(self, key_right, key_left):
        def make(key):
            k1, k2, k3 = jax.random.split(key, 3)
            template = 0.1 * jax.random.normal(k1, (self.N_V * 3,), jnp.float32)
            blend = 0.01 * jax.random.normal(k2, (48 + 10, self.N_V * 3), jnp.float32)
            jr = jax.random.uniform(k3, (self.N_J, self.N_V), jnp.float32)
            return template, blend, jr / jnp.sum(jr, axis=1, keepdims=True)

        t_r, bl_r, jr_r = make(key_right)
        t_l, bl_l, jr_l = make(key_left)
        V3 = self.N_V * 3
        # column-block-diagonal blend: one matmul produces both hands' verts
        blend_cat = jnp.zeros((2 * 58, 2 * V3), jnp.float32)
        blend_cat = blend_cat.at[:58, :V3].set(bl_r).at[58:, V3:].set(bl_l)
        self.blend = pack_linear(blend_cat, jnp.concatenate([t_r, t_l]))
        # block-diagonal joint regressor, used as a right-hand-side weight
        jreg_cat = jnp.zeros((2 * self.N_J, 2 * self.N_V), jnp.float32)
        jreg_cat = jreg_cat.at[:self.N_J, :self.N_V].set(jr_r)
        jreg_cat = jreg_cat.at[self.N_J:, self.N_V:].set(jr_l)
        self.jreg = pack_linear(jreg_cat.T)          # (1556, 42)

    def __call__(self, pose_r, betas_r, trans_r, pose_l, betas_l, trans_l):
        B = pose_r.shape[0]
        feat = jnp.concatenate([pose_r, betas_r, pose_l, betas_l], axis=1)  # (B,116)
        verts = pallas_linear(feat, self.blend).reshape(B, 2, self.N_V, 3)
        trans = jnp.stack([trans_r, trans_l], axis=1)                       # (B,2,3)
        verts = (verts + trans[:, :, None, :]).reshape(B, 2 * self.N_V, 3)  # (B,1556,3)
        vt = verts.transpose(0, 2, 1).reshape(B * 3, 2 * self.N_V)          # (3B,1556)
        joints = pallas_linear(vt, self.jreg)                               # (3B,42)
        joints = joints.reshape(B, 3, 2 * self.N_J).transpose(0, 2, 1)      # (B,42,3)
        return verts, joints


# ----------------------------------------------------------------------------
# TEHNet
# ----------------------------------------------------------------------------
class TEHNetPallas:
    N_IN = 3        # input event-frame channels
    N_MASK = 3      # mask channels (background / right / left)
    RES_CH = 16     # feature channels of the ResNet stand-in

    def __init__(self, key):
        ks = jax.random.split(key, 8)
        # UNet stand-in: a single 3x3 conv producing the masks.
        # TODO(synk): full UNet encoder/decoder architecture is not specified.
        w_unet = 0.1 * jax.random.normal(ks[0], (self.N_MASK, self.N_IN, 3, 3), jnp.float32)
        self.unet_conv = pack_conv3x3(w_unet, jnp.zeros((self.N_MASK,), jnp.float32))
        # ResNet stand-in: conv3x3 + ReLU + global-avg-pool + FC -> 198 params.
        # TODO(synk): full ResNet backbone is not specified.
        w_res = 0.1 * jax.random.normal(
            ks[1], (self.RES_CH, self.N_IN + self.N_MASK, 3, 3), jnp.float32)
        b_res = 0.01 * jax.random.normal(ks[2], (self.RES_CH,), jnp.float32)
        self.res_conv = pack_conv3x3(w_res, b_res)
        # tiny FC head stays in plain jnp (pure launch overhead as a Pallas call)
        self.w_fc = 0.1 * jax.random.normal(ks[3], (self.RES_CH, 198), jnp.float32)
        self.b_fc = 0.01 * jax.random.normal(ks[4], (198,), jnp.float32)

        self.mano = DualManoLayer(ks[5], ks[6])

        # roots from zero pose/shape/trans (matches the torch __init__)
        pose0 = jnp.zeros((1, 48), jnp.float32)
        shape0 = jnp.zeros((1, 10), jnp.float32)
        trans0 = jnp.zeros((1, 3), jnp.float32)
        _, j0 = self.mano(pose0, shape0, trans0, pose0, shape0, trans0)
        self.roots = [j0[0, 0, :], j0[0, self.mano.N_J, :]]

    def __call__(self, x):
        B = x.shape[0]
        # single NCHW->NHWC relayout at entry; activations stay channels-last
        x_nhwc = jnp.transpose(x.astype(jnp.float32), (0, 2, 3, 1))
        masks_nhwc = conv3x3_nhwc(x_nhwc, self.unet_conv, relu=False)     # (B,H,W,3)
        x_masked = jnp.concatenate([x_nhwc, masks_nhwc], axis=-1)         # (B,H,W,6)
        # conv + ReLU + global-average-pool fused in one Pallas call
        feat = conv3x3_nhwc(x_masked, self.res_conv, relu=True, pool=True)  # (B,16)
        hand_params = jnp.dot(feat, self.w_fc) + self.b_fc                  # (B,198)

        rots6d_r = hand_params[:, 0:96].reshape(-1, 16, 6)
        rots6d_l = hand_params[:, 99:195].reshape(-1, 16, 6)

        ones = jnp.ones((B, 1), jnp.float32)
        # tiny 3x3 camera matmuls stay in f32 plain jnp (per perf review)
        uv1_r = jnp.concatenate([hand_params[:, 96:98], ones], axis=1) * FOCAL
        uv1_l = jnp.concatenate([hand_params[:, 195:197], ones], axis=1) * FOCAL
        trans_r = (jnp.dot(uv1_r, MAT_CAM_INV.T) * hand_params[:, 98:99]
                   - self.roots[0][None, :])
        trans_l = (jnp.dot(uv1_l, MAT_CAM_INV.T) * hand_params[:, 197:198]
                   - self.roots[1][None, :])

        aa_r = quaternion_to_axis_angle(
            matrix_to_quaternion(rotation_6d_to_matrix(rots6d_r))).reshape(-1, 48)
        aa_l = quaternion_to_axis_angle(
            matrix_to_quaternion(rotation_6d_to_matrix(rots6d_l))).reshape(-1, 48)

        shape = jnp.zeros((B, 10), jnp.float32)
        vertices, joints_3d = self.mano(aa_r, shape, trans_r, aa_l, shape, trans_l)

        joints_intrinsic = jnp.matmul(joints_3d, MAT_CAM.T)               # f32
        joints_2d = joints_intrinsic[..., 0:2] / joints_intrinsic[..., 2:3]

        masks = jnp.transpose(masks_nhwc, (0, 3, 1, 2))                   # NCHW out
        return hand_params, vertices, masks, joints_3d, joints_2d


# ----------------------------------------------------------------------------
if __name__ == "__main__":
    key = jax.random.PRNGKey(0)
    k_param, k_x = jax.random.split(key)

    net = TEHNetPallas(k_param)
    x = jax.random.normal(k_x, (2, 3, 16, 16), jnp.float32)   # (B, C, H, W)

    forward = jax.jit(lambda inp: net(inp))
    outs = forward(x)
    outs = jax.block_until_ready(outs)

    hand_params, vertices, masks, joints_3d, joints_2d = outs
    assert hand_params.shape == (2, 198)
    assert vertices.shape == (2, 2 * 778, 3)
    assert masks.shape == (2, 3, 16, 16)
    assert joints_3d.shape == (2, 42, 3)
    assert joints_2d.shape == (2, 42, 2)
    assert all(bool(jnp.all(jnp.isfinite(o))) for o in outs)

    print("KERNEL_OK")
</pallas_src>

<mosaic_0001>
module attributes {stable_mosaic.version = 11 : i64} {
  func.func @_mm_kernel(%arg0: i32, %arg1: i32, %arg2: i32, %arg3: memref<16x128xbf16, #tpu.memory_space<vmem>>, %arg4: memref<128x4736xbf16, #tpu.memory_space<vmem>>, %arg5: memref<1x4736xf32, #tpu.memory_space<vmem>>, %arg6: memref<16x4736xf32, #tpu.memory_space<vmem>>, %arg7: memref<16x4736xf32, #tpu.memory_space<vmem>>) attributes {dimension_semantics = [#tpu.dimension_semantics<parallel>, #tpu.dimension_semantics<parallel>, #tpu.dimension_semantics<arbitrary>], iteration_bounds = array<i64: 1, 1, 1>, scalar_prefetch = 0 : i64, scratch_operands = 1 : i64, tpu.core_type = #tpu.core_type<tc>, window_params = [{transform_indices = @transform_0, window_bounds = array<i64: 16, 128>}, {transform_indices = @transform_1, window_bounds = array<i64: 128, 4736>}, {transform_indices = @transform_2, window_bounds = array<i64: 1, 4736>}, {transform_indices = @transform_3, window_bounds = array<i64: 16, 4736>}]} {
    %c0_i32 = arith.constant 0 : i32
    %0 = arith.cmpi eq, %arg2, %c0_i32 : i32
    %1 = arith.extui %0 : i1 to i32
    %c0_i32_0 = arith.constant 0 : i32
    %2 = arith.cmpi ne, %1, %c0_i32_0 : i32
    scf.if %2 {
      %cst_10 = arith.constant 0.000000e+00 : f32
      %12 = vector.broadcast %cst_10 : f32 to vector<16x4736xf32>
      %c0_11 = arith.constant 0 : index
      %c0_12 = arith.constant 0 : index
      %13 = vector.load %arg7[%c0_11, %c0_12] : memref<16x4736xf32, #tpu.memory_space<vmem>>, vector<16x4736xf32>
      tpu.vector_store %arg7[%c0_11, %c0_12], %12 {strides = array<i32>} : memref<16x4736xf32, #tpu.memory_space<vmem>>, vector<16x4736xf32>,
    } else {
    }
    %c0 = arith.constant 0 : index
    %c0_1 = arith.constant 0 : index
    %3 = vector.load %arg7[%c0, %c0_1] : memref<16x4736xf32, #tpu.memory_space<vmem>>, vector<16x4736xf32>
    %c0_2 = arith.constant 0 : index
    %c0_3 = arith.constant 0 : index
    %4 = vector.load %arg3[%c0_2, %c0_3] : memref<16x128xbf16, #tpu.memory_space<vmem>>, vector<16x128xbf16>
    %c0_4 = arith.constant 0 : index
    %c0_5 = arith.constant 0 : index
    %5 = vector.load %arg4[%c0_4, %c0_5] : memref<128x4736xbf16, #tpu.memory_space<vmem>>, vector<128x4736xbf16>
    %cst = arith.constant dense<0.000000e+00> : vector<16x4736xf32>
    %6 = tpu.matmul %4, %5, %cst {dimension_numbers = #tpu.dot_dimension_numbers<[1], [0], [0], [1], [0, 0, 1, 1], [], []>} : vector<16x128xbf16>, vector<128x4736xbf16>, vector<16x4736xf32> -> vector<16x4736xf32>
    %7 = arith.addf %3, %6 : vector<16x4736xf32>
    %c0_6 = arith.constant 0 : index
    %c0_7 = arith.constant 0 : index
    %8 = vector.load %arg7[%c0_6, %c0_7] : memref<16x4736xf32, #tpu.memory_space<vmem>>, vector<16x4736xf32>
    tpu.vector_store %arg7[%c0_6, %c0_7], %7 {strides = array<i32>} : memref<16x4736xf32, #tpu.memory_space<vmem>>, vector<16x4736xf32>,
    %c0_i32_8 = arith.constant 0 : i32
    %9 = arith.cmpi eq, %arg2, %c0_i32_8 : i32
    %10 = arith.extui %9 : i1 to i32
    %c0_i32_9 = arith.constant 0 : i32
    %11 = arith.cmpi ne, %10, %c0_i32_9 : i32
    scf.if %11 {
      %c0_10 = arith.constant 0 : index
      %c0_11 = arith.constant 0 : index
      %12 = vector.load %arg7[%c0_10, %c0_11] : memref<16x4736xf32, #tpu.memory_space<vmem>>, vector<16x4736xf32>
      %c0_12 = arith.constant 0 : index
      %c0_13 = arith.constant 0 : index
      %13 = vector.load %arg5[%c0_12, %c0_13] : memref<1x4736xf32, #tpu.memory_space<vmem>>, vector<1x4736xf32>
      %14 = vector.broadcast %13 : vector<1x4736xf32> to vector<16x4736xf32>
      %15 = arith.addf %12, %14 : vector<16x4736xf32>
      %c0_14 = arith.constant 0 : index
      %c0_15 = arith.constant 0 : index
      %16 = vector.load %arg6[%c0_14, %c0_15] : memref<16x4736xf32, #tpu.memory_space<vmem>>, vector<16x4736xf32>
      tpu.vector_store %arg6[%c0_14, %c0_15], %15 {strides = array<i32>} : memref<16x4736xf32, #tpu.memory_space<vmem>>, vector<16x4736xf32>,
    } else {
    }
    return
  }
  func.func @transform_0(%arg0: i32, %arg1: i32, %arg2: i32) -> (i32, i32) {
    %c0_i32 = arith.constant 0 : i32
    return %arg0, %arg2 : i32, i32
  }
  func.func @transform_1(%arg0: i32, %arg1: i32, %arg2: i32) -> (i32, i32) {
    %c0_i32 = arith.constant 0 : i32
    return %arg2, %arg1 : i32, i32
  }
  func.func @transform_2(%arg0: i32, %arg1: i32, %arg2: i32) -> (i32, i32) {
    %c0_i32 = arith.constant 0 : i32
    %c0_i32_0 = arith.constant 0 : i32
    return %c0_i32, %arg1 : i32, i32
  }
  func.func @transform_3(%arg0: i32, %arg1: i32, %arg2: i32) -> (i32, i32) {
    %c0_i32 = arith.constant 0 : i32
    return %arg0, %arg1 : i32, i32
  }
}

</mosaic_0001>

<llo_original>
// kernel: tpu_custom_call.1
$region0: #{tpu_custom_call.1}
  #allocation0 [shape = 'u32[]', space=smem, size = 0x4, offset = 0x4, fixed_abs, tag = 'smem constant byte address 0x4 - core index']
  #allocation1 [shape = 'u32[144,128]{1,0:T(1,128)}', space=vmem, size = 0x12000, scoped, tag = 'internal scratch']
  #allocation2 [shape = 'f32[16,4736]{1,0:T(8,128)}', space=vmem, size = 0x4a000, scoped, tag = 'scratch operand']
  %s0 = inlined_call_operand.hbm [shape: bf16[16,128], index: 0, kind: input, shape index: {}]
  %s1 = inlined_call_operand.hbm [shape: bf16[128,4736], index: 1, kind: input, shape index: {}]
  %s2 = inlined_call_operand.hbm [shape: f32[1,4736], index: 2, kind: input, shape index: {}]
  %s3 = inlined_call_operand.hbm [shape: f32[16,4736], index: 3, kind: output, shape index: {}]
  %s4 = sld [smem:[#allocation0]]
  $region42: #{tpu_custom_call.1} parent=0
    _
  %s6 = ssub.s32 1, %s4
  %s7 = scalar_select 0, %s6, %s4
  $region1: #{tpu_custom_call.1} parent=0
    #allocation3 [shape = 'u8[4096]{0}', space=vmem, size = 0x1000, scoped, tag = 'input window, operand 0, single buffered']
    #allocation4 [shape = 's32[1]{0}', space=sflag, size = 0x4, scoped, tag = 'scoped memory for tpu_custom_call.1']
    #allocation5 [shape = 's32[1]{0}', space=sflag, size = 0x4, scoped, tag = 'scoped memory for tpu_custom_call.1']
    #allocation6 [shape = 'u8[1212416]{0}', space=vmem, size = 0x128000, scoped, tag = 'input window, operand 1, single buffered']
    #allocation7 [shape = 's32[1]{0}', space=sflag, size = 0x4, scoped, tag = 'scoped memory for tpu_custom_call.1']
    #allocation8 [shape = 'u8[18944]{0}', space=vmem, size = 0x4c00, scoped, tag = 'input window, operand 2, single buffered']
    #allocation9 [shape = 'u8[303104]{0}', space=vmem, size = 0x4a000, scoped, tag = 'output window, operand 0, single buffered']
    %8 = vsyncpa [#allocation4], 0
    %9 = vsyncpa [#allocation7], 0
    %10 = vsyncpa [#allocation5], 0
    // Predicated region
    $region2: #{tpu_custom_call.1} parent=1 // pred_check
      _
    $region3: #{tpu_custom_call.1} parent=1 // pred_check_branch
      %12 = sbr.rel (0) target = $region5
    $region4: #{tpu_custom_call.1} parent=1 // pred_region
      %s14 = ssub.s32 128, 128
      %15 = vsyncadd [#allocation4], %s14
      %s16 = sshll.u32 [#allocation3], 4
      %s17 = int_to_ptr.vmem [resolvable:$true] %s16
      %22 = dma.hbm_to_vmem [thread:$0]  %s0, 128, %s17, [#allocation4], 64, 64, 4
    $region5: #{tpu_custom_call.1} parent=1 // pred_fallthru
      _
    // Predicated region
    $region6: #{tpu_custom_call.1} parent=1 // pred_check
      _
    $region7: #{tpu_custom_call.1} parent=1 // pred_check_branch
      %24 = sbr.rel (0) target = $region9
    $region8: #{tpu_custom_call.1} parent=1 // pred_region
      %s26 = ssub.s32 37888, 37888
      %27 = vsyncadd [#allocation7], %s26
      %s28 = sshll.u32 [#allocation6], 4
      %s29 = int_to_ptr.vmem [resolvable:$true] %s28
      %34 = dma.hbm_to_vmem [thread:$0]  %s1, 37888, %s29, [#allocation7], 2368, 2368, 148
    $region9: #{tpu_custom_call.1} parent=1 // pred_fallthru
      _
    // Predicated region
    $region10: #{tpu_custom_call.1} parent=1 // pred_check
      _
    $region11: #{tpu_custom_call.1} parent=1 // pred_check_branch
      %36 = sbr.rel (0) target = $region13
    $region12: #{tpu_custom_call.1} parent=1 // pred_region
      %s38 = ssub.s32 592, 592
      %39 = vsyncadd [#allocation7], %s38
      %s41 = sshll.u32 [#allocation8], 4
      %s42 = int_to_ptr.vmem [resolvable:$true] %s41
      %44 = dma.hbm_to_vmem [thread:$0]  %s2, 592, %s42, [#allocation7]
    $region13: #{tpu_custom_call.1} parent=1 // pred_fallthru
      _
    // Predicated region
    $region14: #{tpu_custom_call.1} parent=1 // pred_check
      _
    $region15: #{tpu_custom_call.1} parent=1 // pred_check_branch
      %46 = sbr.rel (0) target = $region17
    $region16: #{tpu_custom_call.1} parent=1 // pred_region
      %47 = dma.done [#allocation4], 128
    $region17: #{tpu_custom_call.1} parent=1 // pred_fallthru
      _
    // Predicated region
    $region18: #{tpu_custom_call.1} parent=1 // pred_check
      _
    $region19: #{tpu_custom_call.1} parent=1 // pred_check_branch
      %49 = sbr.rel (0) target = $region21
    $region20: #{tpu_custom_call.1} parent=1 // pred_region
      %50 = dma.done [#allocation7], 37888
    $region21: #{tpu_custom_call.1} parent=1 // pred_fallthru
      _
    // Predicated region
    $region22: #{tpu_custom_call.1} parent=1 // pred_check
      _
    $region23: #{tpu_custom_call.1} parent=1 // pred_check_branch
      %52 = sbr.rel (0) target = $region25
    $region24: #{tpu_custom_call.1} parent=1 // pred_region
      %53 = dma.done [#allocation7], 592
    $region25: #{tpu_custom_call.1} parent=1 // pred_fallthru
      _
    %p55 = scmp.eq.s32.totalorder 0, 0
    // Predicated region
    $region26: #{tpu_custom_call.1} parent=1 // pred_check
      %p56 = pneg %p55
    $region27: #{tpu_custom_call.1} parent=1 // pred_check_branch
      %58 = sbr.rel (%p56) target = $region29
    $region28: #{tpu_custom_call.1} parent=1 // pred_region
      %59 = vst [vmem:[#allocation2] sm:$0xff] 0.0
      %60 = vst [vmem:[#allocation2 + $0x8] sm:$0xff] 0.0
      %61 = vst [vmem:[#allocation2 + $0x10] sm:$0xff] 0.0
      %62 = vst [vmem:[#allocation2 + $0x18] sm:$0xff] 0.0
      %63 = vst [vmem:[#allocation2 + $0x20] sm:$0xff] 0.0
      %64 = vst [vmem:[#allocation2 + $0x28] sm:$0xff] 0.0
      %65 = vst [vmem:[#allocation2 + $0x30] sm:$0xff] 0.0
      %66 = vst [vmem:[#allocation2 + $0x38] sm:$0xff] 0.0
      %67 = vst [vmem:[#allocation2 + $0x40] sm:$0xff] 0.0
      %68 = vst [vmem:[#allocation2 + $0x48] sm:$0xff] 0.0
      %69 = vst [vmem:[#allocation2 + $0x50] sm:$0xff] 0.0
      %70 = vst [vmem:[#allocation2 + $0x58] sm:$0xff] 0.0
      %71 = vst [vmem:[#allocation2 + $0x60] sm:$0xff] 0.0
      %72 = vst [vmem:[#allocation2 + $0x68] sm:$0xff] 0.0
      %73 = vst [vmem:[#allocation2 + $0x70] sm:$0xff] 0.0
      %74 = vst [vmem:[#allocation2 + $0x78] sm:$0xff] 0.0
      %75 = vst [vmem:[#allocation2 + $0x80] sm:$0xff] 0.0
      %76 = vst [vmem:[#allocation2 + $0x88] sm:$0xff] 0.0
      %77 = vst [vmem:[#allocation2 + $0x90] sm:$0xff] 0.0
      %78 = vst [vmem:[#allocation2 + $0x98] sm:$0xff] 0.0
      %79 = vst [vmem:[#allocation2 + $0xa0] sm:$0xff] 0.0
      %80 = vst [vmem:[#allocation2 + $0xa8] sm:$0xff] 0.0
      %81 = vst [vmem:[#allocation2 + $0xb0] sm:$0xff] 0.0
      %82 = vst [vmem:[#allocation2 + $0xb8] sm:$0xff] 0.0
      %83 = vst [vmem:[#allocation2 + $0xc0] sm:$0xff] 0.0
      %84 = vst [vmem:[#allocation2 + $0xc8] sm:$0xff] 0.0
      %85 = vst [vmem:[#allocation2 + $0xd0] sm:$0xff] 0.0
      %86 = vst [vmem:[#allocation2 + $0xd8] sm:$0xff] 0.0
      %87 = vst [vmem:[#allocation2 + $0xe0] sm:$0xff] 0.0
      %88 = vst [vmem:[#allocation2 + $0xe8] sm:$0xff] 0.0
      %89 = vst [vmem:[#allocation2 + $0xf0] sm:$0xff] 0.0
      %90 = vst [vmem:[#allocation2 + $0xf8] sm:$0xff] 0.0
      %91 = vst [vmem:[#allocation2 + $0x100] sm:$0xff] 0.0
      %92 = vst [vmem:[#allocation2 + $0x108] sm:$0xff] 0.0
      %93 = vst [vmem:[#allocation2 + $0x110] sm:$0xff] 0.0
      %94 = vst [vmem:[#allocation2 + $0x118] sm:$0xff] 0.0
      %95 = vst [vmem:[#allocation2 + $0x120] sm:$0xff] 0.0
      %96 = vst [vmem:[#allocation2 + $0x128] sm:$0xff] 0.0
      %97 = vst [vmem:[#allocation2 + $0x130] sm:$0xff] 0.0
      %98 = vst [vmem:[#allocation2 + $0x138] sm:$0xff] 0.0
      %99 = vst [vmem:[#allocation2 + $0x140] sm:$0xff] 0.0
      %100 = vst [vmem:[#allocation2 + $0x148] sm:$0xff] 0.0
      %101 = vst [vmem:[#allocation2 + $0x150] sm:$0xff] 0.0
      %102 = vst [vmem:[#allocation2 + $0x158] sm:$0xff] 0.0
      %103 = vst [vmem:[#allocation2 + $0x160] sm:$0xff] 0.0
      %104 = vst [vmem:[#allocation2 + $0x168] sm:$0xff] 0.0
      %105 = vst [vmem:[#allocation2 + $0x170] sm:$0xff] 0.0
      %106 = vst [vmem:[#allocation2 + $0x178] sm:$0xff] 0.0
      %107 = vst [vmem:[#allocation2 + $0x180] sm:$0xff] 0.0
      %108 = vst [vmem:[#allocation2 + $0x188] sm:$0xff] 0.0
      %109 = vst [vmem:[#allocation2 + $0x190] sm:$0xff] 0.0
      %110 = vst [vmem:[#allocation2 + $0x198] sm:$0xff] 0.0
      %111 = vst [vmem:[#allocation2 + $0x1a0] sm:$0xff] 0.0
      %112 = vst [vmem:[#allocation2 + $0x1a8] sm:$0xff] 0.0
      %113 = vst [vmem:[#allocation2 + $0x1b0] sm:$0xff] 0.0
      %114 = vst [vmem:[#allocation2 + $0x1b8] sm:$0xff] 0.0
      %115 = vst [vmem:[#allocation2 + $0x1c0] sm:$0xff] 0.0
      %116 = vst [vmem:[#allocation2 + $0x1c8] sm:$0xff] 0.0
      %117 = vst [vmem:[#allocation2 + $0x1d0] sm:$0xff] 0.0
      %118 = vst [vmem:[#allocation2 + $0x1d8] sm:$0xff] 0.0
      %119 = vst [vmem:[#allocation2 + $0x1e0] sm:$0xff] 0.0
      %120 = vst [vmem:[#allocation2 + $0x1e8] sm:$0xff] 0.0
      %121 = vst [vmem:[#allocation2 + $0x1f0] sm:$0xff] 0.0
      %122 = vst [vmem:[#allocation2 + $0x1f8] sm:$0xff] 0.0
      %123 = vst [vmem:[#allocation2 + $0x200] sm:$0xff] 0.0
      %124 = vst [vmem:[#allocation2 + $0x208] sm:$0xff] 0.0
      %125 = vst [vmem:[#allocation2 + $0x210] sm:$0xff] 0.0
      %126 = vst [vmem:[#allocation2 + $0x218] sm:$0xff] 0.0
      %127 = vst [vmem:[#allocation2 + $0x220] sm:$0xff] 0.0
      %128 = vst [vmem:[#allocation2 + $0x228] sm:$0xff] 0.0
      %129 = vst [vmem:[#allocation2 + $0x230] sm:$0xff] 0.0
      %130 = vst [vmem:[#allocation2 + $0x238] sm:$0xff] 0.0
      %131 = vst [vmem:[#allocation2 + $0x240] sm:$0xff] 0.0
      %132 = vst [vmem:[#allocation2 + $0x248] sm:$0xff] 0.0
    $region29: #{tpu_custom_call.1} parent=1 // pred_fallthru
      _
    %v133 = vld [vmem:[#allocation2] sm:$0xff]
    %v134 = vld [vmem:[#allocation2 + $0x8] sm:$0xff]
    %v135 = vld [vmem:[#allocation2 + $0x10] sm:$0xff]
    %v136 = vld [vmem:[#allocation2 + $0x18] sm:$0xff]
    %v137 = vld [vmem:[#allocation2 + $0x20] sm:$0xff]
    %v138 = vld [vmem:[#allocation2 + $0x28] sm:$0xff]
    %v139 = vld [vmem:[#allocation2 + $0x30] sm:$0xff]
    %v140 = vld [vmem:[#allocation2 + $0x38] sm:$0xff]
    %v141 = vld [vmem:[#allocation2 + $0x40] sm:$0xff]
    %v142 = vld [vmem:[#allocation2 + $0x48] sm:$0xff]
    %v143 = vld [vmem:[#allocation2 + $0x50] sm:$0xff]
    %v144 = vld [vmem:[#allocation2 + $0x58] sm:$0xff]
    %v145 = vld [vmem:[#allocation2 + $0x60] sm:$0xff]
    %v146 = vld [vmem:[#allocation2 + $0x68] sm:$0xff]
    %v147 = vld [vmem:[#allocation2 + $0x70] sm:$0xff]
    %v148 = vld [vmem:[#allocation2 + $0x78] sm:$0xff]
    %v149 = vld [vmem:[#allocation2 + $0x80] sm:$0xff]
    %v150 = vld [vmem:[#allocation2 + $0x88] sm:$0xff]
    %v151 = vld [vmem:[#allocation2 + $0x90] sm:$0xff]
    %v152 = vld [vmem:[#allocation2 + $0x98] sm:$0xff]
    %v153 = vld [vmem:[#allocation2 + $0xa0] sm:$0xff]
    %v154 = vld [vmem:[#allocation2 + $0xa8] sm:$0xff]
    %v155 = vld [vmem:[#allocation2 + $0xb0] sm:$0xff]
    %v156 = vld [vmem:[#allocation2 + $0xb8] sm:$0xff]
    %v157 = vld [vmem:[#allocation2 + $0xc0] sm:$0xff]
    %v158 = vld [vmem:[#allocation2 + $0xc8] sm:$0xff]
    %v159 = vld [vmem:[#allocation2 + $0xd0] sm:$0xff]
    %v160 = vld [vmem:[#allocation2 + $0xd8] sm:$0xff]
    %v161 = vld [vmem:[#allocation2 + $0xe0] sm:$0xff]
    %v162 = vld [vmem:[#allocation2 + $0xe8] sm:$0xff]
    %v163 = vld [vmem:[#allocation2 + $0xf0] sm:$0xff]
    %v164 = vld [vmem:[#allocation2 + $0xf8] sm:$0xff]
    %v165 = vld [vmem:[#allocation2 + $0x100] sm:$0xff]
    %v166 = vld [vmem:[#allocation2 + $0x108] sm:$0xff]
    %v167 = vld [vmem:[#allocation2 + $0x110] sm:$0xff]
    %v168 = vld [vmem:[#allocation2 + $0x118] sm:$0xff]
    %v169 = vld [vmem:[#allocation2 + $0x120] sm:$0xff]
    %v170 = vld [vmem:[#allocation2 + $0x128] sm:$0xff]
    %v171 = vld [vmem:[#allocation2 + $0x130] sm:$0xff]
    %v172 = vld [vmem:[#allocation2 + $0x138] sm:$0xff]
    %v173 = vld [vmem:[#allocation2 + $0x140] sm:$0xff]
    %v174 = vld [vmem:[#allocation2 + $0x148] sm:$0xff]
    %v175 = vld [vmem:[#allocation2 + $0x150] sm:$0xff]
    %v176 = vld [vmem:[#allocation2 + $0x158] sm:$0xff]
    %v177 = vld [vmem:[#allocation2 + $0x160] sm:$0xff]
    %v178 = vld [vmem:[#allocation2 + $0x168] sm:$0xff]
    %v179 = vld [vmem:[#allocation2 + $0x170] sm:$0xff]
    %v180 = vld [vmem:[#allocation2 + $0x178] sm:$0xff]
    %v181 = vld [vmem:[#allocation2 + $0x180] sm:$0xff]
    %v182 = vld [vmem:[#allocation2 + $0x188] sm:$0xff]
    %v183 = vld [vmem:[#allocation2 + $0x190] sm:$0xff]
    %v184 = vld [vmem:[#allocation2 + $0x198] sm:$0xff]
    %v185 = vld [vmem:[#allocation2 + $0x1a0] sm:$0xff]
    %v186 = vld [vmem:[#allocation2 + $0x1a8] sm:$0xff]
    %v187 = vld [vmem:[#allocation2 + $0x1b0] sm:$0xff]
    %v188 = vld [vmem:[#allocation2 + $0x1b8] sm:$0xff]
    %v189 = vld [vmem:[#allocation2 + $0x1c0] sm:$0xff]
    %v190 = vld [vmem:[#allocation2 + $0x1c8] sm:$0xff]
    %v191 = vld [vmem:[#allocation2 + $0x1d0] sm:$0xff]
    %v192 = vld [vmem:[#allocation2 + $0x1d8] sm:$0xff]
    %v193 = vld [vmem:[#allocation2 + $0x1e0] sm:$0xff]
    %v194 = vld [vmem:[#allocation2 + $0x1e8] sm:$0xff]
    %v195 = vld [vmem:[#allocation2 + $0x1f0] sm:$0xff]
    %v196 = vld [vmem:[#allocation2 + $0x1f8] sm:$0xff]
    %v197 = vld [vmem:[#allocation2 + $0x200] sm:$0xff]
    %v198 = vld [vmem:[#allocation2 + $0x208] sm:$0xff]
    %v199 = vld [vmem:[#allocation2 + $0x210] sm:$0xff]
    %v200 = vld [vmem:[#allocation2 + $0x218] sm:$0xff]
    %v201 = vld [vmem:[#allocation2 + $0x220] sm:$0xff]
    %v202 = vld [vmem:[#allocation2 + $0x228] sm:$0xff]
    %v203 = vld [vmem:[#allocation2 + $0x230] sm:$0xff]
    %v204 = vld [vmem:[#allocation2 + $0x238] sm:$0xff]
    %v205 = vld [vmem:[#allocation2 + $0x240] sm:$0xff]
    %v206 = vld [vmem:[#allocation2 + $0x248] sm:$0xff]
    %v207 = vld [vmem:[#allocation3] sm:$0xf]
    %v208 = vld [vmem:[#allocation3 + $0x4] sm:$0xf]
    %v209 = vld [vmem:[#allocation6] sm:$0xff]
    %v210 = vld [vmem:[#allocation6 + $0x8] sm:$0xff]
    %v211 = vld [vmem:[#allocation6 + $0x10] sm:$0xff]
    %v212 = vld [vmem:[#allocation6 + $0x18] sm:$0xff]
    %v213 = vld [vmem:[#allocation6 + $0x20] sm:$0xff]
    %v214 = vld [vmem:[#allocation6 + $0x28] sm:$0xff]
    %v215 = vld [vmem:[#allocation6 + $0x30] sm:$0xff]
    %v216 = vld [vmem:[#allocation6 + $0x38] sm:$0xff]
    %v217 = vld [vmem:[#allocation6 + $0x40] sm:$0xff]
    %v218 = vld [vmem:[#allocation6 + $0x48] sm:$0xff]
    %v219 = vld [vmem:[#allocation6 + $0x50] sm:$0xff]
    %v220 = vld [vmem:[#allocation6 + $0x58] sm:$0xff]
    %v221 = vld [vmem:[#allocation6 + $0x60] sm:$0xff]
    %v222 = vld [vmem:[#allocation6 + $0x68] sm:$0xff]
    %v223 = vld [vmem:[#allocation6 + $0x70] sm:$0xff]
    %v224 = vld [vmem:[#allocation6 + $0x78] sm:$0xff]
    %v225 = vld [vmem:[#allocation6 + $0x80] sm:$0xff]
    %v226 = vld [vmem:[#allocation6 + $0x88] sm:$0xff]
    %v227 = vld [vmem:[#allocation6 + $0x90] sm:$0xf]
    %v228 = vld [vmem:[#allocation6 + $0x94] sm:$0xff]
    %v229 = vld [vmem:[#allocation6 + $0x9c] sm:$0xff]
    %v230 = vld [vmem:[#allocation6 + $0xa4] sm:$0xff]
    %v231 = vld [vmem:[#allocation6 + $0xac] sm:$0xff]
    %v232 = vld [vmem:[#allocation6 + $0xb4] sm:$0xff]
    %v233 = vld [vmem:[#allocation6 + $0xbc] sm:$0xff]
    %v234 = vld [vmem:[#allocation6 + $0xc4] sm:$0xff]
    %v235 = vld [vmem:[#allocation6 + $0xcc] sm:$0xff]
    %v236 = vld [vmem:[#allocation6 + $0xd4] sm:$0xff]
    %v237 = vld [vmem:[#allocation6 + $0xdc] sm:$0xff]
    %v238 = vld [vmem:[#allocation6 + $0xe4] sm:$0xff]
    %v239 = vld [vmem:[#allocation6 + $0xec] sm:$0xff]
    %v240 = vld [vmem:[#allocation6 + $0xf4] sm:$0xff]
    %v241 = vld [vmem:[#allocation6 + $0xfc] sm:$0xff]
    %v242 = vld [vmem:[#allocation6 + $0x104] sm:$0xff]
    %v243 = vld [vmem:[#allocation6 + $0x10c] sm:$0xff]
    %v244 = vld [vmem:[#allocation6 + $0x114] sm:$0xff]
    %v245 = vld [vmem:[#allocation6 + $0x11c] sm:$0xff]
    %v246 = vld [vmem:[#allocation6 + $0x124] sm:$0xf]
    %v247 = vld [vmem:[#allocation6 + $0x128] sm:$0xff]
    %v248 = vld [vmem:[#allocation6 + $0x130] sm:$0xff]
    %v249 = vld [vmem:[#allocation6 + $0x138] sm:$0xff]
    %v250 = vld [vmem:[#allocation6 + $0x140] sm:$0xff]
    %v251 = vld [vmem:[#allocation6 + $0x148] sm:$0xff]
    %v252 = vld [vmem:[#allocation6 + $0x150] sm:$0xff]
    %v253 = vld [vmem:[#allocation6 + $0x158] sm:$0xff]
    %v254 = vld [vmem:[#allocation6 + $0x160] sm:$0xff]
    %v255 = vld [vmem:[#allocation6 + $0x168] sm:$0xff]
    %v256 = vld [vmem:[#allocation6 + $0x170] sm:$0xff]
    %v257 = vld [vmem:[#allocation6 + $0x178] sm:$0xff]
    %v258 = vld [vmem:[#allocation6 + $0x180] sm:$0xff]
    %v259 = vld [vmem:[#allocation6 + $0x188] sm:$0xff]
    %v260 = vld [vmem:[#allocation6 + $0x190] sm:$0xff]
    %v261 = vld [vmem:[#allocation6 + $0x198] sm:$0xff]
    %v262 = vld [vmem:[#allocation6 + $0x1a0] sm:$0xff]
    %v263 = vld [vmem:[#allocation6 + $0x1a8] sm:$0xff]
    %v264 = vld [vmem:[#allocation6 + $0x1b0] sm:$0xff]
    %v265 = vld [vmem:[#allocation6 + $0x1b8] sm:$0xf]
    %v266 = vld [vmem:[#allocation6 + $0x1bc] sm:$0xff]
    %v267 = vld [vmem:[#allocation6 + $0x1c4] sm:$0xff]
    %v268 = vld [vmem:[#allocation6 + $0x1cc] sm:$0xff]
    %v269 = vld [vmem:[#allocation6 + $0x1d4] sm:$0xff]
    %v270 = vld [vmem:[#allocation6 + $0x1dc] sm:$0xff]
    %v271 = vld [vmem:[#allocation6 + $0x1e4] sm:$0xff]
    %v272 = vld [vmem:[#allocation6 + $0x1ec] sm:$0xff]
    %v273 = vld [vmem:[#allocation6 + $0x1f4] sm:$0xff]
    %v274 = vld [vmem:[#allocation6 + $0x1fc] sm:$0xff]
    %v275 = vld [vmem:[#allocation6 + $0x204] sm:$0xff]
    %v276 = vld [vmem:[#allocation6 + $0x20c] sm:$0xff]
    %v277 = vld [vmem:[#allocation6 + $0x214] sm:$0xff]
    %v278 = vld [vmem:[#allocation6 + $0x21c] sm:$0xff]
    %v279 = vld [vmem:[#allocation6 + $0x224] sm:$0xff]
    %v280 = vld [vmem:[#allocation6 + $0x22c] sm:$0xff]
    %v281 = vld [vmem:[#allocation6 + $0x234] sm:$0xff]
    %v282 = vld [vmem:[#allocation6 + $0x23c] sm:$0xff]
    %v283 = vld [vmem:[#allocation6 + $0x244] sm:$0xff]
    %v284 = vld [vmem:[#allocation6 + $0x24c] sm:$0xf]
    %v285 = vld [vmem:[#allocation6 + $0x250] sm:$0xff]
    %v286 = vld [vmem:[#allocation6 + $0x258] sm:$0xff]
    %v287 = vld [vmem:[#allocation6 + $0x260] sm:$0xff]
    %v288 = vld [vmem:[#allocation6 + $0x268] sm:$0xff]
    %v289 = vld [vmem:[#allocation6 + $0x270] sm:$0xff]
    %v290 = vld [vmem:[#allocation6 + $0x278] sm:$0xff]
    %v291 = vld [vmem:[#allocation6 + $0x280] sm:$0xff]
    %v292 = vld [vmem:[#allocation6 + $0x288] sm:$0xff]
    %v293 = vld [vmem:[#allocation6 + $0x290] sm:$0xff]
    %v294 = vld [vmem:[#allocation6 + $0x298] sm:$0xff]
    %v295 = vld [vmem:[#allocation6 + $0x2a0] sm:$0xff]
    %v296 = vld [vmem:[#allocation6 + $0x2a8] sm:$0xff]
    %v297 = vld [vmem:[#allocation6 + $0x2b0] sm:$0xff]
    %v298 = vld [vmem:[#allocation6 + $0x2b8] sm:$0xff]
    %v299 = vld [vmem:[#allocation6 + $0x2c0] sm:$0xff]
    %v300 = vld [vmem:[#allocation6 + $0x2c8] sm:$0xff]
    %v301 = vld [vmem:[#allocation6 + $0x2d0] sm:$0xff]
    %v302 = vld [vmem:[#allocation6 + $0x2d8] sm:$0xff]
    %v303 = vld [vmem:[#allocation6 + $0x2e0] sm:$0xf]
    %v304 = vld [vmem:[#allocation6 + $0x2e4] sm:$0xff]
    %v305 = vld [vmem:[#allocation6 + $0x2ec] sm:$0xff]
    %v306 = vld [vmem:[#allocation6 + $0x2f4] sm:$0xff]
    %v307 = vld [vmem:[#allocation6 + $0x2fc] sm:$0xff]
    %v308 = vld [vmem:[#allocation6 + $0x304] sm:$0xff]
    %v309 = vld [vmem:[#allocation6 + $0x30c] sm:$0xff]
    %v310 = vld [vmem:[#allocation6 + $0x314] sm:$0xff]
    %v311 = vld [vmem:[#allocation6 + $0x31c] sm:$0xff]
    %v312 = vld [vmem:[#allocation6 + $0x324] sm:$0xff]
    %v313 = vld [vmem:[#allocation6 + $0x32c] sm:$0xff]
    %v314 = vld [vmem:[#allocation6 + $0x334] sm:$0xff]
    %v315 = vld [vmem:[#allocation6 + $0x33c] sm:$0xff]
    %v316 = vld [vmem:[#allocation6 + $0x344] sm:$0xff]
    %v317 = vld [vmem:[#allocation6 + $0x34c] sm:$0xff]
    %v318 = vld [vmem:[#allocation6 + $0x354] sm:$0xff]
    %v319 = vld [vmem:[#allocation6 + $0x35c] sm:$0xff]
    %v320 = vld [vmem:[#allocation6 + $0x364] sm:$0xff]
    %v321 = vld [vmem:[#allocation6 + $0x36c] sm:$0xff]
    %v322 = vld [vmem:[#allocation6 + $0x374] sm:$0xf]
    %v323 = vld [vmem:[#allocation6 + $0x378] sm:$0xff]
    %v324 = vld [vmem:[#allocation6 + $0x380] sm:$0xff]
    %v325 = vld [vmem:[#allocation6 + $0x388] sm:$0xff]
    %v326 = vld [vmem:[#allocation6 + $0x390] sm:$0xff]
    %v327 = vld [vmem:[#allocation6 + $0x398] sm:$0xff]
    %v328 = vld [vmem:[#allocation6 + $0x3a0] sm:$0xff]
    %v329 = vld [vmem:[#allocation6 + $0x3a8] sm:$0xff]
    %v330 = vld [vmem:[#allocation6 + $0x3b0] sm:$0xff]
    %v331 = vld [vmem:[#allocation6 + $0x3b8] sm:$0xff]
    %v332 = vld [vmem:[#allocation6 + $0x3c0] sm:$0xff]
    %v333 = vld [vmem:[#allocation6 + $0x3c8] sm:$0xff]
    %v334 = vld [vmem:[#allocation6 + $0x3d0] sm:$0xff]
    %v335 = vld [vmem:[#allocation6 + $0x3d8] sm:$0xff]
    %v336 = vld [vmem:[#allocation6 + $0x3e0] sm:$0xff]
    %v337 = vld [vmem:[#allocation6 + $0x3e8] sm:$0xff]
    %v338 = vld [vmem:[#allocation6 + $0x3f0] sm:$0xff]
    %v339 = vld [vmem:[#allocation6 + $0x3f8] sm:$0xff]
    %v340 = vld [vmem:[#allocation6 + $0x400] sm:$0xff]
    %v341 = vld [vmem:[#allocation6 + $0x408] sm:$0xf]
    %v342 = vld [vmem:[#allocation6 + $0x40c] sm:$0xff]
    %v343 = vld [vmem:[#allocation6 + $0x414] sm:$0xff]
    %v344 = vld [vmem:[#allocation6 + $0x41c] sm:$0xff]
    %v345 = vld [vmem:[#allocation6 + $0x424] sm:$0xff]
    %v346 = vld [vmem:[#allocation6 + $0x42c] sm:$0xff]
    %v347 = vld [vmem:[#allocation6 + $0x434] sm:$0xff]
    %v348 = vld [vmem:[#allocation6 + $0x43c] sm:$0xff]
    %v349 = vld [vmem:[#allocation6 + $0x444] sm:$0xff]
    %v350 = vld [vmem:[#allocation6 + $0x44c] sm:$0xff]
    %v351 = vld [vmem:[#allocation6 + $0x454] sm:$0xff]
    %v352 = vld [vmem:[#allocation6 + $0x45c] sm:$0xff]
    %v353 = vld [vmem:[#allocation6 + $0x464] sm:$0xff]
    %v354 = vld [vmem:[#allocation6 + $0x46c] sm:$0xff]
    %v355 = vld [vmem:[#allocation6 + $0x474] sm:$0xff]
    %v356 = vld [vmem:[#allocation6 + $0x47c] sm:$0xff]
    %v357 = vld [vmem:[#allocation6 + $0x484] sm:$0xff]
    %v358 = vld [vmem:[#allocation6 + $0x48c] sm:$0xff]
    %v359 = vld [vmem:[#allocation6 + $0x494] sm:$0xff]
    %v360 = vld [vmem:[#allocation6 + $0x49c] sm:$0xf]
    %v361 = vld [vmem:[#allocation6 + $0x4a0] sm:$0xff]
    %v362 = vld [vmem:[#allocation6 + $0x4a8] sm:$0xff]
    %v363 = vld [vmem:[#allocation6 + $0x4b0] sm:$0xff]
    %v364 = vld [vmem:[#allocation6 + $0x4b8] sm:$0xff]
    %v365 = vld [vmem:[#allocation6 + $0x4c0] sm:$0xff]
    %v366 = vld [vmem:[#allocation6 + $0x4c8] sm:$0xff]
    %v367 = vld [vmem:[#allocation6 + $0x4d0] sm:$0xff]
    %v368 = vld [vmem:[#allocation6 + $0x4d8] sm:$0xff]
    %v369 = vld [vmem:[#allocation6 + $0x4e0] sm:$0xff]
    %v370 = vld [vmem:[#allocation6 + $0x4e8] sm:$0xff]
    %v371 = vld [vmem:[#allocation6 + $0x4f0] sm:$0xff]
    %v372 = vld [vmem:[#allocation6 + $0x4f8] sm:$0xff]
    %v373 = vld [vmem:[#allocation6 + $0x500] sm:$0xff]
    %v374 = vld [vmem:[#allocation6 + $0x508] sm:$0xff]
    %v375 = vld [vmem:[#allocation6 + $0x510] sm:$0xff]
    %v376 = vld [vmem:[#allocation6 + $0x518] sm:$0xff]
    %v377 = vld [vmem:[#allocation6 + $0x520] sm:$0xff]
    %v378 = vld [vmem:[#allocation6 + $0x528] sm:$0xff]
    %v379 = vld [vmem:[#allocation6 + $0x530] sm:$0xf]
    %v380 = vld [vmem:[#allocation6 + $0x534] sm:$0xff]
    %v381 = vld [vmem:[#allocation6 + $0x53c] sm:$0xff]
    %v382 = vld [vmem:[#allocation6 + $0x544] sm:$0xff]
    %v383 = vld [vmem:[#allocation6 + $0x54c] sm:$0xff]
    %v384 = vld [vmem:[#allocation6 + $0x554] sm:$0xff]
    %v385 = vld [vmem:[#allocation6 + $0x55c] sm:$0xff]
    %v386 = vld [vmem:[#allocation6 + $0x564] sm:$0xff]
    %v387 = vld [vmem:[#allocation6 + $0x56c] sm:$0xff]
    %v388 = vld [vmem:[#allocation6 + $0x574] sm:$0xff]
    %v389 = vld [vmem:[#allocation6 + $0x57c] sm:$0xff]
    %v390 = vld [vmem:[#allocation6 + $0x584] sm:$0xff]
    %v391 = vld [vmem:[#allocation6 + $0x58c] sm:$0xff]
    %v392 = vld [vmem:[#allocation6 + $0x594] sm:$0xff]
    %v393 = vld [vmem:[#allocation6 + $0x59c] sm:$0xff]
    %v394 = vld [vmem:[#allocation6 + $0x5a4] sm:$0xff]
    %v395 = vld [vmem:[#allocation6 + $0x5ac] sm:$0xff]
    %v396 = vld [vmem:[#allocation6 + $0x5b4] sm:$0xff]
    %v397 = vld [vmem:[#allocation6 + $0x5bc] sm:$0xff]
    %v398 = vld [vmem:[#allocation6 + $0x5c4] sm:$0xf]
    %v399 = vld [vmem:[#allocation6 + $0x5c8] sm:$0xff]
    %v400 = vld [vmem:[#allocation6 + $0x5d0] sm:$0xff]
    %v401 = vld [vmem:[#allocation6 + $0x5d8] sm:$0xff]
    %v402 = vld [vmem:[#allocation6 + $0x5e0] sm:$0xff]
    %v403 = vld [vmem:[#allocation6 + $0x5e8] sm:$0xff]
    %v404 = vld [vmem:[#allocation6 + $0x5f0] sm:$0xff]
    %v405 = vld [vmem:[#allocation6 + $0x5f8] sm:$0xff]
    %v406 = vld [vmem:[#allocation6 + $0x600] sm:$0xff]
    %v407 = vld [vmem:[#allocation6 + $0x608] sm:$0xff]
    %v408 = vld [vmem:[#allocation6 + $0x610] sm:$0xff]
    %v409 = vld [vmem:[#allocation6 + $0x618] sm:$0xff]
    %v410 = vld [vmem:[#allocation6 + $0x620] sm:$0xff]
    %v411 = vld [vmem:[#allocation6 + $0x628] sm:$0xff]
    %v412 = vld [vmem:[#allocation6 + $0x630] sm:$0xff]
    %v413 = vld [vmem:[#allocation6 + $0x638] sm:$0xff]
    %v414 = vld [vmem:[#allocation6 + $0x640] sm:$0xff]
    %v415 = vld [vmem:[#allocation6 + $0x648] sm:$0xff]
    %v416 = vld [vmem:[#allocation6 + $0x650] sm:$0xff]
    %v417 = vld [vmem:[#allocation6 + $0x658] sm:$0xf]
    %v418 = vld [vmem:[#allocation6 + $0x65c] sm:$0xff]
    %v419 = vld [vmem:[#allocation6 + $0x664] sm:$0xff]
    %v420 = vld [vmem:[#allocation6 + $0x66c] sm:$0xff]
    %v421 = vld [vmem:[#allocation6 + $0x674] sm:$0xff]
    %v422 = vld [vmem:[#allocation6 + $0x67c] sm:$0xff]
    %v423 = vld [vmem:[#allocation6 + $0x684] sm:$0xff]
    %v424 = vld [vmem:[#allocation6 + $0x68c] sm:$0xff]
    %v425 = vld [vmem:[#allocation6 + $0x694] sm:$0xff]
    %v426 = vld [vmem:[#allocation6 + $0x69c] sm:$0xff]
    %v427 = vld [vmem:[#allocation6 + $0x6a4] sm:$0xff]
    %v428 = vld [vmem:[#allocation6 + $0x6ac] sm:$0xff]
    %v429 = vld [vmem:[#allocation6 + $0x6b4] sm:$0xff]
    %v430 = vld [vmem:[#allocation6 + $0x6bc] sm:$0xff]
    %v431 = vld [vmem:[#allocation6 + $0x6c4] sm:$0xff]
    %v432 = vld [vmem:[#allocation6 + $0x6cc] sm:$0xff]
    %v433 = vld [vmem:[#allocation6 + $0x6d4] sm:$0xff]
    %v434 = vld [vmem:[#allocation6 + $0x6dc] sm:$0xff]
    %v435 = vld [vmem:[#allocation6 + $0x6e4] sm:$0xff]
    %v436 = vld [vmem:[#allocation6 + $0x6ec] sm:$0xf]
    %v437 = vld [vmem:[#allocation6 + $0x6f0] sm:$0xff]
    %v438 = vld [vmem:[#allocation6 + $0x6f8] sm:$0xff]
    %v439 = vld [vmem:[#allocation6 + $0x700] sm:$0xff]
    %v440 = vld [vmem:[#allocation6 + $0x708] sm:$0xff]
    %v441 = vld [vmem:[#allocation6 + $0x710] sm:$0xff]
    %v442 = vld [vmem:[#allocation6 + $0x718] sm:$0xff]
    %v443 = vld [vmem:[#allocation6 + $0x720] sm:$0xff]
    %v444 = vld [vmem:[#allocation6 + $0x728] sm:$0xff]
    %v445 = vld [vmem:[#allocation6 + $0x730] sm:$0xff]
    %v446 = vld [vmem:[#allocation6 + $0x738] sm:$0xff]
    %v447 = vld [vmem:[#allocation6 + $0x740] sm:$0xff]
    %v448 = vld [vmem:[#allocation6 + $0x748] sm:$0xff]
    %v449 = vld [vmem:[#allocation6 + $0x750] sm:$0xff]
    %v450 = vld [vmem:[#allocation6 + $0x758] sm:$0xff]
    %v451 = vld [vmem:[#allocation6 + $0x760] sm:$0xff]
    %v452 = vld [vmem:[#allocation6 + $0x768] sm:$0xff]
    %v453 = vld [vmem:[#allocation6 + $0x770] sm:$0xff]
    %v454 = vld [vmem:[#allocation6 + $0x778] sm:$0xff]
    %v455 = vld [vmem:[#allocation6 + $0x780] sm:$0xf]
    %v456 = vld [vmem:[#allocation6 + $0x784] sm:$0xff]
    %v457 = vld [vmem:[#allocation6 + $0x78c] sm:$0xff]
    %v458 = vld [vmem:[#allocation6 + $0x794] sm:$0xff]
    %v459 = vld [vmem:[#allocation6 + $0x79c] sm:$0xff]
    %v460 = vld [vmem:[#allocation6 + $0x7a4] sm:$0xff]
    %v461 = vld [vmem:[#allocation6 + $0x7ac] sm:$0xff]
    %v462 = vld [vmem:[#allocation6 + $0x7b4] sm:$0xff]
    %v463 = vld [vmem:[#allocation6 + $0x7bc] sm:$0xff]
    %v464 = vld [vmem:[#allocation6 + $0x7c4] sm:$0xff]
    %v465 = vld [vmem:[#allocation6 + $0x7cc] sm:$0xff]
    %v466 = vld [vmem:[#allocation6 + $0x7d4] sm:$0xff]
    %v467 = vld [vmem:[#allocation6 + $0x7dc] sm:$0xff]
    %v468 = vld [vmem:[#allocation6 + $0x7e4] sm:$0xff]
    %v469 = vld [vmem:[#allocation6 + $0x7ec] sm:$0xff]
    %v470 = vld [vmem:[#allocation6 + $0x7f4] sm:$0xff]
    %v471 = vld [vmem:[#allocation6 + $0x7fc] sm:$0xff]
    %v472 = vld [vmem:[#allocation6 + $0x804] sm:$0xff]
    %v473 = vld [vmem:[#allocation6 + $0x80c] sm:$0xff]
    %v474 = vld [vmem:[#allocation6 + $0x814] sm:$0xf]
    %v475 = vld [vmem:[#allocation6 + $0x818] sm:$0xff]
    %v476 = vld [vmem:[#allocation6 + $0x820] sm:$0xff]
    %v477 = vld [vmem:[#allocation6 + $0x828] sm:$0xff]
    %v478 = vld [vmem:[#allocation6 + $0x830] sm:$0xff]
    %v479 = vld [vmem:[#allocation6 + $0x838] sm:$0xff]
    %v480 = vld [vmem:[#allocation6 + $0x840] sm:$0xff]
    %v481 = vld [vmem:[#allocation6 + $0x848] sm:$0xff]
    %v482 = vld [vmem:[#allocation6 + $0x850] sm:$0xff]
    %v483 = vld [vmem:[#allocation6 + $0x858] sm:$0xff]
    %v484 = vld [vmem:[#allocation6 + $0x860] sm:$0xff]
    %v485 = vld [vmem:[#allocation6 + $0x868] sm:$0xff]
    %v486 = vld [vmem:[#allocation6 + $0x870] sm:$0xff]
    %v487 = vld [vmem:[#allocation6 + $0x878] sm:$0xff]
    %v488 = vld [vmem:[#allocation6 + $0x880] sm:$0xff]
    %v489 = vld [vmem:[#allocation6 + $0x888] sm:$0xff]
    %v490 = vld [vmem:[#allocation6 + $0x890] sm:$0xff]
    %v491 = vld [vmem:[#allocation6 + $0x898] sm:$0xff]
    %v492 = vld [vmem:[#allocation6 + $0x8a0] sm:$0xff]
    %v493 = vld [vmem:[#allocation6 + $0x8a8] sm:$0xf]
    %v494 = vld [vmem:[#allocation6 + $0x8ac] sm:$0xff]
    %v495 = vld [vmem:[#allocation6 + $0x8b4] sm:$0xff]
    %v496 = vld [vmem:[#allocation6 + $0x8bc] sm:$0xff]
    %v497 = vld [vmem:[#allocation6 + $0x8c4] sm:$0xff]
    %v498 = vld [vmem:[#allocation6 + $0x8cc] sm:$0xff]
    %v499 = vld [vmem:[#allocation6 + $0x8d4] sm:$0xff]
    %v500 = vld [vmem:[#allocation6 + $0x8dc] sm:$0xff]
    %v501 = vld [vmem:[#allocation6 + $0x8e4] sm:$0xff]
    %v502 = vld [vmem:[#allocation6 + $0x8ec] sm:$0xff]
    %v503 = vld [vmem:[#allocation6 + $0x8f4] sm:$0xff]
    %v504 = vld [vmem:[#allocation6 + $0x8fc] sm:$0xff]
    %v505 = vld [vmem:[#allocation6 + $0x904] sm:$0xff]
    %v506 = vld [vmem:[#allocation6 + $0x90c] sm:$0xff]
    %v507 = vld [vmem:[#allocation6 + $0x914] sm:$0xff]
    %v508 = vld [vmem:[#allocation6 + $0x91c] sm:$0xff]
    %v509 = vld [vmem:[#allocation6 + $0x924] sm:$0xff]
    %v510 = vld [vmem:[#allocation6 + $0x92c] sm:$0xff]
    %v511 = vld [vmem:[#allocation6 + $0x934] sm:$0xff]
    %v512 = vld [vmem:[#allocation6 + $0x93c] sm:$0xf]
    %v515 = vunpack.c.l.b16 %v207
    %v516 = vunpack.c.l.b16 %v208
    %v517 = vpack.c.b16 %v516, %v515
    %v823 = vunpack.c.l.b16 %v209
    %v824 = vunpack.c.h.b16 %v209
    %v825 = vunpack.c.l.b16 %v210
    %v826 = vunpack.c.h.b16 %v210
    %v827 = vunpack.c.l.b16 %v211
    %v828 = vunpack.c.h.b16 %v211
    %v829 = vunpack.c.l.b16 %v212
    %v830 = vunpack.c.h.b16 %v212
    %v831 = vunpack.c.l.b16 %v213
    %v832 = vunpack.c.h.b16 %v213
    %v833 = vunpack.c.l.b16 %v214
    %v834 = vunpack.c.h.b16 %v214
    %v835 = vunpack.c.l.b16 %v215
    %v836 = vunpack.c.h.b16 %v215
    %v837 = vunpack.c.l.b16 %v216
    %v838 = vunpack.c.h.b16 %v216
    %v839 = vunpack.c.l.b16 %v217
    %v840 = vunpack.c.h.b16 %v217
    %v841 = vunpack.c.l.b16 %v218
    %v842 = vunpack.c.h.b16 %v218
    %v843 = vunpack.c.l.b16 %v219
    %v844 = vunpack.c.h.b16 %v219
    %v845 = vunpack.c.l.b16 %v220
    %v846 = vunpack.c.h.b16 %v220
    %v847 = vunpack.c.l.b16 %v221
    %v848 = vunpack.c.h.b16 %v221
    %v849 = vunpack.c.l.b16 %v222
    %v850 = vunpack.c.h.b16 %v222
    %v851 = vunpack.c.l.b16 %v223
    %v852 = vunpack.c.h.b16 %v223
    %v853 = vunpack.c.l.b16 %v224
    %v854 = vunpack.c.h.b16 %v224
    %v855 = vunpack.c.l.b16 %v225
    %v856 = vunpack.c.h.b16 %v225
    %v857 = vunpack.c.l.b16 %v226
    %v858 = vunpack.c.h.b16 %v226
    %v859 = vunpack.c.l.b16 %v227
    %v860 = vunpack.c.l.b16 %v228
    %v861 = vunpack.c.h.b16 %v228
    %v862 = vunpack.c.l.b16 %v229
    %v863 = vunpack.c.h.b16 %v229
    %v864 = vunpack.c.l.b16 %v230
    %v865 = vunpack.c.h.b16 %v230
    %v866 = vunpack.c.l.b16 %v231
    %v867 = vunpack.c.h.b16 %v231
    %v868 = vunpack.c.l.b16 %v232
    %v869 = vunpack.c.h.b16 %v232
    %v870 = vunpack.c.l.b16 %v233
    %v871 = vunpack.c.h.b16 %v233
    %v872 = vunpack.c.l.b16 %v234
    %v873 = vunpack.c.h.b16 %v234
    %v874 = vunpack.c.l.b16 %v235
    %v875 = vunpack.c.h.b16 %v235
    %v876 = vunpack.c.l.b16 %v236
    %v877 = vunpack.c.h.b16 %v236
    %v878 = vunpack.c.l.b16 %v237
    %v879 = vunpack.c.h.b16 %v237
    %v880 = vunpack.c.l.b16 %v238
    %v881 = vunpack.c.h.b16 %v238
    %v882 = vunpack.c.l.b16 %v239
    %v883 = vunpack.c.h.b16 %v239
    %v884 = vunpack.c.l.b16 %v240
    %v885 = vunpack.c.h.b16 %v240
    %v886 = vunpack.c.l.b16 %v241
    %v887 = vunpack.c.h.b16 %v241
    %v888 = vunpack.c.l.b16 %v242
    %v889 = vunpack.c.h.b16 %v242
    %v890 = vunpack.c.l.b16 %v243
    %v891 = vunpack.c.h.b16 %v243
    %v892 = vunpack.c.l.b16 %v244
    %v893 = vunpack.c.h.b16 %v244
    %v894 = vunpack.c.l.b16 %v245
    %v895 = vunpack.c.h.b16 %v245
    %v896 = vunpack.c.l.b16 %v246
    %v897 = vunpack.c.l.b16 %v247
    %v898 = vunpack.c.h.b16 %v247
    %v899 = vunpack.c.l.b16 %v248
    %v900 = vunpack.c.h.b16 %v248
    %v901 = vunpack.c.l.b16 %v249
    %v902 = vunpack.c.h.b16 %v249
    %v903 = vunpack.c.l.b16 %v250
    %v904 = vunpack.c.h.b16 %v250
    %v905 = vunpack.c.l.b16 %v251
    %v906 = vunpack.c.h.b16 %v251
    %v907 = vunpack.c.l.b16 %v252
    %v908 = vunpack.c.h.b16 %v252
    %v909 = vunpack.c.l.b16 %v253
    %v910 = vunpack.c.h.b16 %v253
    %v911 = vunpack.c.l.b16 %v254
    %v912 = vunpack.c.h.b16 %v254
    %v913 = vunpack.c.l.b16 %v255
    %v914 = vunpack.c.h.b16 %v255
    %v915 = vunpack.c.l.b16 %v256
    %v916 = vunpack.c.h.b16 %v256
    %v917 = vunpack.c.l.b16 %v257
    %v918 = vunpack.c.h.b16 %v257
    %v919 = vunpack.c.l.b16 %v258
    %v920 = vunpack.c.h.b16 %v258
    %v921 = vunpack.c.l.b16 %v259
    %v922 = vunpack.c.h.b16 %v259
    %v923 = vunpack.c.l.b16 %v260
    %v924 = vunpack.c.h.b16 %v260
    %v925 = vunpack.c.l.b16 %v261
    %v926 = vunpack.c.h.b16 %v261
    %v927 = vunpack.c.l.b16 %v262
    %v928 = vunpack.c.h.b16 %v262
    %v929 = vunpack.c.l.b16 %v263
    %v930 = vunpack.c.h.b16 %v263
    %v931 = vunpack.c.l.b16 %v264
    %v932 = vunpack.c.h.b16 %v264
    %v933 = vunpack.c.l.b16 %v265
    %v934 = vunpack.c.l.b16 %v266
    %v935 = vunpack.c.h.b16 %v266
    %v936 = vunpack.c.l.b16 %v267
    %v937 = vunpack.c.h.b16 %v267
    %v938 = vunpack.c.l.b16 %v268
    %v939 = vunpack.c.h.b16 %v268
    %v940 = vunpack.c.l.b16 %v269
    %v941 = vunpack.c.h.b16 %v269
    %v942 = vunpack.c.l.b16 %v270
    %v943 = vunpack.c.h.b16 %v270
    %v944 = vunpack.c.l.b16 %v271
    %v945 = vunpack.c.h.b16 %v271
    %v946 = vunpack.c.l.b16 %v272
    %v947 = vunpack.c.h.b16 %v272
    %v948 = vunpack.c.l.b16 %v273
    %v949 = vunpack.c.h.b16 %v273
    %v950 = vunpack.c.l.b16 %v274
    %v951 = vunpack.c.h.b16 %v274
    %v952 = vunpack.c.l.b16 %v275
    %v953 = vunpack.c.h.b16 %v275
    %v954 = vunpack.c.l.b16 %v276
    %v955 = vunpack.c.h.b16 %v276
    %v956 = vunpack.c.l.b16 %v277
    %v957 = vunpack.c.h.b16 %v277
    %v958 = vunpack.c.l.b16 %v278
    %v959 = vunpack.c.h.b16 %v278
    %v960 = vunpack.c.l.b16 %v279
    %v961 = vunpack.c.h.b16 %v279
    %v962 = vunpack.c.l.b16 %v280
    %v963 = vunpack.c.h.b16 %v280
    %v964 = vunpack.c.l.b16 %v281
    %v965 = vunpack.c.h.b16 %v281
    %v966 = vunpack.c.l.b16 %v282
    %v967 = vunpack.c.h.b16 %v282
    %v968 = vunpack.c.l.b16 %v283
    %v969 = vunpack.c.h.b16 %v283
    %v970 = vunpack.c.l.b16 %v284
    %v971 = vunpack.c.l.b16 %v285
    %v972 = vunpack.c.h.b16 %v285
    %v973 = vunpack.c.l.b16 %v286
    %v974 = vunpack.c.h.b16 %v286
    %v975 = vunpack.c.l.b16 %v287
    %v976 = vunpack.c.h.b16 %v287
    %v977 = vunpack.c.l.b16 %v288
    %v978 = vunpack.c.h.b16 %v288
    %v979 = vunpack.c.l.b16 %v289
    %v980 = vunpack.c.h.b16 %v289
    %v981 = vunpack.c.l.b16 %v290
    %v982 = vunpack.c.h.b16 %v290
    %v983 = vunpack.c.l.b16 %v291
    %v984 = vunpack.c.h.b16 %v291
    %v985 = vunpack.c.l.b16 %v292
    %v986 = vunpack.c.h.b16 %v292
    %v987 = vunpack.c.l.b16 %v293
    %v988 = vunpack.c.h.b16 %v293
    %v989 = vunpack.c.l.b16 %v294
    %v990 = vunpack.c.h.b16 %v294
    %v991 = vunpack.c.l.b16 %v295
    %v992 = vunpack.c.h.b16 %v295
    %v993 = vunpack.c.l.b16 %v296
    %v994 = vunpack.c.h.b16 %v296
    %v995 = vunpack.c.l.b16 %v297
    %v996 = vunpack.c.h.b16 %v297
    %v997 = vunpack.c.l.b16 %v298
    %v998 = vunpack.c.h.b16 %v298
    %v999 = vunpack.c.l.b16 %v299
    %v1000 = vunpack.c.h.b16 %v299
    %v1001 = vunpack.c.l.b16 %v300
    %v1002 = vunpack.c.h.b16 %v300
    %v1003 = vunpack.c.l.b16 %v301
    %v1004 = vunpack.c.h.b16 %v301
    %v1005 = vunpack.c.l.b16 %v302
    %v1006 = vunpack.c.h.b16 %v302
    %v1007 = vunpack.c.l.b16 %v303
    %v1008 = vunpack.c.l.b16 %v304
    %v1009 = vunpack.c.h.b16 %v304
    %v1010 = vunpack.c.l.b16 %v305
    %v1011 = vunpack.c.h.b16 %v305
    %v1012 = vunpack.c.l.b16 %v306
    %v1013 = vunpack.c.h.b16 %v306
    %v1014 = vunpack.c.l.b16 %v307
    %v1015 = vunpack.c.h.b16 %v307
    %v1016 = vunpack.c.l.b16 %v308
    %v1017 = vunpack.c.h.b16 %v308
    %v1018 = vunpack.c.l.b16 %v309
    %v1019 = vunpack.c.h.b16 %v309
    %v1020 = vunpack.c.l.b16 %v310
    %v1021 = vunpack.c.h.b16 %v310
    %v1022 = vunpack.c.l.b16 %v311
    %v1023 = vunpack.c.h.b16 %v311
    %v1024 = vunpack.c.l.b16 %v312
    %v1025 = vunpack.c.h.b16 %v312
    %v1026 = vunpack.c.l.b16 %v313
    %v1027 = vunpack.c.h.b16 %v313
    %v1028 = vunpack.c.l.b16 %v314
    %v1029 = vunpack.c.h.b16 %v314
    %v1030 = vunpack.c.l.b16 %v315
    %v1031 = vunpack.c.h.b16 %v315
    %v1032 = vunpack.c.l.b16 %v316
    %v1033 = vunpack.c.h.b16 %v316
    %v1034 = vunpack.c.l.b16 %v317
    %v1035 = vunpack.c.h.b16 %v317
    %v1036 = vunpack.c.l.b16 %v318
    %v1037 = vunpack.c.h.b16 %v318
    %v1038 = vunpack.c.l.b16 %v319
    %v1039 = vunpack.c.h.b16 %v319
    %v1040 = vunpack.c.l.b16 %v320
    %v1041 = vunpack.c.h.b16 %v320
    %v1042 = vunpack.c.l.b16 %v321
    %v1043 = vunpack.c.h.b16 %v321
    %v1044 = vunpack.c.l.b16 %v322
    %v1045 = vunpack.c.l.b16 %v323
    %v1046 = vunpack.c.h.b16 %v323
    %v1047 = vunpack.c.l.b16 %v324
    %v1048 = vunpack.c.h.b16 %v324
    %v1049 = vunpack.c.l.b16 %v325
    %v1050 = vunpack.c.h.b16 %v325
    %v1051 = vunpack.c.l.b16 %v326
    %v1052 = vunpack.c.h.b16 %v326
    %v1053 = vunpack.c.l.b16 %v327
    %v1054 = vunpack.c.h.b16 %v327
    %v1055 = vunpack.c.l.b16 %v328
    %v1056 = vunpack.c.h.b16 %v328
    %v1057 = vunpack.c.l.b16 %v329
    %v1058 = vunpack.c.h.b16 %v329
    %v1059 = vunpack.c.l.b16 %v330
    %v1060 = vunpack.c.h.b16 %v330
    %v1061 = vunpack.c.l.b16 %v331
    %v1062 = vunpack.c.h.b16 %v331
    %v1063 = vunpack.c.l.b16 %v332
    %v1064 = vunpack.c.h.b16 %v332
    %v1065 = vunpack.c.l.b16 %v333
    %v1066 = vunpack.c.h.b16 %v333
    %v1067 = vunpack.c.l.b16 %v334
    %v1068 = vunpack.c.h.b16 %v334
    %v1069 = vunpack.c.l.b16 %v335
    %v1070 = vunpack.c.h.b16 %v335
    %v1071 = vunpack.c.l.b16 %v336
    %v1072 = vunpack.c.h.b16 %v336
    %v1073 = vunpack.c.l.b16 %v337
    %v1074 = vunpack.c.h.b16 %v337
    %v1075 = vunpack.c.l.b16 %v338
    %v1076 = vunpack.c.h.b16 %v338
    %v1077 = vunpack.c.l.b16 %v339
    %v1078 = vunpack.c.h.b16 %v339
    %v1079 = vunpack.c.l.b16 %v340
    %v1080 = vunpack.c.h.b16 %v340
    %v1081 = vunpack.c.l.b16 %v341
    %v1082 = vunpack.c.l.b16 %v342
    %v1083 = vunpack.c.h.b16 %v342
    %v1084 = vunpack.c.l.b16 %v343
    %v1085 = vunpack.c.h.b16 %v343
    %v1086 = vunpack.c.l.b16 %v344
    %v1087 = vunpack.c.h.b16 %v344
    %v1088 = vunpack.c.l.b16 %v345
    %v1089 = vunpack.c.h.b16 %v345
    %v1090 = vunpack.c.l.b16 %v346
    %v1091 = vunpack.c.h.b16 %v346
    %v1092 = vunpack.c.l.b16 %v347
    %v1093 = vunpack.c.h.b16 %v347
    %v1094 = vunpack.c.l.b16 %v348
    %v1095 = vunpack.c.h.b16 %v348
    %v1096 = vunpack.c.l.b16 %v349
    %v1097 = vunpack.c.h.b16 %v349
    %v1098 = vunpack.c.l.b16 %v350
    %v1099 = vunpack.c.h.b16 %v350
    %v1100 = vunpack.c.l.b16 %v351
    %v1101 = vunpack.c.h.b16 %v351
    %v1102 = vunpack.c.l.b16 %v352
    %v1103 = vunpack.c.h.b16 %v352
    %v1104 = vunpack.c.l.b16 %v353
    %v1105 = vunpack.c.h.b16 %v353
    %v1106 = vunpack.c.l.b16 %v354
    %v1107 = vunpack.c.h.b16 %v354
    %v1108 = vunpack.c.l.b16 %v355
    %v1109 = vunpack.c.h.b16 %v355
    %v1110 = vunpack.c.l.b16 %v356
    %v1111 = vunpack.c.h.b16 %v356
    %v1112 = vunpack.c.l.b16 %v357
    %v1113 = vunpack.c.h.b16 %v357
    %v1114 = vunpack.c.l.b16 %v358
    %v1115 = vunpack.c.h.b16 %v358
    %v1116 = vunpack.c.l.b16 %v359
    %v1117 = vunpack.c.h.b16 %v359
    %v1118 = vunpack.c.l.b16 %v360
    %v1119 = vunpack.c.l.b16 %v361
    %v1120 = vunpack.c.h.b16 %v361
    %v1121 = vunpack.c.l.b16 %v362
    %v1122 = vunpack.c.h.b16 %v362
    %v1123 = vunpack.c.l.b16 %v363
    %v1124 = vunpack.c.h.b16 %v363
    %v1125 = vunpack.c.l.b16 %v364
    %v1126 = vunpack.c.h.b16 %v364
    %v1127 = vunpack.c.l.b16 %v365
    %v1128 = vunpack.c.h.b16 %v365
    %v1129 = vunpack.c.l.b16 %v366
    %v1130 = vunpack.c.h.b16 %v366
    %v1131 = vunpack.c.l.b16 %v367
    %v1132 = vunpack.c.h.b16 %v367
    %v1133 = vunpack.c.l.b16 %v368
    %v1134 = vunpack.c.h.b16 %v368
    %v1135 = vunpack.c.l.b16 %v369
    %v1136 = vunpack.c.h.b16 %v369
    %v1137 = vunpack.c.l.b16 %v370
    %v1138 = vunpack.c.h.b16 %v370
    %v1139 = vunpack.c.l.b16 %v371
    %v1140 = vunpack.c.h.b16 %v371
    %v1141 = vunpack.c.l.b16 %v372
    %v1142 = vunpack.c.h.b16 %v372
    %v1143 = vunpack.c.l.b16 %v373
    %v1144 = vunpack.c.h.b16 %v373
    %v1145 = vunpack.c.l.b16 %v374
    %v1146 = vunpack.c.h.b16 %v374
    %v1147 = vunpack.c.l.b16 %v375
    %v1148 = vunpack.c.h.b16 %v375
    %v1149 = vunpack.c.l.b16 %v376
    %v1150 = vunpack.c.h.b16 %v376
    %v1151 = vunpack.c.l.b16 %v377
    %v1152 = vunpack.c.h.b16 %v377
    %v1153 = vunpack.c.l.b16 %v378
    %v1154 = vunpack.c.h.b16 %v378
    %v1155 = vunpack.c.l.b16 %v379
    %v1156 = vunpack.c.l.b16 %v380
    %v1157 = vunpack.c.h.b16 %v380
    %v1158 = vunpack.c.l.b16 %v381
    %v1159 = vunpack.c.h.b16 %v381
    %v1160 = vunpack.c.l.b16 %v382
    %v1161 = vunpack.c.h.b16 %v382
    %v1162 = vunpack.c.l.b16 %v383
    %v1163 = vunpack.c.h.b16 %v383
    %v1164 = vunpack.c.l.b16 %v384
    %v1165 = vunpack.c.h.b16 %v384
    %v1166 = vunpack.c.l.b16 %v385
    %v1167 = vunpack.c.h.b16 %v385
    %v1168 = vunpack.c.l.b16 %v386
    %v1169 = vunpack.c.h.b16 %v386
    %v1170 = vunpack.c.l.b16 %v387
    %v1171 = vunpack.c.h.b16 %v387
    %v1172 = vunpack.c.l.b16 %v388
    %v1173 = vunpack.c.h.b16 %v388
    %v1174 = vunpack.c.l.b16 %v389
    %v1175 = vunpack.c.h.b16 %v389
    %v1176 = vunpack.c.l.b16 %v390
    %v1177 = vunpack.c.h.b16 %v390
    %v1178 = vunpack.c.l.b16 %v391
    %v1179 = vunpack.c.h.b16 %v391
    %v1180 = vunpack.c.l.b16 %v392
    %v1181 = vunpack.c.h.b16 %v392
    %v1182 = vunpack.c.l.b16 %v393
    %v1183 = vunpack.c.h.b16 %v393
    %v1184 = vunpack.c.l.b16 %v394
    %v1185 = vunpack.c.h.b16 %v394
    %v1186 = vunpack.c.l.b16 %v395
    %v1187 = vunpack.c.h.b16 %v395
    %v1188 = vunpack.c.l.b16 %v396
    %v1189 = vunpack.c.h.b16 %v396
    %v1190 = vunpack.c.l.b16 %v397
    %v1191 = vunpack.c.h.b16 %v397
    %v1192 = vunpack.c.l.b16 %v398
    %v1193 = vunpack.c.l.b16 %v399
    %v1194 = vunpack.c.h.b16 %v399
    %v1195 = vunpack.c.l.b16 %v400
    %v1196 = vunpack.c.h.b16 %v400
    %v1197 = vunpack.c.l.b16 %v401
    %v1198 = vunpack.c.h.b16 %v401
    %v1199 = vunpack.c.l.b16 %v402
    %v1200 = vunpack.c.h.b16 %v402
    %v1201 = vunpack.c.l.b16 %v403
    %v1202 = vunpack.c.h.b16 %v403
    %v1203 = vunpack.c.l.b16 %v404
    %v1204 = vunpack.c.h.b16 %v404
    %v1205 = vunpack.c.l.b16 %v405
    %v1206 = vunpack.c.h.b16 %v405
    %v1207 = vunpack.c.l.b16 %v406
    %v1208 = vunpack.c.h.b16 %v406
    %v1209 = vunpack.c.l.b16 %v407
    %v1210 = vunpack.c.h.b16 %v407
    %v1211 = vunpack.c.l.b16 %v408
    %v1212 = vunpack.c.h.b16 %v408
    %v1213 = vunpack.c.l.b16 %v409
    %v1214 = vunpack.c.h.b16 %v409
    %v1215 = vunpack.c.l.b16 %v410
    %v1216 = vunpack.c.h.b16 %v410
    %v1217 = vunpack.c.l.b16 %v411
    %v1218 = vunpack.c.h.b16 %v411
    %v1219 = vunpack.c.l.b16 %v412
    %v1220 = vunpack.c.h.b16 %v412
    %v1221 = vunpack.c.l.b16 %v413
    %v1222 = vunpack.c.h.b16 %v413
    %v1223 = vunpack.c.l.b16 %v414
    %v1224 = vunpack.c.h.b16 %v414
    %v1225 = vunpack.c.l.b16 %v415
    %v1226 = vunpack.c.h.b16 %v415
    %v1227 = vunpack.c.l.b16 %v416
    %v1228 = vunpack.c.h.b16 %v416
    %v1229 = vunpack.c.l.b16 %v417
    %v1230 = vunpack.c.l.b16 %v418
    %v1231 = vunpack.c.h.b16 %v418
    %v1232 = vunpack.c.l.b16 %v419
    %v1233 = vunpack.c.h.b16 %v419
    %v1234 = vunpack.c.l.b16 %v420
    %v1235 = vunpack.c.h.b16 %v420
    %v1236 = vunpack.c.l.b16 %v421
    %v1237 = vunpack.c.h.b16 %v421
    %v1238 = vunpack.c.l.b16 %v422
    %v1239 = vunpack.c.h.b16 %v422
    %v1240 = vunpack.c.l.b16 %v423
    %v1241 = vunpack.c.h.b16 %v423
    %v1242 = vunpack.c.l.b16 %v424
    %v1243 = vunpack.c.h.b16 %v424
    %v1244 = vunpack.c.l.b16 %v425
    %v1245 = vunpack.c.h.b16 %v425
    %v1246 = vunpack.c.l.b16 %v426
    %v1247 = vunpack.c.h.b16 %v426
    %v1248 = vunpack.c.l.b16 %v427
    %v1249 = vunpack.c.h.b16 %v427
    %v1250 = vunpack.c.l.b16 %v428
    %v1251 = vunpack.c.h.b16 %v428
    %v1252 = vunpack.c.l.b16 %v429
    %v1253 = vunpack.c.h.b16 %v429
    %v1254 = vunpack.c.l.b16 %v430
    %v1255 = vunpack.c.h.b16 %v430
    %v1256 = vunpack.c.l.b16 %v431
    %v1257 = vunpack.c.h.b16 %v431
    %v1258 = vunpack.c.l.b16 %v432
    %v1259 = vunpack.c.h.b16 %v432
    %v1260 = vunpack.c.l.b16 %v433
    %v1261 = vunpack.c.h.b16 %v433
    %v1262 = vunpack.c.l.b16 %v434
    %v1263 = vunpack.c.h.b16 %v434
    %v1264 = vunpack.c.l.b16 %v435
    %v1265 = vunpack.c.h.b16 %v435
    %v1266 = vunpack.c.l.b16 %v436
    %v1267 = vunpack.c.l.b16 %v437
    %v1268 = vunpack.c.h.b16 %v437
    %v1269 = vunpack.c.l.b16 %v438
    %v1270 = vunpack.c.h.b16 %v438
    %v1271 = vunpack.c.l.b16 %v439
    %v1272 = vunpack.c.h.b16 %v439
    %v1273 = vunpack.c.l.b16 %v440
    %v1274 = vunpack.c.h.b16 %v440
    %v1275 = vunpack.c.l.b16 %v441
    %v1276 = vunpack.c.h.b16 %v441
    %v1277 = vunpack.c.l.b16 %v442
    %v1278 = vunpack.c.h.b16 %v442
    %v1279 = vunpack.c.l.b16 %v443
    %v1280 = vunpack.c.h.b16 %v443
    %v1281 = vunpack.c.l.b16 %v444
    %v1282 = vunpack.c.h.b16 %v444
    %v1283 = vunpack.c.l.b16 %v445
    %v1284 = vunpack.c.h.b16 %v445
    %v1285 = vunpack.c.l.b16 %v446
    %v1286 = vunpack.c.h.b16 %v446
    %v1287 = vunpack.c.l.b16 %v447
    %v1288 = vunpack.c.h.b16 %v447
    %v1289 = vunpack.c.l.b16 %v448
    %v1290 = vunpack.c.h.b16 %v448
    %v1291 = vunpack.c.l.b16 %v449
    %v1292 = vunpack.c.h.b16 %v449
    %v1293 = vunpack.c.l.b16 %v450
    %v1294 = vunpack.c.h.b16 %v450
    %v1295 = vunpack.c.l.b16 %v451
    %v1296 = vunpack.c.h.b16 %v451
    %v1297 = vunpack.c.l.b16 %v452
    %v1298 = vunpack.c.h.b16 %v452
    %v1299 = vunpack.c.l.b16 %v453
    %v1300 = vunpack.c.h.b16 %v453
    %v1301 = vunpack.c.l.b16 %v454
    %v1302 = vunpack.c.h.b16 %v454
    %v1303 = vunpack.c.l.b16 %v455
    %v1304 = vunpack.c.l.b16 %v456
    %v1305 = vunpack.c.h.b16 %v456
    %v1306 = vunpack.c.l.b16 %v457
    %v1307 = vunpack.c.h.b16 %v457
    %v1308 = vunpack.c.l.b16 %v458
    %v1309 = vunpack.c.h.b16 %v458
    %v1310 = vunpack.c.l.b16 %v459
    %v1311 = vunpack.c.h.b16 %v459
    %v1312 = vunpack.c.l.b16 %v460
    %v1313 = vunpack.c.h.b16 %v460
    %v1314 = vunpack.c.l.b16 %v461
    %v1315 = vunpack.c.h.b16 %v461
    %v1316 = vunpack.c.l.b16 %v462
    %v1317 = vunpack.c.h.b16 %v462
    %v1318 = vunpack.c.l.b16 %v463
    %v1319 = vunpack.c.h.b16 %v463
    %v1320 = vunpack.c.l.b16 %v464
    %v1321 = vunpack.c.h.b16 %v464
    %v1322 = vunpack.c.l.b16 %v465
    %v1323 = vunpack.c.h.b16 %v465
    %v1324 = vunpack.c.l.b16 %v466
    %v1325 = vunpack.c.h.b16 %v466
    %v1326 = vunpack.c.l.b16 %v467
    %v1327 = vunpack.c.h.b16 %v467
    %v1328 = vunpack.c.l.b16 %v468
    %v1329 = vunpack.c.h.b16 %v468
    %v1330 = vunpack.c.l.b16 %v469
    %v1331 = vunpack.c.h.b16 %v469
    %v1332 = vunpack.c.l.b16 %v470
    %v1333 = vunpack.c.h.b16 %v470
    %v1334 = vunpack.c.l.b16 %v471
    %v1335 = vunpack.c.h.b16 %v471
    %v1336 = vunpack.c.l.b16 %v472
    %v1337 = vunpack.c.h.b16 %v472
    %v1338 = vunpack.c.l.b16 %v473
    %v1339 = vunpack.c.h.b16 %v473
    %v1340 = vunpack.c.l.b16 %v474
    %v1341 = vunpack.c.l.b16 %v475
    %v1342 = vunpack.c.h.b16 %v475
    %v1343 = vunpack.c.l.b16 %v476
    %v1344 = vunpack.c.h.b16 %v476
    %v1345 = vunpack.c.l.b16 %v477
    %v1346 = vunpack.c.h.b16 %v477
    %v1347 = vunpack.c.l.b16 %v478
    %v1348 = vunpack.c.h.b16 %v478
    %v1349 = vunpack.c.l.b16 %v479
    %v1350 = vunpack.c.h.b16 %v479
    %v1351 = vunpack.c.l.b16 %v480
    %v1352 = vunpack.c.h.b16 %v480
    %v1353 = vunpack.c.l.b16 %v481
    %v1354 = vunpack.c.h.b16 %v481
    %v1355 = vunpack.c.l.b16 %v482
    %v1356 = vunpack.c.h.b16 %v482
    %v1357 = vunpack.c.l.b16 %v483
    %v1358 = vunpack.c.h.b16 %v483
    %v1359 = vunpack.c.l.b16 %v484
    %v1360 = vunpack.c.h.b16 %v484
    %v1361 = vunpack.c.l.b16 %v485
    %v1362 = vunpack.c.h.b16 %v485
    %v1363 = vunpack.c.l.b16 %v486
    %v1364 = vunpack.c.h.b16 %v486
    %v1365 = vunpack.c.l.b16 %v487
    %v1366 = vunpack.c.h.b16 %v487
    %v1367 = vunpack.c.l.b16 %v488
    %v1368 = vunpack.c.h.b16 %v488
    %v1369 = vunpack.c.l.b16 %v489
    %v1370 = vunpack.c.h.b16 %v489
    %v1371 = vunpack.c.l.b16 %v490
    %v1372 = vunpack.c.h.b16 %v490
    %v1373 = vunpack.c.l.b16 %v491
    %v1374 = vunpack.c.h.b16 %v491
    %v1375 = vunpack.c.l.b16 %v492
    %v1376 = vunpack.c.h.b16 %v492
    %v1377 = vunpack.c.l.b16 %v493
    %v1378 = vunpack.c.l.b16 %v494
    %v1379 = vunpack.c.h.b16 %v494
    %v1380 = vunpack.c.l.b16 %v495
    %v1381 = vunpack.c.h.b16 %v495
    %v1382 = vunpack.c.l.b16 %v496
    %v1383 = vunpack.c.h.b16 %v496
    %v1384 = vunpack.c.l.b16 %v497
    %v1385 = vunpack.c.h.b16 %v497
    %v1386 = vunpack.c.l.b16 %v498
    %v1387 = vunpack.c.h.b16 %v498
    %v1388 = vunpack.c.l.b16 %v499
    %v1389 = vunpack.c.h.b16 %v499
    %v1390 = vunpack.c.l.b16 %v500
    %v1391 = vunpack.c.h.b16 %v500
    %v1392 = vunpack.c.l.b16 %v501
    %v1393 = vunpack.c.h.b16 %v501
    %v1394 = vunpack.c.l.b16 %v502
    %v1395 = vunpack.c.h.b16 %v502
    %v1396 = vunpack.c.l.b16 %v503
    %v1397 = vunpack.c.h.b16 %v503
    %v1398 = vunpack.c.l.b16 %v504
    %v1399 = vunpack.c.h.b16 %v504
    %v1400 = vunpack.c.l.b16 %v505
    %v1401 = vunpack.c.h.b16 %v505
    %v1402 = vunpack.c.l.b16 %v506
    %v1403 = vunpack.c.h.b16 %v506
    %v1404 = vunpack.c.l.b16 %v507
    %v1405 = vunpack.c.h.b16 %v507
    %v1406 = vunpack.c.l.b16 %v508
    %v1407 = vunpack.c.h.b16 %v508
    %v1408 = vunpack.c.l.b16 %v509
    %v1409 = vunpack.c.h.b16 %v509
    %v1410 = vunpack.c.l.b16 %v510
    %v1411 = vunpack.c.h.b16 %v510
    %v1412 = vunpack.c.l.b16 %v511
    %v1413 = vunpack.c.h.b16 %v511
    %v1414 = vunpack.c.l.b16 %v512
    %v1415 = vpack.c.b16 %v860, %v823
    %v1416 = vpack.c.b16 %v861, %v824
    %v1417 = vpack.c.b16 %v862, %v825
    %v1418 = vpack.c.b16 %v863, %v826
    %v1419 = vpack.c.b16 %v864, %v827
    %v1420 = vpack.c.b16 %v865, %v828
    %v1421 = vpack.c.b16 %v866, %v829
    %v1422 = vpack.c.b16 %v867, %v830
    %v1423 = vpack.c.b16 %v868, %v831
    %v1424 = vpack.c.b16 %v869, %v832
    %v1425 = vpack.c.b16 %v870, %v833
    %v1426 = vpack.c.b16 %v871, %v834
    %v1427 = vpack.c.b16 %v872, %v835
    %v1428 = vpack.c.b16 %v873, %v836
    %v1429 = vpack.c.b16 %v874, %v837
    %v1430 = vpack.c.b16 %v875, %v838
    %v1431 = vpack.c.b16 %v876, %v839
    %v1432 = vpack.c.b16 %v877, %v840
    %v1433 = vpack.c.b16 %v878, %v841
    %v1434 = vpack.c.b16 %v879, %v842
    %v1435 = vpack.c.b16 %v880, %v843
    %v1436 = vpack.c.b16 %v881, %v844
    %v1437 = vpack.c.b16 %v882, %v845
    %v1438 = vpack.c.b16 %v883, %v846
    %v1439 = vpack.c.b16 %v884, %v847
    %v1440 = vpack.c.b16 %v885, %v848
    %v1441 = vpack.c.b16 %v886, %v849
    %v1442 = vpack.c.b16 %v887, %v850
    %v1443 = vpack.c.b16 %v888, %v851
    %v1444 = vpack.c.b16 %v889, %v852
    %v1445 = vpack.c.b16 %v890, %v853
    %v1446 = vpack.c.b16 %v891, %v854
    %v1447 = vpack.c.b16 %v892, %v855
    %v1448 = vpack.c.b16 %v893, %v856
    %v1449 = vpack.c.b16 %v894, %v857
    %v1450 = vpack.c.b16 %v895, %v858
    %v1451 = vpack.c.b16 %v896, %v859
    %v1452 = vpack.c.b16 %v934, %v897
    %v1453 = vpack.c.b16 %v935, %v898
    %v1454 = vpack.c.b16 %v936, %v899
    %v1455 = vpack.c.b16 %v937, %v900
    %v1456 = vpack.c.b16 %v938, %v901
    %v1457 = vpack.c.b16 %v939, %v902
    %v1458 = vpack.c.b16 %v940, %v903
    %v1459 = vpack.c.b16 %v941, %v904
    %v1460 = vpack.c.b16 %v942, %v905
    %v1461 = vpack.c.b16 %v943, %v906
    %v1462 = vpack.c.b16 %v944, %v907
    %v1463 = vpack.c.b16 %v945, %v908
    %v1464 = vpack.c.b16 %v946, %v909
    %v1465 = vpack.c.b16 %v947, %v910
    %v1466 = vpack.c.b16 %v948, %v911
    %v1467 = vpack.c.b16 %v949, %v912
    %v1468 = vpack.c.b16 %v950, %v913
    %v1469 = vpack.c.b16 %v951, %v914
    %v1470 = vpack.c.b16 %v952, %v915
    %v1471 = vpack.c.b16 %v953, %v916
    %v1472 = vpack.c.b16 %v954, %v917
    %v1473 = vpack.c.b16 %v955, %v918
    %v1474 = vpack.c.b16 %v956, %v919
    %v1475 = vpack.c.b16 %v957, %v920
    %v1476 = vpack.c.b16 %v958, %v921
    %v1477 = vpack.c.b16 %v959, %v922
    %v1478 = vpack.c.b16 %v960, %v923
    %v1479 = vpack.c.b16 %v961, %v924
    %v1480 = vpack.c.b16 %v962, %v925
    %v1481 = vpack.c.b16 %v963, %v926
    %v1482 = vpack.c.b16 %v964, %v927
    %v1483 = vpack.c.b16 %v965, %v928
    %v1484 = vpack.c.b16 %v966, %v929
    %v1485 = vpack.c.b16 %v967, %v930
    %v1486 = vpack.c.b16 %v968, %v931
    %v1487 = vpack.c.b16 %v969, %v932
    %v1488 = vpack.c.b16 %v970, %v933
    %v1489 = vpack.c.b16 %v1008, %v971
    %v1490 = vpack.c.b16 %v1009, %v972
    %v1491 = vpack.c.b16 %v1010, %v973
    %v1492 = vpack.c.b16 %v1011, %v974
    %v1493 = vpack.c.b16 %v1012, %v975
    %v1494 = vpack.c.b16 %v1013, %v976
    %v1495 = vpack.c.b16 %v1014, %v977
    %v1496 = vpack.c.b16 %v1015, %v978
    %v1497 = vpack.c.b16 %v1016, %v979
    %v1498 = vpack.c.b16 %v1017, %v980
    %v1499 = vpack.c.b16 %v1018, %v981
    %v1500 = vpack.c.b16 %v1019, %v982
    %v1501 = vpack.c.b16 %v1020, %v983
    %v1502 = vpack.c.b16 %v1021, %v984
    %v1503 = vpack.c.b16 %v1022, %v985
    %v1504 = vpack.c.b16 %v1023, %v986
    %v1505 = vpack.c.b16 %v1024, %v987
    %v1506 = vpack.c.b16 %v1025, %v988
    %v1507 = vpack.c.b16 %v1026, %v989
    %v1508 = vpack.c.b16 %v1027, %v990
    %v1509 = vpack.c.b16 %v1028, %v991
    %v1510 = vpack.c.b16 %v1029, %v992
    %v1511 = vpack.c.b16 %v1030, %v993
    %v1512 = vpack.c.b16 %v1031, %v994
    %v1513 = vpack.c.b16 %v1032, %v995
    %v1514 = vpack.c.b16 %v1033, %v996
    %v1515 = vpack.c.b16 %v1034, %v997
    %v1516 = vpack.c.b16 %v1035, %v998
    %v1517 = vpack.c.b16 %v1036, %v999
    %v1518 = vpack.c.b16 %v1037, %v1000
    %v1519 = vpack.c.b16 %v1038, %v1001
    %v1520 = vpack.c.b16 %v1039, %v1002
    %v1521 = vpack.c.b16 %v1040, %v1003
    %v1522 = vpack.c.b16 %v1041, %v1004
    %v1523 = vpack.c.b16 %v1042, %v1005
    %v1524 = vpack.c.b16 %v1043, %v1006
    %v1525 = vpack.c.b16 %v1044, %v1007
    %v1526 = vpack.c.b16 %v1082, %v1045
    %v1527 = vpack.c.b16 %v1083, %v1046
    %v1528 = vpack.c.b16 %v1084, %v1047
    %v1529 = vpack.c.b16 %v1085, %v1048
    %v1530 = vpack.c.b16 %v1086, %v1049
    %v1531 = vpack.c.b16 %v1087, %v1050
    %v1532 = vpack.c.b16 %v1088, %v1051
    %v1533 = vpack.c.b16 %v1089, %v1052
    %v1534 = vpack.c.b16 %v1090, %v1053
    %v1535 = vpack.c.b16 %v1091, %v1054
    %v1536 = vpack.c.b16 %v1092, %v1055
    %v1537 = vpack.c.b16 %v1093, %v1056
    %v1538 = vpack.c.b16 %v1094, %v1057
    %v1539 = vpack.c.b16 %v1095, %v1058
    %v1540 = vpack.c.b16 %v1096, %v1059
    %v1541 = vpack.c.b16 %v1097, %v1060
    %v1542 = vpack.c.b16 %v1098, %v1061
    %v1543 = vpack.c.b16 %v1099, %v1062
    %v1544 = vpack.c.b16 %v1100, %v1063
    %v1545 = vpack.c.b16 %v1101, %v1064
    %v1546 = vpack.c.b16 %v1102, %v1065
    %v1547 = vpack.c.b16 %v1103, %v1066
    %v1548 = vpack.c.b16 %v1104, %v1067
    %v1549 = vpack.c.b16 %v1105, %v1068
    %v1550 = vpack.c.b16 %v1106, %v1069
    %v1551 = vpack.c.b16 %v1107, %v1070
    %v1552 = vpack.c.b16 %v1108, %v1071
    %v1553 = vpack.c.b16 %v1109, %v1072
    %v1554 = vpack.c.b16 %v1110, %v1073
    %v1555 = vpack.c.b16 %v1111, %v1074
    %v1556 = vpack.c.b16 %v1112, %v1075
    %v1557 = vpack.c.b16 %v1113, %v1076
    %v1558 = vpack.c.b16 %v1114, %v1077
    %v1559 = vpack.c.b16 %v1115, %v1078
    %v1560 = vpack.c.b16 %v1116, %v1079
    %v1561 = vpack.c.b16 %v1117, %v1080
    %v1562 = vpack.c.b16 %v1118, %v1081
    %v1563 = vpack.c.b16 %v1156, %v1119
    %v1564 = vpack.c.b16 %v1157, %v1120
    %v1565 = vpack.c.b16 %v1158, %v1121
    %v1566 = vpack.c.b16 %v1159, %v1122
    %v1567 = vpack.c.b16 %v1160, %v1123
    %v1568 = vpack.c.b16 %v1161, %v1124
    %v1569 = vpack.c.b16 %v1162, %v1125
    %v1570 = vpack.c.b16 %v1163, %v1126
    %v1571 = vpack.c.b16 %v1164, %v1127
    %v1572 = vpack.c.b16 %v1165, %v1128
    %v1573 = vpack.c.b16 %v1166, %v1129
    %v1574 = vpack.c.b16 %v1167, %v1130
    %v1575 = vpack.c.b16 %v1168, %v1131
    %v1576 = vpack.c.b16 %v1169, %v1132
    %v1577 = vpack.c.b16 %v1170, %v1133
    %v1578 = vpack.c.b16 %v1171, %v1134
    %v1579 = vpack.c.b16 %v1172, %v1135
    %v1580 = vpack.c.b16 %v1173, %v1136
    %v1581 = vpack.c.b16 %v1174, %v1137
    %v1582 = vpack.c.b16 %v1175, %v1138
    %v1583 = vpack.c.b16 %v1176, %v1139
    %v1584 = vpack.c.b16 %v1177, %v1140
    %v1585 = vpack.c.b16 %v1178, %v1141
    %v1586 = vpack.c.b16 %v1179, %v1142
    %v1587 = vpack.c.b16 %v1180, %v1143
    %v1588 = vpack.c.b16 %v1181, %v1144
    %v1589 = vpack.c.b16 %v1182, %v1145
    %v1590 = vpack.c.b16 %v1183, %v1146
    %v1591 = vpack.c.b16 %v1184, %v1147
    %v1592 = vpack.c.b16 %v1185, %v1148
    %v1593 = vpack.c.b16 %v1186, %v1149
    %v1594 = vpack.c.b16 %v1187, %v1150
    %v1595 = vpack.c.b16 %v1188, %v1151
    %v1596 = vpack.c.b16 %v1189, %v1152
    %v1597 = vpack.c.b16 %v1190, %v1153
    %v1598 = vpack.c.b16 %v1191, %v1154
    %v1599 = vpack.c.b16 %v1192, %v1155
    %v1600 = vpack.c.b16 %v1230, %v1193
    %v1601 = vpack.c.b16 %v1231, %v1194
    %v1602 = vpack.c.b16 %v1232, %v1195
    %v1603 = vpack.c.b16 %v1233, %v1196
    %v1604 = vpack.c.b16 %v1234, %v1197
    %v1605 = vpack.c.b16 %v1235, %v1198
    %v1606 = vpack.c.b16 %v1236, %v1199
    %v1607 = vpack.c.b16 %v1237, %v1200
    %v1608 = vpack.c.b16 %v1238, %v1201
    %v1609 = vpack.c.b16 %v1239, %v1202
    %v1610 = vpack.c.b16 %v1240, %v1203
    %v1611 = vpack.c.b16 %v1241, %v1204
    %v1612 = vpack.c.b16 %v1242, %v1205
    %v1613 = vpack.c.b16 %v1243, %v1206
    %v1614 = vpack.c.b16 %v1244, %v1207
    %v1615 = vpack.c.b16 %v1245, %v1208
    %v1616 = vpack.c.b16 %v1246, %v1209
    %v1617 = vpack.c.b16 %v1247, %v1210
    %v1618 = vpack.c.b16 %v1248, %v1211
    %v1619 = vpack.c.b16 %v1249, %v1212
    %v1620 = vpack.c.b16 %v1250, %v1213
    %v1621 = vpack.c.b16 %v1251, %v1214
    %v1622 = vpack.c.b16 %v1252, %v1215
    %v1623 = vpack.c.b16 %v1253, %v1216
    %v1624 = vpack.c.b16 %v1254, %v1217
    %v1625 = vpack.c.b16 %v1255, %v1218
    %v1626 = vpack.c.b16 %v1256, %v1219
    %v1627 = vpack.c.b16 %v1257, %v1220
    %v1628 = vpack.c.b16 %v1258, %v1221
    %v1629 = vpack.c.b16 %v1259, %v1222
    %v1630 = vpack.c.b16 %v1260, %v1223
    %v1631 = vpack.c.b16 %v1261, %v1224
    %v1632 = vpack.c.b16 %v1262, %v1225
    %v1633 = vpack.c.b16 %v1263, %v1226
    %v1634 = vpack.c.b16 %v1264, %v1227
    %v1635 = vpack.c.b16 %v1265, %v1228
    %v1636 = vpack.c.b16 %v1266, %v1229
    %v1637 = vpack.c.b16 %v1304, %v1267
    %v1638 = vpack.c.b16 %v1305, %v1268
    %v1639 = vpack.c.b16 %v1306, %v1269
    %v1640 = vpack.c.b16 %v1307, %v1270
    %v1641 = vpack.c.b16 %v1308, %v1271
    %v1642 = vpack.c.b16 %v1309, %v1272
    %v1643 = vpack.c.b16 %v1310, %v1273
    %v1644 = vpack.c.b16 %v1311, %v1274
    %v1645 = vpack.c.b16 %v1312, %v1275
    %v1646 = vpack.c.b16 %v1313, %v1276
    %v1647 = vpack.c.b16 %v1314, %v1277
    %v1648 = vpack.c.b16 %v1315, %v1278
    %v1649 = vpack.c.b16 %v1316, %v1279
    %v1650 = vpack.c.b16 %v1317, %v1280
    %v1651 = vpack.c.b16 %v1318, %v1281
    %v1652 = vpack.c.b16 %v1319, %v1282
    %v1653 = vpack.c.b16 %v1320, %v1283
    %v1654 = vpack.c.b16 %v1321, %v1284
    %v1655 = vpack.c.b16 %v1322, %v1285
    %v1656 = vpack.c.b16 %v1323, %v1286
    %v1657 = vpack.c.b16 %v1324, %v1287
    %v1658 = vpack.c.b16 %v1325, %v1288
    %v1659 = vpack.c.b16 %v1326, %v1289
    %v1660 = vpack.c.b16 %v1327, %v1290
    %v1661 = vpack.c.b16 %v1328, %v1291
    %v1662 = vpack.c.b16 %v1329, %v1292
    %v1663 = vpack.c.b16 %v1330, %v1293
    %v1664 = vpack.c.b16 %v1331, %v1294
    %v1665 = vpack.c.b16 %v1332, %v1295
    %v1666 = vpack.c.b16 %v1333, %v1296
    %v1667 = vpack.c.b16 %v1334, %v1297
    %v1668 = vpack.c.b16 %v1335, %v1298
    %v1669 = vpack.c.b16 %v1336, %v1299
    %v1670 = vpack.c.b16 %v1337, %v1300
    %v1671 = vpack.c.b16 %v1338, %v1301
    %v1672 = vpack.c.b16 %v1339, %v1302
    %v1673 = vpack.c.b16 %v1340, %v1303
    %v1674 = vpack.c.b16 %v1378, %v1341
    %v1675 = vpack.c.b16 %v1379, %v1342
    %v1676 = vpack.c.b16 %v1380, %v1343
    %v1677 = vpack.c.b16 %v1381, %v1344
    %v1678 = vpack.c.b16 %v1382, %v1345
    %v1679 = vpack.c.b16 %v1383, %v1346
    %v1680 = vpack.c.b16 %v1384, %v1347
    %v1681 = vpack.c.b16 %v1385, %v1348
    %v1682 = vpack.c.b16 %v1386, %v1349
    %v1683 = vpack.c.b16 %v1387, %v1350
    %v1684 = vpack.c.b16 %v1388, %v1351
    %v1685 = vpack.c.b16 %v1389, %v1352
    %v1686 = vpack.c.b16 %v1390, %v1353
    %v1687 = vpack.c.b16 %v1391, %v1354
    %v1688 = vpack.c.b16 %v1392, %v1355
    %v1689 = vpack.c.b16 %v1393, %v1356
    %v1690 = vpack.c.b16 %v1394, %v1357
    %v1691 = vpack.c.b16 %v1395, %v1358
    %v1692 = vpack.c.b16 %v1396, %v1359
    %v1693 = vpack.c.b16 %v1397, %v1360
    %v1694 = vpack.c.b16 %v1398, %v1361
    %v1695 = vpack.c.b16 %v1399, %v1362
    %v1696 = vpack.c.b16 %v1400, %v1363
    %v1697 = vpack.c.b16 %v1401, %v1364
    %v1698 = vpack.c.b16 %v1402, %v1365
    %v1699 = vpack.c.b16 %v1403, %v1366
    %v1700 = vpack.c.b16 %v1404, %v1367
    %v1701 = vpack.c.b16 %v1405, %v1368
    %v1702 = vpack.c.b16 %v1406, %v1369
    %v1703 = vpack.c.b16 %v1407, %v1370
    %v1704 = vpack.c.b16 %v1408, %v1371
    %v1705 = vpack.c.b16 %v1409, %v1372
    %v1706 = vpack.c.b16 %v1410, %v1373
    %v1707 = vpack.c.b16 %v1411, %v1374
    %v1708 = vpack.c.b16 %v1412, %v1375
    %v1709 = vpack.c.b16 %v1413, %v1376
    %v1710 = vpack.c.b16 %v1414, %v1377
    %2007 = vmatprep.subr.bf16.mxu0 %v1675
    %2008 = vmatpush1.bf16.msra.mxu0 %v1674
    %2009 = vmatprep.subr.bf16.mxu0 %v1638
    %2010 = vmatpush1.bf16.msra.mxu0 %v1637
    %2011 = vmatprep.subr.bf16.mxu0 %v1601
    %2012 = vmatpush1.bf16.msra.mxu0 %v1600
    %2013 = vmatprep.subr.bf16.mxu0 %v1564
    %2014 = vmatpush1.bf16.msra.mxu0 %v1563
    %2015 = vmatprep.subr.bf16.mxu0 %v1527
    %2016 = vmatpush1.bf16.msra.mxu0 %v1526
    %2017 = vmatprep.subr.bf16.mxu0 %v1490
    %2018 = vmatpush1.bf16.msra.mxu0 %v1489
    %2019 = vmatprep.subr.bf16.mxu0 %v1453
    %2020 = vmatpush1.bf16.msra.mxu0 %v1452
    %2021 = vmatprep.subr.bf16.mxu0 %v1416
    %2022 = vmatpush1.bf16.msra.mxu0 %v1415
    %2023 = vmatprep.subr.bf16.mxu0 0
    %2024 = vmatpush2.bf16.msra.mxu0 0
    %2025 = vmatprep.subr.bf16.mxu0 0
    %2026 = vmatpush2.bf16.msra.mxu0 0
    %2027 = vmatprep.subr.bf16.mxu0 0
    %2028 = vmatpush2.bf16.msra.mxu0 0
    %2029 = vmatprep.subr.bf16.mxu0 0
    %2030 = vmatpush2.bf16.msra.mxu0 0
    %2031 = vmatprep.subr.bf16.mxu0 0
    %2032 = vmatpush2.bf16.msra.mxu0 0
    %2033 = vmatprep.subr.bf16.mxu0 0
    %2034 = vmatpush2.bf16.msra.mxu0 0
    %2035 = vmatprep.subr.bf16.mxu0 0
    %2036 = vmatpush2.bf16.msra.mxu0 0
    %2037 = vmatprep.subr.bf16.mxu0 0
    %2038 = vmatpush2.bf16.msra.mxu0 0
    %2039 = vmatprep.mubr.bf16.mxu0 0
    %2040 = vmatmul.mubr.bf16.gmra.mxu0 %v517
    %v2041 = vpop.f32.mrf.mxu0
    %v2042 = vadd.f32 0.0, %v2041
    %v2043 = vpop.f32.mrf.mxu0
    %v2044 = vadd.f32 0.0, %v2043
    %v2045 = vpop.f32.mrf.mxu0
    %v2046 = vadd.f32 0.0, %v2045
    %v2047 = vpop.f32.mrf.mxu0
    %v2048 = vadd.f32 0.0, %v2047
    %2049 = vdwg.mxu0
    %2050 = vmatprep.subr.bf16.mxu0 %v1677
    %2051 = vmatpush1.bf16.msra.mxu0 %v1676
    %2052 = vmatprep.subr.bf16.mxu0 %v1640
    %2053 = vmatpush1.bf16.msra.mxu0 %v1639
    %2054 = vmatprep.subr.bf16.mxu0 %v1603
    %2055 = vmatpush1.bf16.msra.mxu0 %v1602
    %2056 = vmatprep.subr.bf16.mxu0 %v1566
    %2057 = vmatpush1.bf16.msra.mxu0 %v1565
    %2058 = vmatprep.subr.bf16.mxu0 %v1529
    %2059 = vmatpush1.bf16.msra.mxu0 %v1528
    %2060 = vmatprep.subr.bf16.mxu0 %v1492
    %2061 = vmatpush1.bf16.msra.mxu0 %v1491
    %2062 = vmatprep.subr.bf16.mxu0 %v1455
    %2063 = vmatpush1.bf16.msra.mxu0 %v1454
    %2064 = vmatprep.subr.bf16.mxu0 %v1418
    %2065 = vmatpush1.bf16.msra.mxu0 %v1417
    %2066 = vmatprep.subr.bf16.mxu0 0
    %2067 = vmatpush2.bf16.msra.mxu0 0
    %2068 = vmatprep.subr.bf16.mxu0 0
    %2069 = vmatpush2.bf16.msra.mxu0 0
    %2070 = vmatprep.subr.bf16.mxu0 0
    %2071 = vmatpush2.bf16.msra.mxu0 0
    %2072 = vmatprep.subr.bf16.mxu0 0
    %2073 = vmatpush2.bf16.msra.mxu0 0
    %2074 = vmatprep.subr.bf16.mxu0 0
    %2075 = vmatpush2.bf16.msra.mxu0 0
    %2076 = vmatprep.subr.bf16.mxu0 0
    %2077 = vmatpush2.bf16.msra.mxu0 0
    %2078 = vmatprep.subr.bf16.mxu0 0
    %2079 = vmatpush2.bf16.msra.mxu0 0
    %2080 = vmatprep.subr.bf16.mxu0 0
    %2081 = vmatpush2.bf16.msra.mxu0 0
    %2082 = vmatprep.mubr.bf16.mxu0 0
    %2083 = vmatmul.mubr.bf16.gmra.mxu0 %v517
    %v2084 = vpop.f32.mrf.mxu0
    %v2085 = vadd.f32 0.0, %v2084
    %v2086 = vpop.f32.mrf.mxu0
    %v2087 = vadd.f32 0.0, %v2086
    %v2088 = vpop.f32.mrf.mxu0
    %v2089 = vadd.f32 0.0, %v2088
    %v2090 = vpop.f32.mrf.mxu0
    %v2091 = vadd.f32 0.0, %v2090
    %2092 = vdwg.mxu0
    %2093 = vmatprep.subr.bf16.mxu0 %v1679
    %2094 = vmatpush1.bf16.msra.mxu0 %v1678
    %2095 = vmatprep.subr.bf16.mxu0 %v1642
    %2096 = vmatpush1.bf16.msra.mxu0 %v1641
    %2097 = vmatprep.subr.bf16.mxu0 %v1605
    %2098 = vmatpush1.bf16.msra.mxu0 %v1604
    %2099 = vmatprep.subr.bf16.mxu0 %v1568
    %2100 = vmatpush1.bf16.msra.mxu0 %v1567
    %2101 = vmatprep.subr.bf16.mxu0 %v1531
    %2102 = vmatpush1.bf16.msra.mxu0 %v1530
    %2103 = vmatprep.subr.bf16.mxu0 %v1494
    %2104 = vmatpush1.bf16.msra.mxu0 %v1493
    %2105 = vmatprep.subr.bf16.mxu0 %v1457
    %2106 = vmatpush1.bf16.msra.mxu0 %v1456
    %2107 = vmatprep.subr.bf16.mxu0 %v1420
    %2108 = vmatpush1.bf16.msra.mxu0 %v1419
    %2109 = vmatprep.subr.bf16.mxu0 0
    %2110 = vmatpush2.bf16.msra.mxu0 0
    %2111 = vmatprep.subr.bf16.mxu0 0
    %2112 = vmatpush2.bf16.msra.mxu0 0
    %2113 = vmatprep.subr.bf16.mxu0 0
    %2114 = vmatpush2.bf16.msra.mxu0 0
    %2115 = vmatprep.subr.bf16.mxu0 0
    %2116 = vmatpush2.bf16.msra.mxu0 0
    %2117 = vmatprep.subr.bf16.mxu0 0
    %2118 = vmatpush2.bf16.msra.mxu0 0
    %2119 = vmatprep.subr.bf16.mxu0 0
    %2120 = vmatpush2.bf16.msra.mxu0 0
    %2121 = vmatprep.subr.bf16.mxu0 0
    %2122 = vmatpush2.bf16.msra.mxu0 0
    %2123 = vmatprep.subr.bf16.mxu0 0
    %2124 = vmatpush2.bf16.msra.mxu0 0
    %2125 = vmatprep.mubr.bf16.mxu0 0
    %2126 = vmatmul.mubr.bf16.gmra.mxu0 %v517
    %v2127 = vpop.f32.mrf.mxu0
    %v2128 = vadd.f32 0.0, %v2127
    %v2129 = vpop.f32.mrf.mxu0
    %v2130 = vadd.f32 0.0, %v2129
    %v2131 = vpop.f32.mrf.mxu0
    %v2132 = vadd.f32 0.0, %v2131
    %v2133 = vpop.f32.mrf.mxu0
    %v2134 = vadd.f32 0.0, %v2133
    %2135 = vdwg.mxu0
    %2136 = vmatprep.subr.bf16.mxu0 %v1681
    %2137 = vmatpush1.bf16.msra.mxu0 %v1680
    %2138 = vmatprep.subr.bf16.mxu0 %v1644
    %2139 = vmatpush1.bf16.msra.mxu0 %v1643
    %2140 = vmatprep.subr.bf16.mxu0 %v1607
    %2141 = vmatpush1.bf16.msra.mxu0 %v1606
    %2142 = vmatprep.subr.bf16.mxu0 %v1570
    %2143 = vmatpush1.bf16.msra.mxu0 %v1569
    %2144 = vmatprep.subr.bf16.mxu0 %v1533
    %2145 = vmatpush1.bf16.msra.mxu0 %v1532
    %2146 = vmatprep.subr.bf16.mxu0 %v1496
    %2147 = vmatpush1.bf16.msra.mxu0 %v1495
    %2148 = vmatprep.subr.bf16.mxu0 %v1459
    %2149 = vmatpush1.bf16.msra.mxu0 %v1458
    %2150 = vmatprep.subr.bf16.mxu0 %v1422
    %2151 = vmatpush1.bf16.msra.mxu0 %v1421
    %2152 = vmatprep.subr.bf16.mxu0 0
    %2153 = vmatpush2.bf16.msra.mxu0 0
    %2154 = vmatprep.subr.bf16.mxu0 0
    %2155 = vmatpush2.bf16.msra.mxu0 0
    %2156 = vmatprep.subr.bf16.mxu0 0
    %2157 = vmatpush2.bf16.msra.mxu0 0
    %2158 = vmatprep.subr.bf16.mxu0 0
    %2159 = vmatpush2.bf16.msra.mxu0 0
    %2160 = vmatprep.subr.bf16.mxu0 0
    %2161 = vmatpush2.bf16.msra.mxu0 0
    %2162 = vmatprep.subr.bf16.mxu0 0
    %2163 = vmatpush2.bf16.msra.mxu0 0
    %2164 = vmatprep.subr.bf16.mxu0 0
    %2165 = vmatpush2.bf16.msra.mxu0 0
    %2166 = vmatprep.subr.bf16.mxu0 0
    %2167 = vmatpush2.bf16.msra.mxu0 0
    %2168 = vmatprep.mubr.bf16.mxu0 0
    %2169 = vmatmul.mubr.bf16.gmra.mxu0 %v517
    %v2170 = vpop.f32.mrf.mxu0
    %v2171 = vadd.f32 0.0, %v2170
    %v2172 = vpop.f32.mrf.mxu0
    %v2173 = vadd.f32 0.0, %v2172
    %v2174 = vpop.f32.mrf.mxu0
    %v2175 = vadd.f32 0.0, %v2174
    %v2176 = vpop.f32.mrf.mxu0
    %v2177 = vadd.f32 0.0, %v2176
    %2178 = vdwg.mxu0
    %2179 = vmatprep.subr.bf16.mxu0 %v1683
    %2180 = vmatpush1.bf16.msra.mxu0 %v1682
    %2181 = vmatprep.subr.bf16.mxu0 %v1646
    %2182 = vmatpush1.bf16.msra.mxu0 %v1645
    %2183 = vmatprep.subr.bf16.mxu0 %v1609
    %2184 = vmatpush1.bf16.msra.mxu0 %v1608
    %2185 = vmatprep.subr.bf16.mxu0 %v1572
    %2186 = vmatpush1.bf16.msra.mxu0 %v1571
    %2187 = vmatprep.subr.bf16.mxu0 %v1535
    %2188 = vmatpush1.bf16.msra.mxu0 %v1534
    %2189 = vmatprep.subr.bf16.mxu0 %v1498
    %2190 = vmatpush1.bf16.msra.mxu0 %v1497
    %2191 = vmatprep.subr.bf16.mxu0 %v1461
    %2192 = vmatpush1.bf16.msra.mxu0 %v1460
    %2193 = vmatprep.subr.bf16.mxu0 %v1424
    %2194 = vmatpush1.bf16.msra.mxu0 %v1423
    %2195 = vmatprep.subr.bf16.mxu0 0
    %2196 = vmatpush2.bf16.msra.mxu0 0
    %2197 = vmatprep.subr.bf16.mxu0 0
    %2198 = vmatpush2.bf16.msra.mxu0 0
    %2199 = vmatprep.subr.bf16.mxu0 0
    %2200 = vmatpush2.bf16.msra.mxu0 0
    %2201 = vmatprep.subr.bf16.mxu0 0
    %2202 = vmatpush2.bf16.msra.mxu0 0
    %2203 = vmatprep.subr.bf16.mxu0 0
    %2204 = vmatpush2.bf16.msra.mxu0 0
    %2205 = vmatprep.subr.bf16.mxu0 0
    %2206 = vmatpush2.bf16.msra.mxu0 0
    %2207 = vmatprep.subr.bf16.mxu0 0
    %2208 = vmatpush2.bf16.msra.mxu0 0
    %2209 = vmatprep.subr.bf16.mxu0 0
    %2210 = vmatpush2.bf16.msra.mxu0 0
    %2211 = vmatprep.mubr.bf16.mxu0 0
    %2212 = vmatmul.mubr.bf16.gmra.mxu0 %v517
    %v2213 = vpop.f32.mrf.mxu0
    %v2214 = vadd.f32 0.0, %v2213
    %v2215 = vpop.f32.mrf.mxu0
    %v2216 = vadd.f32 0.0, %v2215
    %v2217 = vpop.f32.mrf.mxu0
    %v2218 = vadd.f32 0.0, %v2217
    %v2219 = vpop.f32.mrf.mxu0
    %v2220 = vadd.f32 0.0, %v2219
    %2221 = vdwg.mxu0
    %2222 = vmatprep.subr.bf16.mxu0 %v1685
    %2223 = vmatpush1.bf16.msra.mxu0 %v1684
    %2224 = vmatprep.subr.bf16.mxu0 %v1648
    %2225 = vmatpush1.bf16.msra.mxu0 %v1647
    %2226 = vmatprep.subr.bf16.mxu0 %v1611
    %2227 = vmatpush1.bf16.msra.mxu0 %v1610
    %2228 = vmatprep.subr.bf16.mxu0 %v1574
    %2229 = vmatpush1.bf16.msra.mxu0 %v1573
    %2230 = vmatprep.subr.bf16.mxu0 %v1537
    %2231 = vmatpush1.bf16.msra.mxu0 %v1536
    %2232 = vmatprep.subr.bf16.mxu0 %v1500
    %2233 = vmatpush1.bf16.msra.mxu0 %v1499
    %2234 = vmatprep.subr.bf16.mxu0 %v1463
    %2235 = vmatpush1.bf16.msra.mxu0 %v1462
    %2236 = vmatprep.subr.bf16.mxu0 %v1426
    %2237 = vmatpush1.bf16.msra.mxu0 %v1425
    %2238 = vmatprep.subr.bf16.mxu0 0
    %2239 = vmatpush2.bf16.msra.mxu0 0
    %2240 = vmatprep.subr.bf16.mxu0 0
    %2241 = vmatpush2.bf16.msra.mxu0 0
    %2242 = vmatprep.subr.bf16.mxu0 0
    %2243 = vmatpush2.bf16.msra.mxu0 0
    %2244 = vmatprep.subr.bf16.mxu0 0
    %2245 = vmatpush2.bf16.msra.mxu0 0
    %2246 = vmatprep.subr.bf16.mxu0 0
    %2247 = vmatpush2.bf16.msra.mxu0 0
    %2248 = vmatprep.subr.bf16.mxu0 0
    %2249 = vmatpush2.bf16.msra.mxu0 0
    %2250 = vmatprep.subr.bf16.mxu0 0
    %2251 = vmatpush2.bf16.msra.mxu0 0
    %2252 = vmatprep.subr.bf16.mxu0 0
    %2253 = vmatpush2.bf16.msra.mxu0 0
    %2254 = vmatprep.mubr.bf16.mxu0 0
    %2255 = vmatmul.mubr.bf16.gmra.mxu0 %v517
    %v2256 = vpop.f32.mrf.mxu0
    %v2257 = vadd.f32 0.0, %v2256
    %v2258 = vpop.f32.mrf.mxu0
    %v2259 = vadd.f32 0.0, %v2258
    %v2260 = vpop.f32.mrf.mxu0
    %v2261 = vadd.f32 0.0, %v2260
    %v2262 = vpop.f32.mrf.mxu0
    %v2263 = vadd.f32 0.0, %v2262
    %2264 = vdwg.mxu0
    %2265 = vmatprep.subr.bf16.mxu0 %v1687
    %2266 = vmatpush1.bf16.msra.mxu0 %v1686
    %2267 = vmatprep.subr.bf16.mxu0 %v1650
    %2268 = vmatpush1.bf16.msra.mxu0 %v1649
    %2269 = vmatprep.subr.bf16.mxu0 %v1613
    %2270 = vmatpush1.bf16.msra.mxu0 %v1612
    %2271 = vmatprep.subr.bf16.mxu0 %v1576
    %2272 = vmatpush1.bf16.msra.mxu0 %v1575
    %2273 = vmatprep.subr.bf16.mxu0 %v1539
    %2274 = vmatpush1.bf16.msra.mxu0 %v1538
    %2275 = vmatprep.subr.bf16.mxu0 %v1502
    %2276 = vmatpush1.bf16.msra.mxu0 %v1501
    %2277 = vmatprep.subr.bf16.mxu0 %v1465
    %2278 = vmatpush1.bf16.msra.mxu0 %v1464
    %2279 = vmatprep.subr.bf16.mxu0 %v1428
    %2280 = vmatpush1.bf16.msra.mxu0 %v1427
    %2281 = vmatprep.subr.bf16.mxu0 0
    %2282 = vmatpush2.bf16.msra.mxu0 0
    %2283 = vmatprep.subr.bf16.mxu0 0
    %2284 = vmatpush2.bf16.msra.mxu0 0
    %2285 = vmatprep.subr.bf16.mxu0 0
    %2286 = vmatpush2.bf16.msra.mxu0 0
    %2287 = vmatprep.subr.bf16.mxu0 0
    %2288 = vmatpush2.bf16.msra.mxu0 0
    %2289 = vmatprep.subr.bf16.mxu0 0
    %2290 = vmatpush2.bf16.msra.mxu0 0
    %2291 = vmatprep.subr.bf16.mxu0 0
    %2292 = vmatpush2.bf16.msra.mxu0 0
    %2293 = vmatprep.subr.bf16.mxu0 0
    %2294 = vmatpush2.bf16.msra.mxu0 0
    %2295 = vmatprep.subr.bf16.mxu0 0
    %2296 = vmatpush2.bf16.msra.mxu0 0
    %2297 = vmatprep.mubr.bf16.mxu0 0
    %2298 = vmatmul.mubr.bf16.gmra.mxu0 %v517
    %v2299 = vpop.f32.mrf.mxu0
    %v2300 = vadd.f32 0.0, %v2299
    %v2301 = vpop.f32.mrf.mxu0
    %v2302 = vadd.f32 0.0, %v2301
    %v2303 = vpop.f32.mrf.mxu0
    %v2304 = vadd.f32 0.0, %v2303
    %v2305 = vpop.f32.mrf.mxu0
    %v2306 = vadd.f32 0.0, %v2305
    %2307 = vdwg.mxu0
    %2308 = vmatprep.subr.bf16.mxu0 %v1689
    %2309 = vmatpush1.bf16.msra.mxu0 %v1688
    %2310 = vmatprep.subr.bf16.mxu0 %v1652
    %2311 = vmatpush1.bf16.msra.mxu0 %v1651
    %2312 = vmatprep.subr.bf16.mxu0 %v1615
    %2313 = vmatpush1.bf16.msra.mxu0 %v1614
    %2314 = vmatprep.subr.bf16.mxu0 %v1578
    %2315 = vmatpush1.bf16.msra.mxu0 %v1577
    %2316 = vmatprep.subr.bf16.mxu0 %v1541
    %2317 = vmatpush1.bf16.msra.mxu0 %v1540
    %2318 = vmatprep.subr.bf16.mxu0 %v1504
    %2319 = vmatpush1.bf16.msra.mxu0 %v1503
    %2320 = vmatprep.subr.bf16.mxu0 %v1467
    %2321 = vmatpush1.bf16.msra.mxu0 %v1466
    %2322 = vmatprep.subr.bf16.mxu0 %v1430
    %2323 = vmatpush1.bf16.msra.mxu0 %v1429
    %2324 = vmatprep.subr.bf16.mxu0 0
    %2325 = vmatpush2.bf16.msra.mxu0 0
    %2326 = vmatprep.subr.bf16.mxu0 0
    %2327 = vmatpush2.bf16.msra.mxu0 0
    %2328 = vmatprep.subr.bf16.mxu0 0
    %2329 = vmatpush2.bf16.msra.mxu0 0
    %2330 = vmatprep.subr.bf16.mxu0 0
    %2331 = vmatpush2.bf16.msra.mxu0 0
    %2332 = vmatprep.subr.bf16.mxu0 0
    %2333 = vmatpush2.bf16.msra.mxu0 0
    %2334 = vmatprep.subr.bf16.mxu0 0
    %2335 = vmatpush2.bf16.msra.mxu0 0
    %2336 = vmatprep.subr.bf16.mxu0 0
    %2337 = vmatpush2.bf16.msra.mxu0 0
    %2338 = vmatprep.subr.bf16.mxu0 0
    %2339 = vmatpush2.bf16.msra.mxu0 0
    %2340 = vmatprep.mubr.bf16.mxu0 0
    %2341 = vmatmul.mubr.bf16.gmra.mxu0 %v517
    %v2342 = vpop.f32.mrf.mxu0
    %v2343 = vadd.f32 0.0, %v2342
    %v2344 = vpop.f32.mrf.mxu0
    %v2345 = vadd.f32 0.0, %v2344
    %v2346 = vpop.f32.mrf.mxu0
    %v2347 = vadd.f32 0.0, %v2346
    %v2348 = vpop.f32.mrf.mxu0
    %v2349 = vadd.f32 0.0, %v2348
    %2350 = vdwg.mxu0
    %2351 = vmatprep.subr.bf16.mxu0 %v1691
    %2352 = vmatpush1.bf16.msra.mxu0 %v1690
    %2353 = vmatprep.subr.bf16.mxu0 %v1654
    %2354 = vmatpush1.bf16.msra.mxu0 %v1653
    %2355 = vmatprep.subr.bf16.mxu0 %v1617
    %2356 = vmatpush1.bf16.msra.mxu0 %v1616
    %2357 = vmatprep.subr.bf16.mxu0 %v1580
    %2358 = vmatpush1.bf16.msra.mxu0 %v1579
    %2359 = vmatprep.subr.bf16.mxu0 %v1543
    %2360 = vmatpush1.bf16.msra.mxu0 %v1542
    %2361 = vmatprep.subr.bf16.mxu0 %v1506
    %2362 = vmatpush1.bf16.msra.mxu0 %v1505
    %2363 = vmatprep.subr.bf16.mxu0 %v1469
    %2364 = vmatpush1.bf16.msra.mxu0 %v1468
    %2365 = vmatprep.subr.bf16.mxu0 %v1432
    %2366 = vmatpush1.bf16.msra.mxu0 %v1431
    %2367 = vmatprep.subr.bf16.mxu0 0
    %2368 = vmatpush2.bf16.msra.mxu0 0
    %2369 = vmatprep.subr.bf16.mxu0 0
    %2370 = vmatpush2.bf16.msra.mxu0 0
    %2371 = vmatprep.subr.bf16.mxu0 0
    %2372 = vmatpush2.bf16.msra.mxu0 0
    %2373 = vmatprep.subr.bf16.mxu0 0
    %2374 = vmatpush2.bf16.msra.mxu0 0
    %2375 = vmatprep.subr.bf16.mxu0 0
    %2376 = vmatpush2.bf16.msra.mxu0 0
    %2377 = vmatprep.subr.bf16.mxu0 0
    %2378 = vmatpush2.bf16.msra.mxu0 0
    %2379 = vmatprep.subr.bf16.mxu0 0
    %2380 = vmatpush2.bf16.msra.mxu0 0
    %2381 = vmatprep.subr.bf16.mxu0 0
    %2382 = vmatpush2.bf16.msra.mxu0 0
    %2383 = vmatprep.mubr.bf16.mxu0 0
    %2384 = vmatmul.mubr.bf16.gmra.mxu0 %v517
    %v2385 = vpop.f32.mrf.mxu0
    %v2386 = vadd.f32 0.0, %v2385
    %v2387 = vpop.f32.mrf.mxu0
    %v2388 = vadd.f32 0.0, %v2387
    %v2389 = vpop.f32.mrf.mxu0
    %v2390 = vadd.f32 0.0, %v2389
    %v2391 = vpop.f32.mrf.mxu0
    %v2392 = vadd.f32 0.0, %v2391
    %2393 = vdwg.mxu0
    %2394 = vmatprep.subr.bf16.mxu0 %v1693
    %2395 = vmatpush1.bf16.msra.mxu0 %v1692
    %2396 = vmatprep.subr.bf16.mxu0 %v1656
    %2397 = vmatpush1.bf16.msra.mxu0 %v1655
    %2398 = vmatprep.subr.bf16.mxu0 %v1619
    %2399 = vmatpush1.bf16.msra.mxu0 %v1618
    %2400 = vmatprep.subr.bf16.mxu0 %v1582
    %2401 = vmatpush1.bf16.msra.mxu0 %v1581
    %2402 = vmatprep.subr.bf16.mxu0 %v1545
    %2403 = vmatpush1.bf16.msra.mxu0 %v1544
    %2404 = vmatprep.subr.bf16.mxu0 %v1508
    %2405 = vmatpush1.bf16.msra.mxu0 %v1507
    %2406 = vmatprep.subr.bf16.mxu0 %v1471
    %2407 = vmatpush1.bf16.msra.mxu0 %v1470
    %2408 = vmatprep.subr.bf16.mxu0 %v1434
    %2409 = vmatpush1.bf16.msra.mxu0 %v1433
    %2410 = vmatprep.subr.bf16.mxu0 0
    %2411 = vmatpush2.bf16.msra.mxu0 0
    %2412 = vmatprep.subr.bf16.mxu0 0
    %2413 = vmatpush2.bf16.msra.mxu0 0
    %2414 = vmatprep.subr.bf16.mxu0 0
    %2415 = vmatpush2.bf16.msra.mxu0 0
    %2416 = vmatprep.subr.bf16.mxu0 0
    %2417 = vmatpush2.bf16.msra.mxu0 0
    %2418 = vmatprep.subr.bf16.mxu0 0
    %2419 = vmatpush2.bf16.msra.mxu0 0
    %2420 = vmatprep.subr.bf16.mxu0 0
    %2421 = vmatpush2.bf16.msra.mxu0 0
    %2422 = vmatprep.subr.bf16.mxu0 0
    %2423 = vmatpush2.bf16.msra.mxu0 0
    %2424 = vmatprep.subr.bf16.mxu0 0
    %2425 = vmatpush2.bf16.msra.mxu0 0
    %2426 = vmatprep.mubr.bf16.mxu0 0
    %2427 = vmatmul.mubr.bf16.gmra.mxu0 %v517
    %v2428 = vpop.f32.mrf.mxu0
    %v2429 = vadd.f32 0.0, %v2428
    %v2430 = vpop.f32.mrf.mxu0
    %v2431 = vadd.f32 0.0, %v2430
    %v2432 = vpop.f32.mrf.mxu0
    %v2433 = vadd.f32 0.0, %v2432
    %v2434 = vpop.f32.mrf.mxu0
    %v2435 = vadd.f32 0.0, %v2434
    %2436 = vdwg.mxu0
    %2437 = vmatprep.subr.bf16.mxu0 %v1695
    %2438 = vmatpush1.bf16.msra.mxu0 %v1694
    %2439 = vmatprep.subr.bf16.mxu0 %v1658
    %2440 = vmatpush1.bf16.msra.mxu0 %v1657
    %2441 = vmatprep.subr.bf16.mxu0 %v1621
    %2442 = vmatpush1.bf16.msra.mxu0 %v1620
    %2443 = vmatprep.subr.bf16.mxu0 %v1584
    %2444 = vmatpush1.bf16.msra.mxu0 %v1583
    %2445 = vmatprep.subr.bf16.mxu0 %v1547
    %2446 = vmatpush1.bf16.msra.mxu0 %v1546
    %2447 = vmatprep.subr.bf16.mxu0 %v1510
    %2448 = vmatpush1.bf16.msra.mxu0 %v1509
    %2449 = vmatprep.subr.bf16.mxu0 %v1473
    %2450 = vmatpush1.bf16.msra.mxu0 %v1472
    %2451 = vmatprep.subr.bf16.mxu0 %v1436
    %2452 = vmatpush1.bf16.msra.mxu0 %v1435
    %2453 = vmatprep.subr.bf16.mxu0 0
    %2454 = vmatpush2.bf16.msra.mxu0 0
    %2455 = vmatprep.subr.bf16.mxu0 0
    %2456 = vmatpush2.bf16.msra.mxu0 0
    %2457 = vmatprep.subr.bf16.mxu0 0
    %2458 = vmatpush2.bf16.msra.mxu0 0
    %2459 = vmatprep.subr.bf16.mxu0 0
    %2460 = vmatpush2.bf16.msra.mxu0 0
    %2461 = vmatprep.subr.bf16.mxu0 0
    %2462 = vmatpush2.bf16.msra.mxu0 0
    %2463 = vmatprep.subr.bf16.mxu0 0
    %2464 = vmatpush2.bf16.msra.mxu0 0
    %2465 = vmatprep.subr.bf16.mxu0 0
    %2466 = vmatpush2.bf16.msra.mxu0 0
    %2467 = vmatprep.subr.bf16.mxu0 0
    %2468 = vmatpush2.bf16.msra.mxu0 0
    %2469 = vmatprep.mubr.bf16.mxu0 0
    %2470 = vmatmul.mubr.bf16.gmra.mxu0 %v517
    %v2471 = vpop.f32.mrf.mxu0
    %v2472 = vadd.f32 0.0, %v2471
    %v2473 = vpop.f32.mrf.mxu0
    %v2474 = vadd.f32 0.0, %v2473
    %v2475 = vpop.f32.mrf.mxu0
    %v2476 = vadd.f32 0.0, %v2475
    %v2477 = vpop.f32.mrf.mxu0
    %v2478 = vadd.f32 0.0, %v2477
    %2479 = vdwg.mxu0
    %2480 = vmatprep.subr.bf16.mxu0 %v1697
    %2481 = vmatpush1.bf16.msra.mxu0 %v1696
    %2482 = vmatprep.subr.bf16.mxu0 %v1660
    %2483 = vmatpush1.bf16.msra.mxu0 %v1659
    %2484 = vmatprep.subr.bf16.mxu0 %v1623
    %2485 = vmatpush1.bf16.msra.mxu0 %v1622
    %2486 = vmatprep.subr.bf16.mxu0 %v1586
    %2487 = vmatpush1.bf16.msra.mxu0 %v1585
    %2488 = vmatprep.subr.bf16.mxu0 %v1549
    %2489 = vmatpush1.bf16.msra.mxu0 %v1548
    %2490 = vmatprep.subr.bf16.mxu0 %v1512
    %2491 = vmatpush1.bf16.msra.mxu0 %v1511
    %2492 = vmatprep.subr.bf16.mxu0 %v1475
    %2493 = vmatpush1.bf16.msra.mxu0 %v1474
    %2494 = vmatprep.subr.bf16.mxu0 %v1438
    %2495 = vmatpush1.bf16.msra.mxu0 %v1437
    %2496 = vmatprep.subr.bf16.mxu0 0
    %2497 = vmatpush2.bf16.msra.mxu0 0
    %2498 = vmatprep.subr.bf16.mxu0 0
    %2499 = vmatpush2.bf16.msra.mxu0 0
    %2500 = vmatprep.subr.bf16.mxu0 0
    %2501 = vmatpush2.bf16.msra.mxu0 0
    %2502 = vmatprep.subr.bf16.mxu0 0
    %2503 = vmatpush2.bf16.msra.mxu0 0
    %2504 = vmatprep.subr.bf16.mxu0 0
    %2505 = vmatpush2.bf16.msra.mxu0 0
    %2506 = vmatprep.subr.bf16.mxu0 0
    %2507 = vmatpush2.bf16.msra.mxu0 0
    %2508 = vmatprep.subr.bf16.mxu0 0
    %2509 = vmatpush2.bf16.msra.mxu0 0
    %2510 = vmatprep.subr.bf16.mxu0 0
    %2511 = vmatpush2.bf16.msra.mxu0 0
    %2512 = vmatprep.mubr.bf16.mxu0 0
    %2513 = vmatmul.mubr.bf16.gmra.mxu0 %v517
    %v2514 = vpop.f32.mrf.mxu0
    %v2515 = vadd.f32 0.0, %v2514
    %v2516 = vpop.f32.mrf.mxu0
    %v2517 = vadd.f32 0.0, %v2516
    %v2518 = vpop.f32.mrf.mxu0
    %v2519 = vadd.f32 0.0, %v2518
    %v2520 = vpop.f32.mrf.mxu0
    %v2521 = vadd.f32 0.0, %v2520
    %2522 = vdwg.mxu0
    %2523 = vmatprep.subr.bf16.mxu0 %v1699
    %2524 = vmatpush1.bf16.msra.mxu0 %v1698
    %2525 = vmatprep.subr.bf16.mxu0 %v1662
    %2526 = vmatpush1.bf16.msra.mxu0 %v1661
    %2527 = vmatprep.subr.bf16.mxu0 %v1625
    %2528 = vmatpush1.bf16.msra.mxu0 %v1624
    %2529 = vmatprep.subr.bf16.mxu0 %v1588
    %2530 = vmatpush1.bf16.msra.mxu0 %v1587
    %2531 = vmatprep.subr.bf16.mxu0 %v1551
    %2532 = vmatpush1.bf16.msra.mxu0 %v1550
    %2533 = vmatprep.subr.bf16.mxu0 %v1514
    %2534 = vmatpush1.bf16.msra.mxu0 %v1513
    %2535 = vmatprep.subr.bf16.mxu0 %v1477
    %2536 = vmatpush1.bf16.msra.mxu0 %v1476
    %2537 = vmatprep.subr.bf16.mxu0 %v1440
    %2538 = vmatpush1.bf16.msra.mxu0 %v1439
    %2539 = vmatprep.subr.bf16.mxu0 0
    %2540 = vmatpush2.bf16.msra.mxu0 0
    %2541 = vmatprep.subr.bf16.mxu0 0
    %2542 = vmatpush2.bf16.msra.mxu0 0
    %2543 = vmatprep.subr.bf16.mxu0 0
    %2544 = vmatpush2.bf16.msra.mxu0 0
    %2545 = vmatprep.subr.bf16.mxu0 0
    %2546 = vmatpush2.bf16.msra.mxu0 0
    %2547 = vmatprep.subr.bf16.mxu0 0
    %2548 = vmatpush2.bf16.msra.mxu0 0
    %2549 = vmatprep.subr.bf16.mxu0 0
    %2550 = vmatpush2.bf16.msra.mxu0 0
    %2551 = vmatprep.subr.bf16.mxu0 0
    %2552 = vmatpush2.bf16.msra.mxu0 0
    %2553 = vmatprep.subr.bf16.mxu0 0
    %2554 = vmatpush2.bf16.msra.mxu0 0
    %2555 = vmatprep.mubr.bf16.mxu0 0
    %2556 = vmatmul.mubr.bf16.gmra.mxu0 %v517
    %v2557 = vpop.f32.mrf.mxu0
    %v2558 = vadd.f32 0.0, %v2557
    %v2559 = vpop.f32.mrf.mxu0
    %v2560 = vadd.f32 0.0, %v2559
    %v2561 = vpop.f32.mrf.mxu0
    %v2562 = vadd.f32 0.0, %v2561
    %v2563 = vpop.f32.mrf.mxu0
    %v2564 = vadd.f32 0.0, %v2563
    %2565 = vdwg.mxu0
    %2566 = vmatprep.subr.bf16.mxu0 %v1701
    %2567 = vmatpush1.bf16.msra.mxu0 %v1700
    %2568 = vmatprep.subr.bf16.mxu0 %v1664
    %2569 = vmatpush1.bf16.msra.mxu0 %v1663
    %2570 = vmatprep.subr.bf16.mxu0 %v1627
    %2571 = vmatpush1.bf16.msra.mxu0 %v1626
    %2572 = vmatprep.subr.bf16.mxu0 %v1590
    %2573 = vmatpush1.bf16.msra.mxu0 %v1589
    %2574 = vmatprep.subr.bf16.mxu0 %v1553
    %2575 = vmatpush1.bf16.msra.mxu0 %v1552
    %2576 = vmatprep.subr.bf16.mxu0 %v1516
    %2577 = vmatpush1.bf16.msra.mxu0 %v1515
    %2578 = vmatprep.subr.bf16.mxu0 %v1479
    %2579 = vmatpush1.bf16.msra.mxu0 %v1478
    %2580 = vmatprep.subr.bf16.mxu0 %v1442
    %2581 = vmatpush1.bf16.msra.mxu0 %v1441
    %2582 = vmatprep.subr.bf16.mxu0 0
    %2583 = vmatpush2.bf16.msra.mxu0 0
    %2584 = vmatprep.subr.bf16.mxu0 0
    %2585 = vmatpush2.bf16.msra.mxu0 0
    %2586 = vmatprep.subr.bf16.mxu0 0
    %2587 = vmatpush2.bf16.msra.mxu0 0
    %2588 = vmatprep.subr.bf16.mxu0 0
    %2589 = vmatpush2.bf16.msra.mxu0 0
    %2590 = vmatprep.subr.bf16.mxu0 0
    %2591 = vmatpush2.bf16.msra.mxu0 0
    %2592 = vmatprep.subr.bf16.mxu0 0
    %2593 = vmatpush2.bf16.msra.mxu0 0
    %2594 = vmatprep.subr.bf16.mxu0 0
    %2595 = vmatpush2.bf16.msra.mxu0 0
    %2596 = vmatprep.subr.bf16.mxu0 0
    %2597 = vmatpush2.bf16.msra.mxu0 0
    %2598 = vmatprep.mubr.bf16.mxu0 0
    %2599 = vmatmul.mubr.bf16.gmra.mxu0 %v517
    %v2600 = vpop.f32.mrf.mxu0
    %v2601 = vadd.f32 0.0, %v2600
    %v2602 = vpop.f32.mrf.mxu0
    %v2603 = vadd.f32 0.0, %v2602
    %v2604 = vpop.f32.mrf.mxu0
    %v2605 = vadd.f32 0.0, %v2604
    %v2606 = vpop.f32.mrf.mxu0
    %v2607 = vadd.f32 0.0, %v2606
    %2608 = vdwg.mxu0
    %2609 = vmatprep.subr.bf16.mxu0 %v1703
    %2610 = vmatpush1.bf16.msra.mxu0 %v1702
    %2611 = vmatprep.subr.bf16.mxu0 %v1666
    %2612 = vmatpush1.bf16.msra.mxu0 %v1665
    %2613 = vmatprep.subr.bf16.mxu0 %v1629
    %2614 = vmatpush1.bf16.msra.mxu0 %v1628
    %2615 = vmatprep.subr.bf16.mxu0 %v1592
    %2616 = vmatpush1.bf16.msra.mxu0 %v1591
    %2617 = vmatprep.subr.bf16.mxu0 %v1555
    %2618 = vmatpush1.bf16.msra.mxu0 %v1554
    %2619 = vmatprep.subr.bf16.mxu0 %v1518
    %2620 = vmatpush1.bf16.msra.mxu0 %v1517
    %2621 = vmatprep.subr.bf16.mxu0 %v1481
    %2622 = vmatpush1.bf16.msra.mxu0 %v1480
    %2623 = vmatprep.subr.bf16.mxu0 %v1444
    %2624 = vmatpush1.bf16.msra.mxu0 %v1443
    %2625 = vmatprep.subr.bf16.mxu0 0
    %2626 = vmatpush2.bf16.msra.mxu0 0
    %2627 = vmatprep.subr.bf16.mxu0 0
    %2628 = vmatpush2.bf16.msra.mxu0 0
    %2629 = vmatprep.subr.bf16.mxu0 0
    %2630 = vmatpush2.bf16.msra.mxu0 0
    %2631 = vmatprep.subr.bf16.mxu0 0
    %2632 = vmatpush2.bf16.msra.mxu0 0
    %2633 = vmatprep.subr.bf16.mxu0 0
    %2634 = vmatpush2.bf16.msra.mxu0 0
    %2635 = vmatprep.subr.bf16.mxu0 0
    %2636 = vmatpush2.bf16.msra.mxu0 0
    %2637 = vmatprep.subr.bf16.mxu0 0
    %2638 = vmatpush2.bf16.msra.mxu0 0
    %2639 = vmatprep.subr.bf16.mxu0 0
    %2640 = vmatpush2.bf16.msra.mxu0 0
    %2641 = vmatprep.mubr.bf16.mxu0 0
    %2642 = vmatmul.mubr.bf16.gmra.mxu0 %v517
    %v2643 = vpop.f32.mrf.mxu0
    %v2644 = vadd.f32 0.0, %v2643
    %v2645 = vpop.f32.mrf.mxu0
    %v2646 = vadd.f32 0.0, %v2645
    %v2647 = vpop.f32.mrf.mxu0
    %v2648 = vadd.f32 0.0, %v2647
    %v2649 = vpop.f32.mrf.mxu0
    %v2650 = vadd.f32 0.0, %v2649
    %2651 = vdwg.mxu0
    %2652 = vmatprep.subr.bf16.mxu0 %v1705
    %2653 = vmatpush1.bf16.msra.mxu0 %v1704
    %2654 = vmatprep.subr.bf16.mxu0 %v1668
    %2655 = vmatpush1.bf16.msra.mxu0 %v1667
    %2656 = vmatprep.subr.bf16.mxu0 %v1631
    %2657 = vmatpush1.bf16.msra.mxu0 %v1630
    %2658 = vmatprep.subr.bf16.mxu0 %v1594
    %2659 = vmatpush1.bf16.msra.mxu0 %v1593
    %2660 = vmatprep.subr.bf16.mxu0 %v1557
    %2661 = vmatpush1.bf16.msra.mxu0 %v1556
    %2662 = vmatprep.subr.bf16.mxu0 %v1520
    %2663 = vmatpush1.bf16.msra.mxu0 %v1519
    %2664 = vmatprep.subr.bf16.mxu0 %v1483
    %2665 = vmatpush1.bf16.msra.mxu0 %v1482
    %2666 = vmatprep.subr.bf16.mxu0 %v1446
    %2667 = vmatpush1.bf16.msra.mxu0 %v1445
    %2668 = vmatprep.subr.bf16.mxu0 0
    %2669 = vmatpush2.bf16.msra.mxu0 0
    %2670 = vmatprep.subr.bf16.mxu0 0
    %2671 = vmatpush2.bf16.msra.mxu0 0
    %2672 = vmatprep.subr.bf16.mxu0 0
    %2673 = vmatpush2.bf16.msra.mxu0 0
    %2674 = vmatprep.subr.bf16.mxu0 0
    %2675 = vmatpush2.bf16.msra.mxu0 0
    %2676 = vmatprep.subr.bf16.mxu0 0
    %2677 = vmatpush2.bf16.msra.mxu0 0
    %2678 = vmatprep.subr.bf16.mxu0 0
    %2679 = vmatpush2.bf16.msra.mxu0 0
    %2680 = vmatprep.subr.bf16.mxu0 0
    %2681 = vmatpush2.bf16.msra.mxu0 0
    %2682 = vmatprep.subr.bf16.mxu0 0
    %2683 = vmatpush2.bf16.msra.mxu0 0
    %2684 = vmatprep.mubr.bf16.mxu0 0
    %2685 = vmatmul.mubr.bf16.gmra.mxu0 %v517
    %v2686 = vpop.f32.mrf.mxu0
    %v2687 = vadd.f32 0.0, %v2686
    %v2688 = vpop.f32.mrf.mxu0
    %v2689 = vadd.f32 0.0, %v2688
    %v2690 = vpop.f32.mrf.mxu0
    %v2691 = vadd.f32 0.0, %v2690
    %v2692 = vpop.f32.mrf.mxu0
    %v2693 = vadd.f32 0.0, %v2692
    %2694 = vdwg.mxu0
    %2695 = vmatprep.subr.bf16.mxu0 %v1707
    %2696 = vmatpush1.bf16.msra.mxu0 %v1706
    %2697 = vmatprep.subr.bf16.mxu0 %v1670
    %2698 = vmatpush1.bf16.msra.mxu0 %v1669
    %2699 = vmatprep.subr.bf16.mxu0 %v1633
    %2700 = vmatpush1.bf16.msra.mxu0 %v1632
    %2701 = vmatprep.subr.bf16.mxu0 %v1596
    %2702 = vmatpush1.bf16.msra.mxu0 %v1595
    %2703 = vmatprep.subr.bf16.mxu0 %v1559
    %2704 = vmatpush1.bf16.msra.mxu0 %v1558
    %2705 = vmatprep.subr.bf16.mxu0 %v1522
    %2706 = vmatpush1.bf16.msra.mxu0 %v1521
    %2707 = vmatprep.subr.bf16.mxu0 %v1485
    %2708 = vmatpush1.bf16.msra.mxu0 %v1484
    %2709 = vmatprep.subr.bf16.mxu0 %v1448
    %2710 = vmatpush1.bf16.msra.mxu0 %v1447
    %2711 = vmatprep.subr.bf16.mxu0 0
    %2712 = vmatpush2.bf16.msra.mxu0 0
    %2713 = vmatprep.subr.bf16.mxu0 0
    %2714 = vmatpush2.bf16.msra.mxu0 0
    %2715 = vmatprep.subr.bf16.mxu0 0
    %2716 = vmatpush2.bf16.msra.mxu0 0
    %2717 = vmatprep.subr.bf16.mxu0 0
    %2718 = vmatpush2.bf16.msra.mxu0 0
    %2719 = vmatprep.subr.bf16.mxu0 0
    %2720 = vmatpush2.bf16.msra.mxu0 0
    %2721 = vmatprep.subr.bf16.mxu0 0
    %2722 = vmatpush2.bf16.msra.mxu0 0
    %2723 = vmatprep.subr.bf16.mxu0 0
    %2724 = vmatpush2.bf16.msra.mxu0 0
    %2725 = vmatprep.subr.bf16.mxu0 0
    %2726 = vmatpush2.bf16.msra.mxu0 0
    %2727 = vmatprep.mubr.bf16.mxu0 0
    %2728 = vmatmul.mubr.bf16.gmra.mxu0 %v517
    %v2729 = vpop.f32.mrf.mxu0
    %v2730 = vadd.f32 0.0, %v2729
    %v2731 = vpop.f32.mrf.mxu0
    %v2732 = vadd.f32 0.0, %v2731
    %v2733 = vpop.f32.mrf.mxu0
    %v2734 = vadd.f32 0.0, %v2733
    %v2735 = vpop.f32.mrf.mxu0
    %v2736 = vadd.f32 0.0, %v2735
    %2737 = vdwg.mxu0
    %2738 = vmatprep.subr.bf16.mxu0 %v1709
    %2739 = vmatpush1.bf16.msra.mxu0 %v1708
    %2740 = vmatprep.subr.bf16.mxu0 %v1672
    %2741 = vmatpush1.bf16.msra.mxu0 %v1671
    %2742 = vmatprep.subr.bf16.mxu0 %v1635
    %2743 = vmatpush1.bf16.msra.mxu0 %v1634
    %2744 = vmatprep.subr.bf16.mxu0 %v1598
    %2745 = vmatpush1.bf16.msra.mxu0 %v1597
    %2746 = vmatprep.subr.bf16.mxu0 %v1561
    %2747 = vmatpush1.bf16.msra.mxu0 %v1560
    %2748 = vmatprep.subr.bf16.mxu0 %v1524
    %2749 = vmatpush1.bf16.msra.mxu0 %v1523
    %2750 = vmatprep.subr.bf16.mxu0 %v1487
    %2751 = vmatpush1.bf16.msra.mxu0 %v1486
    %2752 = vmatprep.subr.bf16.mxu0 %v1450
    %2753 = vmatpush1.bf16.msra.mxu0 %v1449
    %2754 = vmatprep.subr.bf16.mxu0 0
    %2755 = vmatpush2.bf16.msra.mxu0 0
    %2756 = vmatprep.subr.bf16.mxu0 0
    %2757 = vmatpush2.bf16.msra.mxu0 0
    %2758 = vmatprep.subr.bf16.mxu0 0
    %2759 = vmatpush2.bf16.msra.mxu0 0
    %2760 = vmatprep.subr.bf16.mxu0 0
    %2761 = vmatpush2.bf16.msra.mxu0 0
    %2762 = vmatprep.subr.bf16.mxu0 0
    %2763 = vmatpush2.bf16.msra.mxu0 0
    %2764 = vmatprep.subr.bf16.mxu0 0
    %2765 = vmatpush2.bf16.msra.mxu0 0
    %2766 = vmatprep.subr.bf16.mxu0 0
    %2767 = vmatpush2.bf16.msra.mxu0 0
    %2768 = vmatprep.subr.bf16.mxu0 0
    %2769 = vmatpush2.bf16.msra.mxu0 0
    %2770 = vmatprep.mubr.bf16.mxu0 0
    %2771 = vmatmul.mubr.bf16.gmra.mxu0 %v517
    %v2772 = vpop.f32.mrf.mxu0
    %v2773 = vadd.f32 0.0, %v2772
    %v2774 = vpop.f32.mrf.mxu0
    %v2775 = vadd.f32 0.0, %v2774
    %v2776 = vpop.f32.mrf.mxu0
    %v2777 = vadd.f32 0.0, %v2776
    %v2778 = vpop.f32.mrf.mxu0
    %v2779 = vadd.f32 0.0, %v2778
    %2780 = vdwg.mxu0
    %2781 = vmatprep.subr.bf16.mxu0 0
    %2782 = vmatpush1.bf16.msra.mxu0 %v1710
    %2783 = vmatprep.subr.bf16.mxu0 0
    %2784 = vmatpush1.bf16.msra.mxu0 %v1673
    %2785 = vmatprep.subr.bf16.mxu0 0
    %2786 = vmatpush1.bf16.msra.mxu0 %v1636
    %2787 = vmatprep.subr.bf16.mxu0 0
    %2788 = vmatpush1.bf16.msra.mxu0 %v1599
    %2789 = vmatprep.subr.bf16.mxu0 0
    %2790 = vmatpush1.bf16.msra.mxu0 %v1562
    %2791 = vmatprep.subr.bf16.mxu0 0
    %2792 = vmatpush1.bf16.msra.mxu0 %v1525
    %2793 = vmatprep.subr.bf16.mxu0 0
    %2794 = vmatpush1.bf16.msra.mxu0 %v1488
    %2795 = vmatprep.subr.bf16.mxu0 0
    %2796 = vmatpush1.bf16.msra.mxu0 %v1451
    %2797 = vmatprep.subr.bf16.mxu0 0
    %2798 = vmatpush2.bf16.msra.mxu0 0
    %2799 = vmatprep.subr.bf16.mxu0 0
    %2800 = vmatpush2.bf16.msra.mxu0 0
    %2801 = vmatprep.subr.bf16.mxu0 0
    %2802 = vmatpush2.bf16.msra.mxu0 0
    %2803 = vmatprep.subr.bf16.mxu0 0
    %2804 = vmatpush2.bf16.msra.mxu0 0
    %2805 = vmatprep.subr.bf16.mxu0 0
    %2806 = vmatpush2.bf16.msra.mxu0 0
    %2807 = vmatprep.subr.bf16.mxu0 0
    %2808 = vmatpush2.bf16.msra.mxu0 0
    %2809 = vmatprep.subr.bf16.mxu0 0
    %2810 = vmatpush2.bf16.msra.mxu0 0
    %2811 = vmatprep.subr.bf16.mxu0 0
    %2812 = vmatpush2.bf16.msra.mxu0 0
    %2813 = vmatprep.mubr.bf16.mxu0 0
    %2814 = vmatmul.mubr.bf16.gmra.mxu0 %v517
    %v2815 = vpop.f32.mrf.mxu0
    %v2816 = vadd.f32 0.0, %v2815
    %v2817 = vpop.f32.mrf.mxu0
    %v2818 = vpop.f32.mrf.mxu0
    %v2819 = vadd.f32 0.0, %v2818
    %v2820 = vpop.f32.mrf.mxu0
    %2821 = vdwg.mxu0
    %v2822 = vadd.f32 %v133, %v2042
    %v2823 = vadd.f32 %v134, %v2044
    %v2824 = vadd.f32 %v135, %v2085
    %v2825 = vadd.f32 %v136, %v2087
    %v2826 = vadd.f32 %v137, %v2128
    %v2827 = vadd.f32 %v138, %v2130
    %v2828 = vadd.f32 %v139, %v2171
    %v2829 = vadd.f32 %v140, %v2173
    %v2830 = vadd.f32 %v141, %v2214
    %v2831 = vadd.f32 %v142, %v2216
    %v2832 = vadd.f32 %v143, %v2257
    %v2833 = vadd.f32 %v144, %v2259
    %v2834 = vadd.f32 %v145, %v2300
    %v2835 = vadd.f32 %v146, %v2302
    %v2836 = vadd.f32 %v147, %v2343
    %v2837 = vadd.f32 %v148, %v2345
    %v2838 = vadd.f32 %v149, %v2386
    %v2839 = vadd.f32 %v150, %v2388
    %v2840 = vadd.f32 %v151, %v2429
    %v2841 = vadd.f32 %v152, %v2431
    %v2842 = vadd.f32 %v153, %v2472
    %v2843 = vadd.f32 %v154, %v2474
    %v2844 = vadd.f32 %v155, %v2515
    %v2845 = vadd.f32 %v156, %v2517
    %v2846 = vadd.f32 %v157, %v2558
    %v2847 = vadd.f32 %v158, %v2560
    %v2848 = vadd.f32 %v159, %v2601
    %v2849 = vadd.f32 %v160, %v2603
    %v2850 = vadd.f32 %v161, %v2644
    %v2851 = vadd.f32 %v162, %v2646
    %v2852 = vadd.f32 %v163, %v2687
    %v2853 = vadd.f32 %v164, %v2689
    %v2854 = vadd.f32 %v165, %v2730
    %v2855 = vadd.f32 %v166, %v2732
    %v2856 = vadd.f32 %v167, %v2773
    %v2857 = vadd.f32 %v168, %v2775
    %v2858 = vadd.f32 %v169, %v2816
    %v2859 = vadd.f32 %v170, %v2046
    %v2860 = vadd.f32 %v171, %v2048
    %v2861 = vadd.f32 %v172, %v2089
    %v2862 = vadd.f32 %v173, %v2091
    %v2863 = vadd.f32 %v174, %v2132
    %v2864 = vadd.f32 %v175, %v2134
    %v2865 = vadd.f32 %v176, %v2175
    %v2866 = vadd.f32 %v177, %v2177
    %v2867 = vadd.f32 %v178, %v2218
    %v2868 = vadd.f32 %v179, %v2220
    %v2869 = vadd.f32 %v180, %v2261
    %v2870 = vadd.f32 %v181, %v2263
    %v2871 = vadd.f32 %v182, %v2304
    %v2872 = vadd.f32 %v183, %v2306
    %v2873 = vadd.f32 %v184, %v2347
    %v2874 = vadd.f32 %v185, %v2349
    %v2875 = vadd.f32 %v186, %v2390
    %v2876 = vadd.f32 %v187, %v2392
    %v2877 = vadd.f32 %v188, %v2433
    %v2878 = vadd.f32 %v189, %v2435
    %v2879 = vadd.f32 %v190, %v2476
    %v2880 = vadd.f32 %v191, %v2478
    %v2881 = vadd.f32 %v192, %v2519
    %v2882 = vadd.f32 %v193, %v2521
    %v2883 = vadd.f32 %v194, %v2562
    %v2884 = vadd.f32 %v195, %v2564
    %v2885 = vadd.f32 %v196, %v2605
    %v2886 = vadd.f32 %v197, %v2607
    %v2887 = vadd.f32 %v198, %v2648
    %v2888 = vadd.f32 %v199, %v2650
    %v2889 = vadd.f32 %v200, %v2691
    %v2890 = vadd.f32 %v201, %v2693
    %v2891 = vadd.f32 %v202, %v2734
    %v2892 = vadd.f32 %v203, %v2736
    %v2893 = vadd.f32 %v204, %v2777
    %v2894 = vadd.f32 %v205, %v2779
    %v2895 = vadd.f32 %v206, %v2819
    %2896 = vst [vmem:[#allocation2] sm:$0xff] %v2822
    %2897 = vst [vmem:[#allocation2 + $0x8] sm:$0xff] %v2823
    %2898 = vst [vmem:[#allocation2 + $0x10] sm:$0xff] %v2824
    %2899 = vst [vmem:[#allocation2 + $0x18] sm:$0xff] %v2825
    %2900 = vst [vmem:[#allocation2 + $0x20] sm:$0xff] %v2826
    %2901 = vst [vmem:[#allocation2 + $0x28] sm:$0xff] %v2827
    %2902 = vst [vmem:[#allocation2 + $0x30] sm:$0xff] %v2828
    %2903 = vst [vmem:[#allocation2 + $0x38] sm:$0xff] %v2829
    %2904 = vst [vmem:[#allocation2 + $0x40] sm:$0xff] %v2830
    %2905 = vst [vmem:[#allocation2 + $0x48] sm:$0xff] %v2831
    %2906 = vst [vmem:[#allocation2 + $0x50] sm:$0xff] %v2832
    %2907 = vst [vmem:[#allocation2 + $0x58] sm:$0xff] %v2833
    %2908 = vst [vmem:[#allocation2 + $0x60] sm:$0xff] %v2834
    %2909 = vst [vmem:[#allocation2 + $0x68] sm:$0xff] %v2835
    %2910 = vst [vmem:[#allocation2 + $0x70] sm:$0xff] %v2836
    %2911 = vst [vmem:[#allocation2 + $0x78] sm:$0xff] %v2837
    %2912 = vst [vmem:[#allocation2 + $0x80] sm:$0xff] %v2838
    %2913 = vst [vmem:[#allocation2 + $0x88] sm:$0xff] %v2839
    %2914 = vst [vmem:[#allocation2 + $0x90] sm:$0xff] %v2840
    %2915 = vst [vmem:[#allocation2 + $0x98] sm:$0xff] %v2841
    %2916 = vst [vmem:[#allocation2 + $0xa0] sm:$0xff] %v2842
    %2917 = vst [vmem:[#allocation2 + $0xa8] sm:$0xff] %v2843
    %2918 = vst [vmem:[#allocation2 + $0xb0] sm:$0xff] %v2844
    %2919 = vst [vmem:[#allocation2 + $0xb8] sm:$0xff] %v2845
    %2920 = vst [vmem:[#allocation2 + $0xc0] sm:$0xff] %v2846
    %2921 = vst [vmem:[#allocation2 + $0xc8] sm:$0xff] %v2847
    %2922 = vst [vmem:[#allocation2 + $0xd0] sm:$0xff] %v2848
    %2923 = vst [vmem:[#allocation2 + $0xd8] sm:$0xff] %v2849
    %2924 = vst [vmem:[#allocation2 + $0xe0] sm:$0xff] %v2850
    %2925 = vst [vmem:[#allocation2 + $0xe8] sm:$0xff] %v2851
    %2926 = vst [vmem:[#allocation2 + $0xf0] sm:$0xff] %v2852
    %2927 = vst [vmem:[#allocation2 + $0xf8] sm:$0xff] %v2853
    %2928 = vst [vmem:[#allocation2 + $0x100] sm:$0xff] %v2854
    %2929 = vst [vmem:[#allocation2 + $0x108] sm:$0xff] %v2855
    %2930 = vst [vmem:[#allocation2 + $0x110] sm:$0xff] %v2856
    %2931 = vst [vmem:[#allocation2 + $0x118] sm:$0xff] %v2857
    %2932 = vst [vmem:[#allocation2 + $0x120] sm:$0xff] %v2858
    %2933 = vst [vmem:[#allocation2 + $0x128] sm:$0xff] %v2859
    %2934 = vst [vmem:[#allocation2 + $0x130] sm:$0xff] %v2860
    %2935 = vst [vmem:[#allocation2 + $0x138] sm:$0xff] %v2861
    %2936 = vst [vmem:[#allocation2 + $0x140] sm:$0xff] %v2862
    %2937 = vst [vmem:[#allocation2 + $0x148] sm:$0xff] %v2863
    %2938 = vst [vmem:[#allocation2 + $0x150] sm:$0xff] %v2864
    %2939 = vst [vmem:[#allocation2 + $0x158] sm:$0xff] %v2865
    %2940 = vst [vmem:[#allocation2 + $0x160] sm:$0xff] %v2866
    %2941 = vst [vmem:[#allocation2 + $0x168] sm:$0xff] %v2867
    %2942 = vst [vmem:[#allocation2 + $0x170] sm:$0xff] %v2868
    %2943 = vst [vmem:[#allocation2 + $0x178] sm:$0xff] %v2869
    %2944 = vst [vmem:[#allocation2 + $0x180] sm:$0xff] %v2870
    %2945 = vst [vmem:[#allocation2 + $0x188] sm:$0xff] %v2871
    %2946 = vst [vmem:[#allocation2 + $0x190] sm:$0xff] %v2872
    %2947 = vst [vmem:[#allocation2 + $0x198] sm:$0xff] %v2873
    %2948 = vst [vmem:[#allocation2 + $0x1a0] sm:$0xff] %v2874
    %2949 = vst [vmem:[#allocation2 + $0x1a8] sm:$0xff] %v2875
    %2950 = vst [vmem:[#allocation2 + $0x1b0] sm:$0xff] %v2876
    %2951 = vst [vmem:[#allocation2 + $0x1b8] sm:$0xff] %v2877
    %2952 = vst [vmem:[#allocation2 + $0x1c0] sm:$0xff] %v2878
    %2953 = vst [vmem:[#allocation2 + $0x1c8] sm:$0xff] %v2879
    %2954 = vst [vmem:[#allocation2 + $0x1d0] sm:$0xff] %v2880
    %2955 = vst [vmem:[#allocation2 + $0x1d8] sm:$0xff] %v2881
    %2956 = vst [vmem:[#allocation2 + $0x1e0] sm:$0xff] %v2882
    %2957 = vst [vmem:[#allocation2 + $0x1e8] sm:$0xff] %v2883
    %2958 = vst [vmem:[#allocation2 + $0x1f0] sm:$0xff] %v2884
    %2959 = vst [vmem:[#allocation2 + $0x1f8] sm:$0xff] %v2885
    %2960 = vst [vmem:[#allocation2 + $0x200] sm:$0xff] %v2886
    %2961 = vst [vmem:[#allocation2 + $0x208] sm:$0xff] %v2887
    %2962 = vst [vmem:[#allocation2 + $0x210] sm:$0xff] %v2888
    %2963 = vst [vmem:[#allocation2 + $0x218] sm:$0xff] %v2889
    %2964 = vst [vmem:[#allocation2 + $0x220] sm:$0xff] %v2890
    %2965 = vst [vmem:[#allocation2 + $0x228] sm:$0xff] %v2891
    %2966 = vst [vmem:[#allocation2 + $0x230] sm:$0xff] %v2892
    %2967 = vst [vmem:[#allocation2 + $0x238] sm:$0xff] %v2893
    %2968 = vst [vmem:[#allocation2 + $0x240] sm:$0xff] %v2894
    %2969 = vst [vmem:[#allocation2 + $0x248] sm:$0xff] %v2895
    // Predicated region
    $region30: #{tpu_custom_call.1} parent=1 // pred_check
      %p2970 = pneg %p55
    $region31: #{tpu_custom_call.1} parent=1 // pred_check_branch
      %2972 = sbr.rel (%p2970) target = $region33
    $region32: #{tpu_custom_call.1} parent=1 // pred_region
      %v2973 = vld [vmem:[#allocation2] sm:$0xff]
      %v2974 = vld [vmem:[#allocation2 + $0x8] sm:$0xff]
      %v2975 = vld [vmem:[#allocation2 + $0x10] sm:$0xff]
      %v2976 = vld [vmem:[#allocation2 + $0x18] sm:$0xff]
      %v2977 = vld [vmem:[#allocation2 + $0x20] sm:$0xff]
      %v2978 = vld [vmem:[#allocation2 + $0x28] sm:$0xff]
      %v2979 = vld [vmem:[#allocation2 + $0x30] sm:$0xff]
      %v2980 = vld [vmem:[#allocation2 + $0x38] sm:$0xff]
      %v2981 = vld [vmem:[#allocation2 + $0x40] sm:$0xff]
      %v2982 = vld [vmem:[#allocation2 + $0x48] sm:$0xff]
      %v2983 = vld [vmem:[#allocation2 + $0x50] sm:$0xff]
      %v2984 = vld [vmem:[#allocation2 + $0x58] sm:$0xff]
      %v2985 = vld [vmem:[#allocation2 + $0x60] sm:$0xff]
      %v2986 = vld [vmem:[#allocation2 + $0x68] sm:$0xff]
      %v2987 = vld [vmem:[#allocation2 + $0x70] sm:$0xff]
      %v2988 = vld [vmem:[#allocation2 + $0x78] sm:$0xff]
      %v2989 = vld [vmem:[#allocation2 + $0x80] sm:$0xff]
      %v2990 = vld [vmem:[#allocation2 + $0x88] sm:$0xff]
      %v2991 = vld [vmem:[#allocation2 + $0x90] sm:$0xff]
      %v2992 = vld [vmem:[#allocation2 + $0x98] sm:$0xff]
      %v2993 = vld [vmem:[#allocation2 + $0xa0] sm:$0xff]
      %v2994 = vld [vmem:[#allocation2 + $0xa8] sm:$0xff]
      %v2995 = vld [vmem:[#allocation2 + $0xb0] sm:$0xff]
      %v2996 = vld [vmem:[#allocation2 + $0xb8] sm:$0xff]
      %v2997 = vld [vmem:[#allocation2 + $0xc0] sm:$0xff]
      %v2998 = vld [vmem:[#allocation2 + $0xc8] sm:$0xff]
      %v2999 = vld [vmem:[#allocation2 + $0xd0] sm:$0xff]
      %v3000 = vld [vmem:[#allocation2 + $0xd8] sm:$0xff]
      %v3001 = vld [vmem:[#allocation2 + $0xe0] sm:$0xff]
      %v3002 = vld [vmem:[#allocation2 + $0xe8] sm:$0xff]
      %v3003 = vld [vmem:[#allocation2 + $0xf0] sm:$0xff]
      %v3004 = vld [vmem:[#allocation2 + $0xf8] sm:$0xff]
      %v3005 = vld [vmem:[#allocation2 + $0x100] sm:$0xff]
      %v3006 = vld [vmem:[#allocation2 + $0x108] sm:$0xff]
      %v3007 = vld [vmem:[#allocation2 + $0x110] sm:$0xff]
      %v3008 = vld [vmem:[#allocation2 + $0x118] sm:$0xff]
      %v3009 = vld [vmem:[#allocation2 + $0x120] sm:$0xff]
      %v3010 = vld [vmem:[#allocation2 + $0x128] sm:$0xff]
      %v3011 = vld [vmem:[#allocation2 + $0x130] sm:$0xff]
      %v3012 = vld [vmem:[#allocation2 + $0x138] sm:$0xff]
      %v3013 = vld [vmem:[#allocation2 + $0x140] sm:$0xff]
      %v3014 = vld [vmem:[#allocation2 + $0x148] sm:$0xff]
      %v3015 = vld [vmem:[#allocation2 + $0x150] sm:$0xff]
      %v3016 = vld [vmem:[#allocation2 + $0x158] sm:$0xff]
      %v3017 = vld [vmem:[#allocation2 + $0x160] sm:$0xff]
      %v3018 = vld [vmem:[#allocation2 + $0x168] sm:$0xff]
      %v3019 = vld [vmem:[#allocation2 + $0x170] sm:$0xff]
      %v3020 = vld [vmem:[#allocation2 + $0x178] sm:$0xff]
      %v3021 = vld [vmem:[#allocation2 + $0x180] sm:$0xff]
      %v3022 = vld [vmem:[#allocation2 + $0x188] sm:$0xff]
      %v3023 = vld [vmem:[#allocation2 + $0x190] sm:$0xff]
      %v3024 = vld [vmem:[#allocation2 + $0x198] sm:$0xff]
      %v3025 = vld [vmem:[#allocation2 + $0x1a0] sm:$0xff]
      %v3026 = vld [vmem:[#allocation2 + $0x1a8] sm:$0xff]
      %v3027 = vld [vmem:[#allocation2 + $0x1b0] sm:$0xff]
      %v3028 = vld [vmem:[#allocation2 + $0x1b8] sm:$0xff]
      %v3029 = vld [vmem:[#allocation2 + $0x1c0] sm:$0xff]
      %v3030 = vld [vmem:[#allocation2 + $0x1c8] sm:$0xff]
      %v3031 = vld [vmem:[#allocation2 + $0x1d0] sm:$0xff]
      %v3032 = vld [vmem:[#allocation2 + $0x1d8] sm:$0xff]
      %v3033 = vld [vmem:[#allocation2 + $0x1e0] sm:$0xff]
      %v3034 = vld [vmem:[#allocation2 + $0x1e8] sm:$0xff]
      %v3035 = vld [vmem:[#allocation2 + $0x1f0] sm:$0xff]
      %v3036 = vld [vmem:[#allocation2 + $0x1f8] sm:$0xff]
      %v3037 = vld [vmem:[#allocation2 + $0x200] sm:$0xff]
      %v3038 = vld [vmem:[#allocation2 + $0x208] sm:$0xff]
      %v3039 = vld [vmem:[#allocation2 + $0x210] sm:$0xff]
      %v3040 = vld [vmem:[#allocation2 + $0x218] sm:$0xff]
      %v3041 = vld [vmem:[#allocation2 + $0x220] sm:$0xff]
      %v3042 = vld [vmem:[#allocation2 + $0x228] sm:$0xff]
      %v3043 = vld [vmem:[#allocation2 + $0x230] sm:$0xff]
      %v3044 = vld [vmem:[#allocation2 + $0x238] sm:$0xff]
      %v3045 = vld [vmem:[#allocation2 + $0x240] sm:$0xff]
      %v3046 = vld [vmem:[#allocation2 + $0x248] sm:$0xff]
      %v3047 = vld [vmem:[#allocation8] sm:$0xff]
      %v3048 = vld [vmem:[#allocation8 + $0x8] sm:$0xff]
      %v3049 = vld [vmem:[#allocation8 + $0x10] sm:$0xff]
      %v3050 = vld [vmem:[#allocation8 + $0x18] sm:$0xff]
      %v3051 = vld [vmem:[#allocation8 + $0x20] sm:$0x1f]
      %v3057 = vlaneseq
      %v3058 = vshrl.u32 %v3057, 7
      %v3059 = vsub.s32 0, %v3058
      %v3060 = vrot.slane %v3047, %v3059
      %v3061 = vlaneseq
      %v3062 = vshrl.u32 %v3061, 7
      %v3063 = vsub.s32 1, %v3062
      %v3064 = vrot.slane %v3047, %v3063
      %v3065 = vlaneseq
      %v3066 = vshrl.u32 %v3065, 7
      %v3067 = vsub.s32 2, %v3066
      %v3068 = vrot.slane %v3047, %v3067
      %v3069 = vlaneseq
      %v3070 = vshrl.u32 %v3069, 7
      %v3071 = vsub.s32 3, %v3070
      %v3072 = vrot.slane %v3047, %v3071
      %v3073 = vlaneseq
      %v3074 = vshrl.u32 %v3073, 7
      %v3075 = vsub.s32 4, %v3074
      %v3076 = vrot.slane %v3047, %v3075
      %v3077 = vlaneseq
      %v3078 = vshrl.u32 %v3077, 7
      %v3079 = vsub.s32 5, %v3078
      %v3080 = vrot.slane %v3047, %v3079
      %v3081 = vlaneseq
      %v3082 = vshrl.u32 %v3081, 7
      %v3083 = vsub.s32 6, %v3082
      %v3084 = vrot.slane %v3047, %v3083
      %v3085 = vlaneseq
      %v3086 = vshrl.u32 %v3085, 7
      %v3087 = vsub.s32 7, %v3086
      %v3088 = vrot.slane %v3047, %v3087
      %v3089 = vlaneseq
      %v3090 = vshrl.u32 %v3089, 7
      %v3091 = vsub.s32 0, %v3090
      %v3092 = vrot.slane %v3048, %v3091
      %v3093 = vlaneseq
      %v3094 = vshrl.u32 %v3093, 7
      %v3095 = vsub.s32 1, %v3094
      %v3096 = vrot.slane %v3048, %v3095
      %v3097 = vlaneseq
      %v3098 = vshrl.u32 %v3097, 7
      %v3099 = vsub.s32 2, %v3098
      %v3100 = vrot.slane %v3048, %v3099
      %v3101 = vlaneseq
      %v3102 = vshrl.u32 %v3101, 7
      %v3103 = vsub.s32 3, %v3102
      %v3104 = vrot.slane %v3048, %v3103
      %v3105 = vlaneseq
      %v3106 = vshrl.u32 %v3105, 7
      %v3107 = vsub.s32 4, %v3106
      %v3108 = vrot.slane %v3048, %v3107
      %v3109 = vlaneseq
      %v3110 = vshrl.u32 %v3109, 7
      %v3111 = vsub.s32 5, %v3110
      %v3112 = vrot.slane %v3048, %v3111
      %v3113 = vlaneseq
      %v3114 = vshrl.u32 %v3113, 7
      %v3115 = vsub.s32 6, %v3114
      %v3116 = vrot.slane %v3048, %v3115
      %v3117 = vlaneseq
      %v3118 = vshrl.u32 %v3117, 7
      %v3119 = vsub.s32 7, %v3118
      %v3120 = vrot.slane %v3048, %v3119
      %v3121 = vlaneseq
      %v3122 = vshrl.u32 %v3121, 7
      %v3123 = vsub.s32 0, %v3122
      %v3124 = vrot.slane %v3049, %v3123
      %v3125 = vlaneseq
      %v3126 = vshrl.u32 %v3125, 7
      %v3127 = vsub.s32 1, %v3126
      %v3128 = vrot.slane %v3049, %v3127
      %v3129 = vlaneseq
      %v3130 = vshrl.u32 %v3129, 7
      %v3131 = vsub.s32 2, %v3130
      %v3132 = vrot.slane %v3049, %v3131
      %v3133 = vlaneseq
      %v3134 = vshrl.u32 %v3133, 7
      %v3135 = vsub.s32 3, %v3134
      %v3136 = vrot.slane %v3049, %v3135
      %v3137 = vlaneseq
      %v3138 = vshrl.u32 %v3137, 7
      %v3139 = vsub.s32 4, %v3138
      %v3140 = vrot.slane %v3049, %v3139
      %v3141 = vlaneseq
      %v3142 = vshrl.u32 %v3141, 7
      %v3143 = vsub.s32 5, %v3142
      %v3144 = vrot.slane %v3049, %v3143
      %v3145 = vlaneseq
      %v3146 = vshrl.u32 %v3145, 7
      %v3147 = vsub.s32 6, %v3146
      %v3148 = vrot.slane %v3049, %v3147
      %v3149 = vlaneseq
      %v3150 = vshrl.u32 %v3149, 7
      %v3151 = vsub.s32 7, %v3150
      %v3152 = vrot.slane %v3049, %v3151
      %v3153 = vlaneseq
      %v3154 = vshrl.u32 %v3153, 7
      %v3155 = vsub.s32 0, %v3154
      %v3156 = vrot.slane %v3050, %v3155
      %v3157 = vlaneseq
      %v3158 = vshrl.u32 %v3157, 7
      %v3159 = vsub.s32 1, %v3158
      %v3160 = vrot.slane %v3050, %v3159
      %v3161 = vlaneseq
      %v3162 = vshrl.u32 %v3161, 7
      %v3163 = vsub.s32 2, %v3162
      %v3164 = vrot.slane %v3050, %v3163
      %v3165 = vlaneseq
      %v3166 = vshrl.u32 %v3165, 7
      %v3167 = vsub.s32 3, %v3166
      %v3168 = vrot.slane %v3050, %v3167
      %v3169 = vlaneseq
      %v3170 = vshrl.u32 %v3169, 7
      %v3171 = vsub.s32 4, %v3170
      %v3172 = vrot.slane %v3050, %v3171
      %v3173 = vlaneseq
      %v3174 = vshrl.u32 %v3173, 7
      %v3175 = vsub.s32 5, %v3174
      %v3176 = vrot.slane %v3050, %v3175
      %v3177 = vlaneseq
      %v3178 = vshrl.u32 %v3177, 7
      %v3179 = vsub.s32 6, %v3178
      %v3180 = vrot.slane %v3050, %v3179
      %v3181 = vlaneseq
      %v3182 = vshrl.u32 %v3181, 7
      %v3183 = vsub.s32 7, %v3182
      %v3184 = vrot.slane %v3050, %v3183
      %v3185 = vlaneseq
      %v3186 = vshrl.u32 %v3185, 7
      %v3187 = vsub.s32 0, %v3186
      %v3188 = vrot.slane %v3051, %v3187
      %v3189 = vlaneseq
      %v3190 = vshrl.u32 %v3189, 7
      %v3191 = vsub.s32 1, %v3190
      %v3192 = vrot.slane %v3051, %v3191
      %v3193 = vlaneseq
      %v3194 = vshrl.u32 %v3193, 7
      %v3195 = vsub.s32 2, %v3194
      %v3196 = vrot.slane %v3051, %v3195
      %v3197 = vlaneseq
      %v3198 = vshrl.u32 %v3197, 7
      %v3199 = vsub.s32 3, %v3198
      %v3200 = vrot.slane %v3051, %v3199
      %v3201 = vlaneseq
      %v3202 = vshrl.u32 %v3201, 7
      %v3203 = vsub.s32 4, %v3202
      %v3204 = vrot.slane %v3051, %v3203
      %v3242 = vadd.f32 %v2973, %v3060
      %v3243 = vadd.f32 %v2974, %v3064
      %v3244 = vadd.f32 %v2975, %v3068
      %v3245 = vadd.f32 %v2976, %v3072
      %v3246 = vadd.f32 %v2977, %v3076
      %v3247 = vadd.f32 %v2978, %v3080
      %v3248 = vadd.f32 %v2979, %v3084
      %v3249 = vadd.f32 %v2980, %v3088
      %v3250 = vadd.f32 %v2981, %v3092
      %v3251 = vadd.f32 %v2982, %v3096
      %v3252 = vadd.f32 %v2983, %v3100
      %v3253 = vadd.f32 %v2984, %v3104
      %v3254 = vadd.f32 %v2985, %v3108
      %v3255 = vadd.f32 %v2986, %v3112
      %v3256 = vadd.f32 %v2987, %v3116
      %v3257 = vadd.f32 %v2988, %v3120
      %v3258 = vadd.f32 %v2989, %v3124
      %v3259 = vadd.f32 %v2990, %v3128
      %v3260 = vadd.f32 %v2991, %v3132
      %v3261 = vadd.f32 %v2992, %v3136
      %v3262 = vadd.f32 %v2993, %v3140
      %v3263 = vadd.f32 %v2994, %v3144
      %v3264 = vadd.f32 %v2995, %v3148
      %v3265 = vadd.f32 %v2996, %v3152
      %v3266 = vadd.f32 %v2997, %v3156
      %v3267 = vadd.f32 %v2998, %v3160
      %v3268 = vadd.f32 %v2999, %v3164
      %v3269 = vadd.f32 %v3000, %v3168
      %v3270 = vadd.f32 %v3001, %v3172
      %v3271 = vadd.f32 %v3002, %v3176
      %v3272 = vadd.f32 %v3003, %v3180
      %v3273 = vadd.f32 %v3004, %v3184
      %v3274 = vadd.f32 %v3005, %v3188
      %v3275 = vadd.f32 %v3006, %v3192
      %v3276 = vadd.f32 %v3007, %v3196
      %v3277 = vadd.f32 %v3008, %v3200
      %v3278 = vadd.f32 %v3009, %v3204
      %v3279 = vadd.f32 %v3010, %v3060
      %v3280 = vadd.f32 %v3011, %v3064
      %v3281 = vadd.f32 %v3012, %v3068
      %v3282 = vadd.f32 %v3013, %v3072
      %v3283 = vadd.f32 %v3014, %v3076
      %v3284 = vadd.f32 %v3015, %v3080
      %v3285 = vadd.f32 %v3016, %v3084
      %v3286 = vadd.f32 %v3017, %v3088
      %v3287 = vadd.f32 %v3018, %v3092
      %v3288 = vadd.f32 %v3019, %v3096
      %v3289 = vadd.f32 %v3020, %v3100
      %v3290 = vadd.f32 %v3021, %v3104
      %v3291 = vadd.f32 %v3022, %v3108
      %v3292 = vadd.f32 %v3023, %v3112
      %v3293 = vadd.f32 %v3024, %v3116
      %v3294 = vadd.f32 %v3025, %v3120
      %v3295 = vadd.f32 %v3026, %v3124
      %v3296 = vadd.f32 %v3027, %v3128
      %v3297 = vadd.f32 %v3028, %v3132
      %v3298 = vadd.f32 %v3029, %v3136
      %v3299 = vadd.f32 %v3030, %v3140
      %v3300 = vadd.f32 %v3031, %v3144
      %v3301 = vadd.f32 %v3032, %v3148
      %v3302 = vadd.f32 %v3033, %v3152
      %v3303 = vadd.f32 %v3034, %v3156
      %v3304 = vadd.f32 %v3035, %v3160
      %v3305 = vadd.f32 %v3036, %v3164
      %v3306 = vadd.f32 %v3037, %v3168
      %v3307 = vadd.f32 %v3038, %v3172
      %v3308 = vadd.f32 %v3039, %v3176
      %v3309 = vadd.f32 %v3040, %v3180
      %v3310 = vadd.f32 %v3041, %v3184
      %v3311 = vadd.f32 %v3042, %v3188
      %v3312 = vadd.f32 %v3043, %v3192
      %v3313 = vadd.f32 %v3044, %v3196
      %v3314 = vadd.f32 %v3045, %v3200
      %v3315 = vadd.f32 %v3046, %v3204
      %3316 = vst [vmem:[#allocation9] sm:$0xff] %v3242
      %3317 = vst [vmem:[#allocation9 + $0x8] sm:$0xff] %v3243
      %3318 = vst [vmem:[#allocation9 + $0x10] sm:$0xff] %v3244
      %3319 = vst [vmem:[#allocation9 + $0x18] sm:$0xff] %v3245
      %3320 = vst [vmem:[#allocation9 + $0x20] sm:$0xff] %v3246
      %3321 = vst [vmem:[#allocation9 + $0x28] sm:$0xff] %v3247
      %3322 = vst [vmem:[#allocation9 + $0x30] sm:$0xff] %v3248
      %3323 = vst [vmem:[#allocation9 + $0x38] sm:$0xff] %v3249
      %3324 = vst [vmem:[#allocation9 + $0x40] sm:$0xff] %v3250
      %3325 = vst [vmem:[#allocation9 + $0x48] sm:$0xff] %v3251
      %3326 = vst [vmem:[#allocation9 + $0x50] sm:$0xff] %v3252
      %3327 = vst [vmem:[#allocation9 + $0x58] sm:$0xff] %v3253
      %3328 = vst [vmem:[#allocation9 + $0x60] sm:$0xff] %v3254
      %3329 = vst [vmem:[#allocation9 + $0x68] sm:$0xff] %v3255
      %3330 = vst [vmem:[#allocation9 + $0x70] sm:$0xff] %v3256
      %3331 = vst [vmem:[#allocation9 + $0x78] sm:$0xff] %v3257
      %3332 = vst [vmem:[#allocation9 + $0x80] sm:$0xff] %v3258
      %3333 = vst [vmem:[#allocation9 + $0x88] sm:$0xff] %v3259
      %3334 = vst [vmem:[#allocation9 + $0x90] sm:$0xff] %v3260
      %3335 = vst [vmem:[#allocation9 + $0x98] sm:$0xff] %v3261
      %3336 = vst [vmem:[#allocation9 + $0xa0] sm:$0xff] %v3262
      %3337 = vst [vmem:[#allocation9 + $0xa8] sm:$0xff] %v3263
      %3338 = vst [vmem:[#allocation9 + $0xb0] sm:$0xff] %v3264
      %3339 = vst [vmem:[#allocation9 + $0xb8] sm:$0xff] %v3265
      %3340 = vst [vmem:[#allocation9 + $0xc0] sm:$0xff] %v3266
      %3341 = vst [vmem:[#allocation9 + $0xc8] sm:$0xff] %v3267
      %3342 = vst [vmem:[#allocation9 + $0xd0] sm:$0xff] %v3268
      %3343 = vst [vmem:[#allocation9 + $0xd8] sm:$0xff] %v3269
      %3344 = vst [vmem:[#allocation9 + $0xe0] sm:$0xff] %v3270
      %3345 = vst [vmem:[#allocation9 + $0xe8] sm:$0xff] %v3271
      %3346 = vst [vmem:[#allocation9 + $0xf0] sm:$0xff] %v3272
      %3347 = vst [vmem:[#allocation9 + $0xf8] sm:$0xff] %v3273
      %3348 = vst [vmem:[#allocation9 + $0x100] sm:$0xff] %v3274
      %3349 = vst [vmem:[#allocation9 + $0x108] sm:$0xff] %v3275
      %3350 = vst [vmem:[#allocation9 + $0x110] sm:$0xff] %v3276
      %3351 = vst [vmem:[#allocation9 + $0x118] sm:$0xff] %v3277
      %3352 = vst [vmem:[#allocation9 + $0x120] sm:$0xff] %v3278
      %3353 = vst [vmem:[#allocation9 + $0x128] sm:$0xff] %v3279
      %3354 = vst [vmem:[#allocation9 + $0x130] sm:$0xff] %v3280
      %3355 = vst [vmem:[#allocation9 + $0x138] sm:$0xff] %v3281
      %3356 = vst [vmem:[#allocation9 + $0x140] sm:$0xff] %v3282
      %3357 = vst [vmem:[#allocation9 + $0x148] sm:$0xff] %v3283
      %3358 = vst [vmem:[#allocation9 + $0x150] sm:$0xff] %v3284
      %3359 = vst [vmem:[#allocation9 + $0x158] sm:$0xff] %v3285
      %3360 = vst [vmem:[#allocation9 + $0x160] sm:$0xff] %v3286
      %3361 = vst [vmem:[#allocation9 + $0x168] sm:$0xff] %v3287
      %3362 = vst [vmem:[#allocation9 + $0x170] sm:$0xff] %v3288
      %3363 = vst [vmem:[#allocation9 + $0x178] sm:$0xff] %v3289
      %3364 = vst [vmem:[#allocation9 + $0x180] sm:$0xff] %v3290
      %3365 = vst [vmem:[#allocation9 + $0x188] sm:$0xff] %v3291
      %3366 = vst [vmem:[#allocation9 + $0x190] sm:$0xff] %v3292
      %3367 = vst [vmem:[#allocation9 + $0x198] sm:$0xff] %v3293
      %3368 = vst [vmem:[#allocation9 + $0x1a0] sm:$0xff] %v3294
      %3369 = vst [vmem:[#allocation9 + $0x1a8] sm:$0xff] %v3295
      %3370 = vst [vmem:[#allocation9 + $0x1b0] sm:$0xff] %v3296
      %3371 = vst [vmem:[#allocation9 + $0x1b8] sm:$0xff] %v3297
      %3372 = vst [vmem:[#allocation9 + $0x1c0] sm:$0xff] %v3298
      %3373 = vst [vmem:[#allocation9 + $0x1c8] sm:$0xff] %v3299
      %3374 = vst [vmem:[#allocation9 + $0x1d0] sm:$0xff] %v3300
      %3375 = vst [vmem:[#allocation9 + $0x1d8] sm:$0xff] %v3301
      %3376 = vst [vmem:[#allocation9 + $0x1e0] sm:$0xff] %v3302
      %3377 = vst [vmem:[#allocation9 + $0x1e8] sm:$0xff] %v3303
      %3378 = vst [vmem:[#allocation9 + $0x1f0] sm:$0xff] %v3304
      %3379 = vst [vmem:[#allocation9 + $0x1f8] sm:$0xff] %v3305
      %3380 = vst [vmem:[#allocation9 + $0x200] sm:$0xff] %v3306
      %3381 = vst [vmem:[#allocation9 + $0x208] sm:$0xff] %v3307
      %3382 = vst [vmem:[#allocation9 + $0x210] sm:$0xff] %v3308
      %3383 = vst [vmem:[#allocation9 + $0x218] sm:$0xff] %v3309
      %3384 = vst [vmem:[#allocation9 + $0x220] sm:$0xff] %v3310
      %3385 = vst [vmem:[#allocation9 + $0x228] sm:$0xff] %v3311
      %3386 = vst [vmem:[#allocation9 + $0x230] sm:$0xff] %v3312
      %3387 = vst [vmem:[#allocation9 + $0x238] sm:$0xff] %v3313
      %3388 = vst [vmem:[#allocation9 + $0x240] sm:$0xff] %v3314
      %3389 = vst [vmem:[#allocation9 + $0x248] sm:$0xff] %v3315
    $region33: #{tpu_custom_call.1} parent=1 // pred_fallthru
      _
    // Predicated region
    $region34: #{tpu_custom_call.1} parent=1 // pred_check
      _
    $region35: #{tpu_custom_call.1} parent=1 // pred_check_branch
      %3391 = sbr.rel (0) target = $region37
    $region36: #{tpu_custom_call.1} parent=1 // pred_region
      %s3393 = ssub.s32 9472, 9472
      %3394 = vsyncadd [#allocation5], %s3393
      %s3395 = sshll.u32 [#allocation9], 4
      %s3396 = int_to_ptr.vmem [resolvable:$true] %s3395
      %3401 = dma.vmem_to_hbm [thread:$0]  %s3396, 9472, %s3, [#allocation5], 4736, 4736, 296
    $region37: #{tpu_custom_call.1} parent=1 // pred_fallthru
      _
    // Predicated region
    $region38: #{tpu_custom_call.1} parent=1 // pred_check
      _
    $region39: #{tpu_custom_call.1} parent=1 // pred_check_branch
      %3403 = sbr.rel (0) target = $region41
    $region40: #{tpu_custom_call.1} parent=1 // pred_region
      %3404 = dma.done [#allocation5], 9472
    $region41: #{tpu_custom_call.1} parent=1 // pred_fallthru
      _
    %3405 = vsyncpa [#allocation4], 1
    %3406 = vsyncpa [#allocation7], 1
    %3407 = vsyncpa [#allocation5], 1

</llo_original>
